<compile_context>
chip_gen: v7x
topology: tpu7x:2x2x1
jax: 0.10.0
libtpu: 0.0.40
codegen_flags: <defaults>
</compile_context>

<pallas_src>
import functools

import jax
import jax.numpy as jnp
from jax import lax
from jax.experimental import pallas as pl
from jax.experimental.pallas import tpu as pltpu


def _round_up(x, m):
    return ((x + m - 1) // m) * m


def _vmem_info():
    """(physical VMEM bytes, per-call streaming budget), with safe fallback."""
    cap = 64 * (1 << 20)                     # conservative (v7x-sized) default
    try:
        cap = int(pltpu.get_tpu_info().vmem_capacity_bytes)
    except Exception:
        pass
    budget = max(16 << 20, min(int(cap * 0.45), 56 << 20))
    return cap, budget


def _choose_tiles(seq, batch, hp, stream_itemsize, vmem_budget):
    """Pick (Bp, Bb, t_block, Sp, vmem_usage) so the pipeline fits the budget."""
    bp8 = _round_up(max(batch, 1), 8)
    # Keep the f32 h/c carries comfortably inside the 64-vreg file.
    bb_cap = max(8, (16384 // hp) // 8 * 8)
    bb = min(bp8, bb_cap)
    bp = _round_up(max(batch, 1), bb)
    gate_w = 4 * hp
    weight_bytes = (hp * gate_w + hp * hp) * stream_itemsize + hp * 4
    carry_bytes = 2 * bb * hp * 4
    # xw + h_out (+ tiny g) are double-buffered by the auto pipeline.
    per_t = 2 * bb * ((gate_w + hp) * stream_itemsize + 4)
    avail = max(vmem_budget - weight_bytes - carry_bytes, per_t)
    t_block = int(max(1, min(256, seq, avail // per_t)))
    sp = _round_up(seq, t_block)
    usage = weight_bytes + carry_bytes + per_t * t_block
    return bp, bb, t_block, sp, usage


def tlstm_recurrence_kernel(xw_ref, g_ref, whh_hbm, wch_hbm, bch_hbm,
                            h_out_ref, whh_sc, wch_sc, bch_sc, h_sc, c_sc,
                            dma_sem, *, hp, t_block, unroll):
    """One grid step == `t_block` timesteps of the recurrence for one batch tile.

    xw_ref : (t_block, Bb, 4*Hp)  precomputed x @ W_ih^T + (b_ih + b_hh)
    g_ref  : (t_block, Bb, 1)     precomputed 1 / max(delta, 1)   (f32)
    whh_hbm/wch_hbm/bch_hbm       grid-invariant weights left in HBM (pl.ANY)
    h_out_ref: (t_block, Bb, Hp)  per-step hidden states
    whh_sc/wch_sc/bch_sc          single-buffered VMEM copies of the weights
    h_sc / c_sc: (Bb, Hp) f32     recurrent carry across time blocks
    """
    t_id = pl.program_id(1)

    @pl.when(t_id == 0)
    def _():
        # Stage the grid-invariant weights once per batch tile into
        # single-buffered VMEM scratch (no double-buffer VMEM waste), and
        # reset the recurrent carry (init_hidden -> zeros).  Keying on the
        # time axis only keeps this correct when megacore shards the
        # "parallel" batch axis across TensorCores.
        cw = pltpu.make_async_copy(whh_hbm, whh_sc, dma_sem.at[0])
        cc = pltpu.make_async_copy(wch_hbm, wch_sc, dma_sem.at[1])
        cb = pltpu.make_async_copy(bch_hbm, bch_sc, dma_sem.at[2])
        cw.start(); cc.start(); cb.start()
        cw.wait(); cc.wait(); cb.wait()
        h_sc[...] = jnp.zeros_like(h_sc)
        c_sc[...] = jnp.zeros_like(c_sc)

    # Hoist constant loads out of the (partially) unrolled step loop.
    whh = whh_sc[...]
    wch = wch_sc[...]
    bch = bch_sc[...]

    def step(j, carry):
        h, c = carry
        # Only the h/c-dependent matmuls remain in the serial chain; bf16
        # streaming casts are no-ops in the f32 path.
        gates = (xw_ref[j].astype(jnp.float32)
                 + jnp.dot(h.astype(whh.dtype), whh,
                           preferred_element_type=jnp.float32))
        # 128-lane-aligned gate slices (free views - no relayout).
        in_gate = jax.nn.sigmoid(gates[:, 0 * hp:1 * hp])
        forget_gate = jax.nn.sigmoid(gates[:, 1 * hp:2 * hp])
        cell_gate = jnp.tanh(gates[:, 2 * hp:3 * hp])
        out_gate = jax.nn.sigmoid(gates[:, 3 * hp:4 * hp])

        # Time-aware cell decomposition.
        cs = (jnp.dot(c.astype(wch.dtype), wch,
                      preferred_element_type=jnp.float32) + bch)
        ct = c - cs
        cx = ct + cs * g_ref[j]          # g = 1/max(delta,1), precomputed
        cy = forget_gate * cx + in_gate * cell_gate
        hy = out_gate * jnp.tanh(cy)
        h_out_ref[j] = hy.astype(h_out_ref.dtype)
        return hy, cy

    h, c = lax.fori_loop(0, t_block, step, (h_sc[...], c_sc[...]),
                         unroll=unroll)
    h_sc[...] = h
    c_sc[...] = c


def tlstm_forward(x, params, *, n_inputs, n_hidden, n_outputs,
                  stream_dtype=jnp.float32):
    """x: (batch, seq, n_inputs + 1), last column is delta_ts (float32).

    stream_dtype=jnp.bfloat16 halves the xw / h_out HBM streams and feeds the
    recurrent MXU with bf16 operands (f32 accumulation); carries stay f32.
    """
    batch, seq, feat = x.shape
    assert feat == n_inputs + 1
    x = x.astype(jnp.float32)

    H = n_hidden
    Hp = _round_up(max(H, 1), 128)              # lane-aligned hidden size
    stream_dtype = jnp.dtype(stream_dtype)
    cap, budget = _vmem_info()
    Bp, Bb, t_block, Sp, vmem_usage = _choose_tiles(
        seq, batch, Hp, stream_dtype.itemsize, budget)
    n_batch_blocks = Bp // Bb
    n_time_blocks = Sp // t_block
    unroll = int(max(1, min(t_block, 8)))

    delta = x[:, :, n_inputs]                   # (batch, seq)
    x_in = x[:, :, :n_inputs]                   # (batch, seq, n_inputs)

    hi = jax.lax.Precision.HIGHEST

    # ---- hoisted, non-recurrent precompute (one big XLA matmul) -----------
    wih_t = params['weight_ih'].T.astype(jnp.float32)                    # (I, 4H)
    bias = (params['bias_ih'] + params['bias_hh']).astype(jnp.float32)   # (4H,)
    whh_t = params['weight_hh'].T.astype(jnp.float32)                    # (H, 4H)

    # Gate-padded layouts: gate k lives in lanes [k*Hp, k*Hp + H).  Padded
    # lanes are zero-weighted, so padded hidden lanes stay exactly zero
    # through the recurrence (load-bearing invariant).
    # TODO(synk): for H < 128 a packed 4H-lane gate layout (lane-mask gate
    # select) would cut the xw stream and recurrent matmul width by Hp/H;
    # kept the 128-aligned per-gate layout for lowering robustness.
    wih_pad = jnp.zeros((n_inputs, 4 * Hp), jnp.float32)
    bias_pad = jnp.zeros((4 * Hp,), jnp.float32)
    whh_pad = jnp.zeros((Hp, 4 * Hp), jnp.float32)
    for k in range(4):
        wih_pad = wih_pad.at[:, k * Hp:k * Hp + H].set(wih_t[:, k * H:(k + 1) * H])
        bias_pad = bias_pad.at[k * Hp:k * Hp + H].set(bias[k * H:(k + 1) * H])
        whh_pad = whh_pad.at[:H, k * Hp:k * Hp + H].set(whh_t[:, k * H:(k + 1) * H])
    wch_pad = jnp.zeros((Hp, Hp), jnp.float32).at[:H, :H].set(
        params['weight_ch'].T.astype(jnp.float32))
    bch_pad = jnp.zeros((1, Hp), jnp.float32).at[0, :H].set(
        params['bias_ch'].astype(jnp.float32))
    whh_pad = whh_pad.astype(stream_dtype)
    wch_pad = wch_pad.astype(stream_dtype)

    # Pad the *small* tensors (x, delta) before the projection so the big
    # (Sp, Bp, 4*Hp) xw slab comes straight out of the einsum (no extra HBM
    # round-trip through jnp.pad on the largest tensor).
    x_in_p = jnp.pad(x_in, ((0, Bp - batch), (0, Sp - seq), (0, 0)))
    delta_tm = jnp.pad(jnp.transpose(delta, (1, 0)),
                       ((0, Sp - seq), (0, Bp - batch)), constant_values=1.0)

    # Time-major input projection; the transpose is folded into the einsum.
    xw = (jnp.einsum('bti,ig->tbg', x_in_p, wih_pad, precision=hi)
          + bias_pad[None, None, :]).astype(stream_dtype)     # (Sp, Bp, 4*Hp)

    # Time-decay factor (elapsed_time='small', no_small_delta=True).
    g = (1.0 / jnp.maximum(delta_tm, 1.0))[:, :, None]        # (Sp, Bp, 1) f32

    kernel = functools.partial(tlstm_recurrence_kernel, hp=Hp,
                               t_block=t_block, unroll=unroll)

    grid_spec = pltpu.PrefetchScalarGridSpec(
        num_scalar_prefetch=0,
        grid=(n_batch_blocks, n_time_blocks),
        in_specs=[
            pl.BlockSpec((t_block, Bb, 4 * Hp), lambda b, t: (t, b, 0)),
            pl.BlockSpec((t_block, Bb, 1), lambda b, t: (t, b, 0)),
            # Grid-invariant weights: left in HBM, staged once per batch tile
            # into single-buffered VMEM scratch inside the kernel.
            pl.BlockSpec(memory_space=pl.ANY),
            pl.BlockSpec(memory_space=pl.ANY),
            pl.BlockSpec(memory_space=pl.ANY),
        ],
        out_specs=pl.BlockSpec((t_block, Bb, Hp), lambda b, t: (t, b, 0)),
        scratch_shapes=[
            pltpu.VMEM((Hp, 4 * Hp), stream_dtype),   # whh (single-buffered)
            pltpu.VMEM((Hp, Hp), stream_dtype),       # wch (single-buffered)
            pltpu.VMEM((1, Hp), jnp.float32),         # bch
            pltpu.VMEM((Bb, Hp), jnp.float32),        # h carry
            pltpu.VMEM((Bb, Hp), jnp.float32),        # c carry
            pltpu.SemaphoreType.DMA((3,)),
        ],
    )

    vmem_limit = int(min(max(vmem_usage + (4 << 20), 32 << 20),
                         int(cap * 0.75)))

    # TODO(synk): if profiling shows the xw DMA exposed (small H, large batch),
    # bump its pipeline depth via pipeline_mode=pl.Buffered(3) on v5e/v6e.
    h_pad = pl.pallas_call(
        kernel,
        out_shape=jax.ShapeDtypeStruct((Sp, Bp, Hp), stream_dtype),
        grid_spec=grid_spec,
        compiler_params=pltpu.CompilerParams(
            # Batch tiles are independent (megacore / v7x dual-TC shard them);
            # the time axis carries the serial recurrence.
            dimension_semantics=("parallel", "arbitrary"),
            vmem_limit_bytes=vmem_limit),
    )(xw, g, whh_pad, wch_pad, bch_pad)

    # Drop padded steps / rows / lanes before the head.
    h_seq = h_pad[:seq, :batch, :H].astype(jnp.float32)       # (seq, batch, H)

    # fc + sigmoid head, hoisted out of the recurrence (n_outputs == 1 path).
    flat = h_seq.reshape(seq * batch, H)
    logits = jnp.dot(flat, params['fc_weight'].T.astype(jnp.float32),
                     precision=hi) + params['fc_bias'].astype(jnp.float32)
    y = jax.nn.sigmoid(logits)

    # PyTorch: rnn_output (seq, batch, H) -> .view(-1, H) -> fc -> sigmoid
    return y, h_seq


def tlstm_reference(x, params, *, n_inputs, n_hidden, n_outputs):
    """Pure-JAX replica of the PyTorch forward, for verification."""
    x = x.astype(jnp.float32)
    batch, seq, _ = x.shape
    hi = jax.lax.Precision.HIGHEST
    delta = x[:, :, n_inputs]
    x_in = x[:, :, :n_inputs]
    h = jnp.zeros((batch, n_hidden), jnp.float32)
    c = jnp.zeros((batch, n_hidden), jnp.float32)
    outs = []
    for t in range(seq):
        xt = x_in[:, t, :]
        dt = jnp.maximum(delta[:, t], 1.0)
        gates = (jnp.dot(xt, params['weight_ih'].T, precision=hi)
                 + params['bias_ih']
                 + jnp.dot(h, params['weight_hh'].T, precision=hi)
                 + params['bias_hh'])
        ig, fg, cg, og = jnp.split(gates, 4, axis=1)
        cs = jnp.dot(c, params['weight_ch'].T, precision=hi) + params['bias_ch']
        ct = c - cs
        cs = cs * (1.0 / dt)[:, None]
        cx = ct + cs
        ig = jax.nn.sigmoid(ig)
        fg = jax.nn.sigmoid(fg)
        cg = jnp.tanh(cg)
        og = jax.nn.sigmoid(og)
        cy = fg * cx + ig * cg
        hy = og * jnp.tanh(cy)
        outs.append(hy)
        h, c = hy, cy
    rnn_out = jnp.stack(outs, 0)
    flat = rnn_out.reshape(-1, n_hidden)
    out = jax.nn.sigmoid(jnp.dot(flat, params['fc_weight'].T, precision=hi)
                         + params['fc_bias'])
    return out, rnn_out


if __name__ == "__main__":
    n_inputs, n_hidden, n_outputs = 4, 32, 1
    batch, seq = 2, 8

    key = jax.random.PRNGKey(0)
    keys = jax.random.split(key, 10)

    # Deterministic parameter init (TLSTMCell uses torch.randn for all params).
    params = {
        'weight_ih': jax.random.normal(keys[0], (4 * n_hidden, n_inputs), jnp.float32),
        'weight_hh': jax.random.normal(keys[1], (4 * n_hidden, n_hidden), jnp.float32),
        'weight_ch': jax.random.normal(keys[2], (n_hidden, n_hidden), jnp.float32),
        'bias_ih': jax.random.normal(keys[3], (4 * n_hidden,), jnp.float32),
        'bias_hh': jax.random.normal(keys[4], (4 * n_hidden,), jnp.float32),
        'bias_ch': jax.random.normal(keys[5], (n_hidden,), jnp.float32),
        # fc = nn.Linear(n_hidden, n_outputs); deterministic normal init here.
        'fc_weight': 0.1 * jax.random.normal(keys[6], (n_outputs, n_hidden), jnp.float32),
        'fc_bias': 0.1 * jax.random.normal(keys[7], (n_outputs,), jnp.float32),
    }

    # Input: (batch, seq, n_inputs + 1); last column is a positive delta-time.
    x_feat = jax.random.normal(keys[8], (batch, seq, n_inputs), jnp.float32)
    delta_col = 0.5 + 3.0 * jnp.abs(jax.random.normal(keys[9], (batch, seq, 1), jnp.float32))
    x = jnp.concatenate([x_feat, delta_col], axis=-1)

    # f32 path: must match the pure-JAX reference tightly.
    y, h_seq = tlstm_forward(x, params, n_inputs=n_inputs,
                             n_hidden=n_hidden, n_outputs=n_outputs)
    jax.block_until_ready(y)

    y_ref, h_ref = tlstm_reference(x, params, n_inputs=n_inputs,
                                   n_hidden=n_hidden, n_outputs=n_outputs)
    assert y.shape == (seq * batch, n_outputs)
    assert jnp.allclose(h_seq, h_ref, rtol=1e-4, atol=1e-5), "hidden mismatch"
    assert jnp.allclose(y, y_ref, rtol=1e-4, atol=1e-5), "output mismatch"

    # bf16 streaming path (v5e/v6e HBM + MXU optimization): carries stay f32,
    # so only a loose check against the f32 reference is expected.
    y_bf, _ = tlstm_forward(x, params, n_inputs=n_inputs, n_hidden=n_hidden,
                            n_outputs=n_outputs, stream_dtype=jnp.bfloat16)
    jax.block_until_ready(y_bf)
    assert float(jnp.max(jnp.abs(y_bf - y_ref))) < 0.1, "bf16 stream mismatch"

    print("KERNEL_OK")
</pallas_src>

<mosaic_0001>
module attributes {stable_mosaic.version = 11 : i64} {
  func.func @tlstm_recurrence_kernel(%arg0: i32, %arg1: i32, %arg2: memref<8x8x512xf32, #tpu.memory_space<vmem>>, %arg3: memref<8x8x1xf32, #tpu.memory_space<vmem>>, %arg4: memref<128x512xf32, #tpu.memory_space<any>>, %arg5: memref<128x128xf32, #tpu.memory_space<any>>, %arg6: memref<1x128xf32, #tpu.memory_space<any>>, %arg7: memref<8x8x128xf32, #tpu.memory_space<vmem>>, %arg8: memref<128x512xf32, #tpu.memory_space<vmem>>, %arg9: memref<128x128xf32, #tpu.memory_space<vmem>>, %arg10: memref<1x128xf32, #tpu.memory_space<vmem>>, %arg11: memref<8x128xf32, #tpu.memory_space<vmem>>, %arg12: memref<8x128xf32, #tpu.memory_space<vmem>>, %arg13: memref<3x!tpu.dma_semaphore, #tpu.memory_space<semaphore_mem>>) attributes {dimension_semantics = [#tpu.dimension_semantics<parallel>, #tpu.dimension_semantics<arbitrary>], iteration_bounds = array<i64: 1, 1>, scalar_prefetch = 0 : i64, scratch_operands = 6 : i64, tpu.core_type = #tpu.core_type<tc>, window_params = [{transform_indices = @transform_0, window_bounds = array<i64: 8, 8, 512>}, {transform_indices = @transform_1, window_bounds = array<i64: 8, 8, 1>}, {}, {}, {}, {transform_indices = @transform_5, window_bounds = array<i64: 8, 8, 128>}]} {
    %c0_i32 = arith.constant 0 : i32
    %0 = arith.cmpi eq, %arg1, %c0_i32 : i32
    %1 = arith.extui %0 : i1 to i32
    %c0_i32_0 = arith.constant 0 : i32
    %2 = arith.cmpi ne, %1, %c0_i32_0 : i32
    scf.if %2 {
      %c0_i32_102 = arith.constant 0 : i32
      %362 = tpu.memref_slice %arg13[%c0_i32_102] : memref<3x!tpu.dma_semaphore, #tpu.memory_space<semaphore_mem>> -> memref<1x!tpu.dma_semaphore, #tpu.memory_space<semaphore_mem>>
      %363 = tpu.memref_squeeze %362 : memref<1x!tpu.dma_semaphore, #tpu.memory_space<semaphore_mem>> -> memref<!tpu.dma_semaphore, #tpu.memory_space<semaphore_mem>>
      tpu.enqueue_dma source(%arg4 : memref<128x512xf32, #tpu.memory_space<any>>) target(%arg8 : memref<128x512xf32, #tpu.memory_space<vmem>>) target_semaphore(%363 : memref<!tpu.dma_semaphore, #tpu.memory_space<semaphore_mem>>)
      %c1_i32_103 = arith.constant 1 : i32
      %364 = tpu.memref_slice %arg13[%c1_i32_103] : memref<3x!tpu.dma_semaphore, #tpu.memory_space<semaphore_mem>> -> memref<1x!tpu.dma_semaphore, #tpu.memory_space<semaphore_mem>>
      %365 = tpu.memref_squeeze %364 : memref<1x!tpu.dma_semaphore, #tpu.memory_space<semaphore_mem>> -> memref<!tpu.dma_semaphore, #tpu.memory_space<semaphore_mem>>
      tpu.enqueue_dma source(%arg5 : memref<128x128xf32, #tpu.memory_space<any>>) target(%arg9 : memref<128x128xf32, #tpu.memory_space<vmem>>) target_semaphore(%365 : memref<!tpu.dma_semaphore, #tpu.memory_space<semaphore_mem>>)
      %c2_i32_104 = arith.constant 2 : i32
      %366 = tpu.memref_slice %arg13[%c2_i32_104] : memref<3x!tpu.dma_semaphore, #tpu.memory_space<semaphore_mem>> -> memref<1x!tpu.dma_semaphore, #tpu.memory_space<semaphore_mem>>
      %367 = tpu.memref_squeeze %366 : memref<1x!tpu.dma_semaphore, #tpu.memory_space<semaphore_mem>> -> memref<!tpu.dma_semaphore, #tpu.memory_space<semaphore_mem>>
      tpu.enqueue_dma source(%arg6 : memref<1x128xf32, #tpu.memory_space<any>>) target(%arg10 : memref<1x128xf32, #tpu.memory_space<vmem>>) target_semaphore(%367 : memref<!tpu.dma_semaphore, #tpu.memory_space<semaphore_mem>>)
      %c0_i32_105 = arith.constant 0 : i32
      %368 = tpu.memref_slice %arg13[%c0_i32_105] : memref<3x!tpu.dma_semaphore, #tpu.memory_space<semaphore_mem>> -> memref<1x!tpu.dma_semaphore, #tpu.memory_space<semaphore_mem>>
      %369 = tpu.memref_squeeze %368 : memref<1x!tpu.dma_semaphore, #tpu.memory_space<semaphore_mem>> -> memref<!tpu.dma_semaphore, #tpu.memory_space<semaphore_mem>>
      tpu.wait_dma2 semaphore(%369 : memref<!tpu.dma_semaphore, #tpu.memory_space<semaphore_mem>>) src(%arg4 : memref<128x512xf32, #tpu.memory_space<any>>) dst(%arg8 : memref<128x512xf32, #tpu.memory_space<vmem>>)
      %c1_i32_106 = arith.constant 1 : i32
      %370 = tpu.memref_slice %arg13[%c1_i32_106] : memref<3x!tpu.dma_semaphore, #tpu.memory_space<semaphore_mem>> -> memref<1x!tpu.dma_semaphore, #tpu.memory_space<semaphore_mem>>
      %371 = tpu.memref_squeeze %370 : memref<1x!tpu.dma_semaphore, #tpu.memory_space<semaphore_mem>> -> memref<!tpu.dma_semaphore, #tpu.memory_space<semaphore_mem>>
      tpu.wait_dma2 semaphore(%371 : memref<!tpu.dma_semaphore, #tpu.memory_space<semaphore_mem>>) src(%arg5 : memref<128x128xf32, #tpu.memory_space<any>>) dst(%arg9 : memref<128x128xf32, #tpu.memory_space<vmem>>)
      %c2_i32_107 = arith.constant 2 : i32
      %372 = tpu.memref_slice %arg13[%c2_i32_107] : memref<3x!tpu.dma_semaphore, #tpu.memory_space<semaphore_mem>> -> memref<1x!tpu.dma_semaphore, #tpu.memory_space<semaphore_mem>>
      %373 = tpu.memref_squeeze %372 : memref<1x!tpu.dma_semaphore, #tpu.memory_space<semaphore_mem>> -> memref<!tpu.dma_semaphore, #tpu.memory_space<semaphore_mem>>
      tpu.wait_dma2 semaphore(%373 : memref<!tpu.dma_semaphore, #tpu.memory_space<semaphore_mem>>) src(%arg6 : memref<1x128xf32, #tpu.memory_space<any>>) dst(%arg10 : memref<1x128xf32, #tpu.memory_space<vmem>>)
      %cst_108 = arith.constant 0.000000e+00 : f32
      %374 = vector.broadcast %cst_108 : f32 to vector<8x128xf32>
      %c0_109 = arith.constant 0 : index
      %c0_110 = arith.constant 0 : index
      %375 = vector.load %arg11[%c0_109, %c0_110] : memref<8x128xf32, #tpu.memory_space<vmem>>, vector<8x128xf32>
      tpu.vector_store %arg11[%c0_109, %c0_110], %374 {strides = array<i32>} : memref<8x128xf32, #tpu.memory_space<vmem>>, vector<8x128xf32>,
      %cst_111 = arith.constant 0.000000e+00 : f32
      %376 = vector.broadcast %cst_111 : f32 to vector<8x128xf32>
      %c0_112 = arith.constant 0 : index
      %c0_113 = arith.constant 0 : index
      %377 = vector.load %arg12[%c0_112, %c0_113] : memref<8x128xf32, #tpu.memory_space<vmem>>, vector<8x128xf32>
      tpu.vector_store %arg12[%c0_112, %c0_113], %376 {strides = array<i32>} : memref<8x128xf32, #tpu.memory_space<vmem>>, vector<8x128xf32>,
    } else {
    }
    %c0 = arith.constant 0 : index
    %c0_1 = arith.constant 0 : index
    %3 = vector.load %arg8[%c0, %c0_1] : memref<128x512xf32, #tpu.memory_space<vmem>>, vector<128x512xf32>
    %c0_2 = arith.constant 0 : index
    %c0_3 = arith.constant 0 : index
    %4 = vector.load %arg9[%c0_2, %c0_3] : memref<128x128xf32, #tpu.memory_space<vmem>>, vector<128x128xf32>
    %c0_4 = arith.constant 0 : index
    %c0_5 = arith.constant 0 : index
    %5 = vector.load %arg10[%c0_4, %c0_5] : memref<1x128xf32, #tpu.memory_space<vmem>>, vector<1x128xf32>
    %c0_6 = arith.constant 0 : index
    %c0_7 = arith.constant 0 : index
    %6 = vector.load %arg11[%c0_6, %c0_7] : memref<8x128xf32, #tpu.memory_space<vmem>>, vector<8x128xf32>
    %c0_8 = arith.constant 0 : index
    %c0_9 = arith.constant 0 : index
    %7 = vector.load %arg12[%c0_8, %c0_9] : memref<8x128xf32, #tpu.memory_space<vmem>>, vector<8x128xf32>
    %c0_i32_10 = arith.constant 0 : i32
    %8 = arith.index_cast %c0_i32_10 : i32 to index
    %c0_11 = arith.constant 0 : index
    %c0_12 = arith.constant 0 : index
    %9 = vector.load %arg2[%8, %c0_11, %c0_12] : memref<8x8x512xf32, #tpu.memory_space<vmem>>, vector<1x8x512xf32>
    %10 = vector.shape_cast %9 : vector<1x8x512xf32> to vector<8x512xf32>
    %cst = arith.constant dense<0.000000e+00> : vector<8x512xf32>
    %11 = tpu.matmul %6, %3, %cst {dimension_numbers = #tpu.dot_dimension_numbers<[1], [0], [0], [1], [0, 0, 1, 1], [], []>} : vector<8x128xf32>, vector<128x512xf32>, vector<8x512xf32> -> vector<8x512xf32>
    %12 = arith.addf %10, %11 : vector<8x512xf32>
    %13 = vector.extract_strided_slice %12 {offsets = [0, 0], sizes = [8, 128], strides = [1, 1]} : vector<8x512xf32> to vector<8x128xf32>
    %14 = arith.negf %13 : vector<8x128xf32>
    %15 = math.exp %14 : vector<8x128xf32>
    %cst_13 = arith.constant 1.000000e+00 : f32
    %16 = vector.broadcast %cst_13 : f32 to vector<8x128xf32>
    %17 = arith.addf %16, %15 : vector<8x128xf32>
    %18 = arith.divf %16, %17 : vector<8x128xf32>
    %19 = vector.extract_strided_slice %12 {offsets = [0, 128], sizes = [8, 128], strides = [1, 1]} : vector<8x512xf32> to vector<8x128xf32>
    %20 = arith.negf %19 : vector<8x128xf32>
    %21 = math.exp %20 : vector<8x128xf32>
    %cst_14 = arith.constant 1.000000e+00 : f32
    %22 = vector.broadcast %cst_14 : f32 to vector<8x128xf32>
    %23 = arith.addf %22, %21 : vector<8x128xf32>
    %24 = arith.divf %22, %23 : vector<8x128xf32>
    %25 = vector.extract_strided_slice %12 {offsets = [0, 256], sizes = [8, 128], strides = [1, 1]} : vector<8x512xf32> to vector<8x128xf32>
    %26 = math.tanh %25 : vector<8x128xf32>
    %27 = vector.extract_strided_slice %12 {offsets = [0, 384], sizes = [8, 128], strides = [1, 1]} : vector<8x512xf32> to vector<8x128xf32>
    %28 = arith.negf %27 : vector<8x128xf32>
    %29 = math.exp %28 : vector<8x128xf32>
    %cst_15 = arith.constant 1.000000e+00 : f32
    %30 = vector.broadcast %cst_15 : f32 to vector<8x128xf32>
    %31 = arith.addf %30, %29 : vector<8x128xf32>
    %32 = arith.divf %30, %31 : vector<8x128xf32>
    %cst_16 = arith.constant dense<0.000000e+00> : vector<8x128xf32>
    %33 = tpu.matmul %7, %4, %cst_16 {dimension_numbers = #tpu.dot_dimension_numbers<[1], [0], [0], [1], [0, 0, 1, 1], [], []>} : vector<8x128xf32>, vector<128x128xf32>, vector<8x128xf32> -> vector<8x128xf32>
    %34 = vector.broadcast %5 : vector<1x128xf32> to vector<8x128xf32>
    %35 = arith.addf %33, %34 : vector<8x128xf32>
    %36 = arith.subf %7, %35 : vector<8x128xf32>
    %37 = arith.index_cast %c0_i32_10 : i32 to index
    %c0_17 = arith.constant 0 : index
    %c0_18 = arith.constant 0 : index
    %38 = vector.load %arg3[%37, %c0_17, %c0_18] : memref<8x8x1xf32, #tpu.memory_space<vmem>>, vector<1x8x1xf32>
    %39 = vector.shape_cast %38 : vector<1x8x1xf32> to vector<8x1xf32>
    %40 = vector.broadcast %39 : vector<8x1xf32> to vector<8x128xf32>
    %41 = arith.mulf %35, %40 : vector<8x128xf32>
    %42 = arith.addf %36, %41 : vector<8x128xf32>
    %43 = arith.mulf %24, %42 : vector<8x128xf32>
    %44 = arith.mulf %18, %26 : vector<8x128xf32>
    %45 = arith.addf %43, %44 : vector<8x128xf32>
    %46 = math.tanh %45 : vector<8x128xf32>
    %47 = arith.mulf %32, %46 : vector<8x128xf32>
    %48 = arith.index_cast %c0_i32_10 : i32 to index
    %c0_19 = arith.constant 0 : index
    %c0_20 = arith.constant 0 : index
    %49 = vector.load %arg7[%48, %c0_19, %c0_20] : memref<8x8x128xf32, #tpu.memory_space<vmem>>, vector<1x8x128xf32>
    %50 = vector.shape_cast %49 : vector<1x8x128xf32> to vector<8x128xf32>
    %51 = vector.shape_cast %47 : vector<8x128xf32> to vector<1x8x128xf32>
    tpu.vector_store %arg7[%48, %c0_19, %c0_20], %51 {strides = array<i32>} : memref<8x8x128xf32, #tpu.memory_space<vmem>>, vector<1x8x128xf32>,
    %c1_i32 = arith.constant 1 : i32
    %52 = arith.index_cast %c1_i32 : i32 to index
    %c0_21 = arith.constant 0 : index
    %c0_22 = arith.constant 0 : index
    %53 = vector.load %arg2[%52, %c0_21, %c0_22] : memref<8x8x512xf32, #tpu.memory_space<vmem>>, vector<1x8x512xf32>
    %54 = vector.shape_cast %53 : vector<1x8x512xf32> to vector<8x512xf32>
    %cst_23 = arith.constant dense<0.000000e+00> : vector<8x512xf32>
    %55 = tpu.matmul %47, %3, %cst_23 {dimension_numbers = #tpu.dot_dimension_numbers<[1], [0], [0], [1], [0, 0, 1, 1], [], []>} : vector<8x128xf32>, vector<128x512xf32>, vector<8x512xf32> -> vector<8x512xf32>
    %56 = arith.addf %54, %55 : vector<8x512xf32>
    %57 = vector.extract_strided_slice %56 {offsets = [0, 0], sizes = [8, 128], strides = [1, 1]} : vector<8x512xf32> to vector<8x128xf32>
    %58 = arith.negf %57 : vector<8x128xf32>
    %59 = math.exp %58 : vector<8x128xf32>
    %cst_24 = arith.constant 1.000000e+00 : f32
    %60 = vector.broadcast %cst_24 : f32 to vector<8x128xf32>
    %61 = arith.addf %60, %59 : vector<8x128xf32>
    %62 = arith.divf %60, %61 : vector<8x128xf32>
    %63 = vector.extract_strided_slice %56 {offsets = [0, 128], sizes = [8, 128], strides = [1, 1]} : vector<8x512xf32> to vector<8x128xf32>
    %64 = arith.negf %63 : vector<8x128xf32>
    %65 = math.exp %64 : vector<8x128xf32>
    %cst_25 = arith.constant 1.000000e+00 : f32
    %66 = vector.broadcast %cst_25 : f32 to vector<8x128xf32>
    %67 = arith.addf %66, %65 : vector<8x128xf32>
    %68 = arith.divf %66, %67 : vector<8x128xf32>
    %69 = vector.extract_strided_slice %56 {offsets = [0, 256], sizes = [8, 128], strides = [1, 1]} : vector<8x512xf32> to vector<8x128xf32>
    %70 = math.tanh %69 : vector<8x128xf32>
    %71 = vector.extract_strided_slice %56 {offsets = [0, 384], sizes = [8, 128], strides = [1, 1]} : vector<8x512xf32> to vector<8x128xf32>
    %72 = arith.negf %71 : vector<8x128xf32>
    %73 = math.exp %72 : vector<8x128xf32>
    %cst_26 = arith.constant 1.000000e+00 : f32
    %74 = vector.broadcast %cst_26 : f32 to vector<8x128xf32>
    %75 = arith.addf %74, %73 : vector<8x128xf32>
    %76 = arith.divf %74, %75 : vector<8x128xf32>
    %cst_27 = arith.constant dense<0.000000e+00> : vector<8x128xf32>
    %77 = tpu.matmul %45, %4, %cst_27 {dimension_numbers = #tpu.dot_dimension_numbers<[1], [0], [0], [1], [0, 0, 1, 1], [], []>} : vector<8x128xf32>, vector<128x128xf32>, vector<8x128xf32> -> vector<8x128xf32>
    %78 = vector.broadcast %5 : vector<1x128xf32> to vector<8x128xf32>
    %79 = arith.addf %77, %78 : vector<8x128xf32>
    %80 = arith.subf %45, %79 : vector<8x128xf32>
    %81 = arith.index_cast %c1_i32 : i32 to index
    %c0_28 = arith.constant 0 : index
    %c0_29 = arith.constant 0 : index
    %82 = vector.load %arg3[%81, %c0_28, %c0_29] : memref<8x8x1xf32, #tpu.memory_space<vmem>>, vector<1x8x1xf32>
    %83 = vector.shape_cast %82 : vector<1x8x1xf32> to vector<8x1xf32>
    %84 = vector.broadcast %83 : vector<8x1xf32> to vector<8x128xf32>
    %85 = arith.mulf %79, %84 : vector<8x128xf32>
    %86 = arith.addf %80, %85 : vector<8x128xf32>
    %87 = arith.mulf %68, %86 : vector<8x128xf32>
    %88 = arith.mulf %62, %70 : vector<8x128xf32>
    %89 = arith.addf %87, %88 : vector<8x128xf32>
    %90 = math.tanh %89 : vector<8x128xf32>
    %91 = arith.mulf %76, %90 : vector<8x128xf32>
    %92 = arith.index_cast %c1_i32 : i32 to index
    %c0_30 = arith.constant 0 : index
    %c0_31 = arith.constant 0 : index
    %93 = vector.load %arg7[%92, %c0_30, %c0_31] : memref<8x8x128xf32, #tpu.memory_space<vmem>>, vector<1x8x128xf32>
    %94 = vector.shape_cast %93 : vector<1x8x128xf32> to vector<8x128xf32>
    %95 = vector.shape_cast %91 : vector<8x128xf32> to vector<1x8x128xf32>
    tpu.vector_store %arg7[%92, %c0_30, %c0_31], %95 {strides = array<i32>} : memref<8x8x128xf32, #tpu.memory_space<vmem>>, vector<1x8x128xf32>,
    %c2_i32 = arith.constant 2 : i32
    %96 = arith.index_cast %c2_i32 : i32 to index
    %c0_32 = arith.constant 0 : index
    %c0_33 = arith.constant 0 : index
    %97 = vector.load %arg2[%96, %c0_32, %c0_33] : memref<8x8x512xf32, #tpu.memory_space<vmem>>, vector<1x8x512xf32>
    %98 = vector.shape_cast %97 : vector<1x8x512xf32> to vector<8x512xf32>
    %cst_34 = arith.constant dense<0.000000e+00> : vector<8x512xf32>
    %99 = tpu.matmul %91, %3, %cst_34 {dimension_numbers = #tpu.dot_dimension_numbers<[1], [0], [0], [1], [0, 0, 1, 1], [], []>} : vector<8x128xf32>, vector<128x512xf32>, vector<8x512xf32> -> vector<8x512xf32>
    %100 = arith.addf %98, %99 : vector<8x512xf32>
    %101 = vector.extract_strided_slice %100 {offsets = [0, 0], sizes = [8, 128], strides = [1, 1]} : vector<8x512xf32> to vector<8x128xf32>
    %102 = arith.negf %101 : vector<8x128xf32>
    %103 = math.exp %102 : vector<8x128xf32>
    %cst_35 = arith.constant 1.000000e+00 : f32
    %104 = vector.broadcast %cst_35 : f32 to vector<8x128xf32>
    %105 = arith.addf %104, %103 : vector<8x128xf32>
    %106 = arith.divf %104, %105 : vector<8x128xf32>
    %107 = vector.extract_strided_slice %100 {offsets = [0, 128], sizes = [8, 128], strides = [1, 1]} : vector<8x512xf32> to vector<8x128xf32>
    %108 = arith.negf %107 : vector<8x128xf32>
    %109 = math.exp %108 : vector<8x128xf32>
    %cst_36 = arith.constant 1.000000e+00 : f32
    %110 = vector.broadcast %cst_36 : f32 to vector<8x128xf32>
    %111 = arith.addf %110, %109 : vector<8x128xf32>
    %112 = arith.divf %110, %111 : vector<8x128xf32>
    %113 = vector.extract_strided_slice %100 {offsets = [0, 256], sizes = [8, 128], strides = [1, 1]} : vector<8x512xf32> to vector<8x128xf32>
    %114 = math.tanh %113 : vector<8x128xf32>
    %115 = vector.extract_strided_slice %100 {offsets = [0, 384], sizes = [8, 128], strides = [1, 1]} : vector<8x512xf32> to vector<8x128xf32>
    %116 = arith.negf %115 : vector<8x128xf32>
    %117 = math.exp %116 : vector<8x128xf32>
    %cst_37 = arith.constant 1.000000e+00 : f32
    %118 = vector.broadcast %cst_37 : f32 to vector<8x128xf32>
    %119 = arith.addf %118, %117 : vector<8x128xf32>
    %120 = arith.divf %118, %119 : vector<8x128xf32>
    %cst_38 = arith.constant dense<0.000000e+00> : vector<8x128xf32>
    %121 = tpu.matmul %89, %4, %cst_38 {dimension_numbers = #tpu.dot_dimension_numbers<[1], [0], [0], [1], [0, 0, 1, 1], [], []>} : vector<8x128xf32>, vector<128x128xf32>, vector<8x128xf32> -> vector<8x128xf32>
    %122 = vector.broadcast %5 : vector<1x128xf32> to vector<8x128xf32>
    %123 = arith.addf %121, %122 : vector<8x128xf32>
    %124 = arith.subf %89, %123 : vector<8x128xf32>
    %125 = arith.index_cast %c2_i32 : i32 to index
    %c0_39 = arith.constant 0 : index
    %c0_40 = arith.constant 0 : index
    %126 = vector.load %arg3[%125, %c0_39, %c0_40] : memref<8x8x1xf32, #tpu.memory_space<vmem>>, vector<1x8x1xf32>
    %127 = vector.shape_cast %126 : vector<1x8x1xf32> to vector<8x1xf32>
    %128 = vector.broadcast %127 : vector<8x1xf32> to vector<8x128xf32>
    %129 = arith.mulf %123, %128 : vector<8x128xf32>
    %130 = arith.addf %124, %129 : vector<8x128xf32>
    %131 = arith.mulf %112, %130 : vector<8x128xf32>
    %132 = arith.mulf %106, %114 : vector<8x128xf32>
    %133 = arith.addf %131, %132 : vector<8x128xf32>
    %134 = math.tanh %133 : vector<8x128xf32>
    %135 = arith.mulf %120, %134 : vector<8x128xf32>
    %136 = arith.index_cast %c2_i32 : i32 to index
    %c0_41 = arith.constant 0 : index
    %c0_42 = arith.constant 0 : index
    %137 = vector.load %arg7[%136, %c0_41, %c0_42] : memref<8x8x128xf32, #tpu.memory_space<vmem>>, vector<1x8x128xf32>
    %138 = vector.shape_cast %137 : vector<1x8x128xf32> to vector<8x128xf32>
    %139 = vector.shape_cast %135 : vector<8x128xf32> to vector<1x8x128xf32>
    tpu.vector_store %arg7[%136, %c0_41, %c0_42], %139 {strides = array<i32>} : memref<8x8x128xf32, #tpu.memory_space<vmem>>, vector<1x8x128xf32>,
    %c3_i32 = arith.constant 3 : i32
    %140 = arith.index_cast %c3_i32 : i32 to index
    %c0_43 = arith.constant 0 : index
    %c0_44 = arith.constant 0 : index
    %141 = vector.load %arg2[%140, %c0_43, %c0_44] : memref<8x8x512xf32, #tpu.memory_space<vmem>>, vector<1x8x512xf32>
    %142 = vector.shape_cast %141 : vector<1x8x512xf32> to vector<8x512xf32>
    %cst_45 = arith.constant dense<0.000000e+00> : vector<8x512xf32>
    %143 = tpu.matmul %135, %3, %cst_45 {dimension_numbers = #tpu.dot_dimension_numbers<[1], [0], [0], [1], [0, 0, 1, 1], [], []>} : vector<8x128xf32>, vector<128x512xf32>, vector<8x512xf32> -> vector<8x512xf32>
    %144 = arith.addf %142, %143 : vector<8x512xf32>
    %145 = vector.extract_strided_slice %144 {offsets = [0, 0], sizes = [8, 128], strides = [1, 1]} : vector<8x512xf32> to vector<8x128xf32>
    %146 = arith.negf %145 : vector<8x128xf32>
    %147 = math.exp %146 : vector<8x128xf32>
    %cst_46 = arith.constant 1.000000e+00 : f32
    %148 = vector.broadcast %cst_46 : f32 to vector<8x128xf32>
    %149 = arith.addf %148, %147 : vector<8x128xf32>
    %150 = arith.divf %148, %149 : vector<8x128xf32>
    %151 = vector.extract_strided_slice %144 {offsets = [0, 128], sizes = [8, 128], strides = [1, 1]} : vector<8x512xf32> to vector<8x128xf32>
    %152 = arith.negf %151 : vector<8x128xf32>
    %153 = math.exp %152 : vector<8x128xf32>
    %cst_47 = arith.constant 1.000000e+00 : f32
    %154 = vector.broadcast %cst_47 : f32 to vector<8x128xf32>
    %155 = arith.addf %154, %153 : vector<8x128xf32>
    %156 = arith.divf %154, %155 : vector<8x128xf32>
    %157 = vector.extract_strided_slice %144 {offsets = [0, 256], sizes = [8, 128], strides = [1, 1]} : vector<8x512xf32> to vector<8x128xf32>
    %158 = math.tanh %157 : vector<8x128xf32>
    %159 = vector.extract_strided_slice %144 {offsets = [0, 384], sizes = [8, 128], strides = [1, 1]} : vector<8x512xf32> to vector<8x128xf32>
    %160 = arith.negf %159 : vector<8x128xf32>
    %161 = math.exp %160 : vector<8x128xf32>
    %cst_48 = arith.constant 1.000000e+00 : f32
    %162 = vector.broadcast %cst_48 : f32 to vector<8x128xf32>
    %163 = arith.addf %162, %161 : vector<8x128xf32>
    %164 = arith.divf %162, %163 : vector<8x128xf32>
    %cst_49 = arith.constant dense<0.000000e+00> : vector<8x128xf32>
    %165 = tpu.matmul %133, %4, %cst_49 {dimension_numbers = #tpu.dot_dimension_numbers<[1], [0], [0], [1], [0, 0, 1, 1], [], []>} : vector<8x128xf32>, vector<128x128xf32>, vector<8x128xf32> -> vector<8x128xf32>
    %166 = vector.broadcast %5 : vector<1x128xf32> to vector<8x128xf32>
    %167 = arith.addf %165, %166 : vector<8x128xf32>
    %168 = arith.subf %133, %167 : vector<8x128xf32>
    %169 = arith.index_cast %c3_i32 : i32 to index
    %c0_50 = arith.constant 0 : index
    %c0_51 = arith.constant 0 : index
    %170 = vector.load %arg3[%169, %c0_50, %c0_51] : memref<8x8x1xf32, #tpu.memory_space<vmem>>, vector<1x8x1xf32>
    %171 = vector.shape_cast %170 : vector<1x8x1xf32> to vector<8x1xf32>
    %172 = vector.broadcast %171 : vector<8x1xf32> to vector<8x128xf32>
    %173 = arith.mulf %167, %172 : vector<8x128xf32>
    %174 = arith.addf %168, %173 : vector<8x128xf32>
    %175 = arith.mulf %156, %174 : vector<8x128xf32>
    %176 = arith.mulf %150, %158 : vector<8x128xf32>
    %177 = arith.addf %175, %176 : vector<8x128xf32>
    %178 = math.tanh %177 : vector<8x128xf32>
    %179 = arith.mulf %164, %178 : vector<8x128xf32>
    %180 = arith.index_cast %c3_i32 : i32 to index
    %c0_52 = arith.constant 0 : index
    %c0_53 = arith.constant 0 : index
    %181 = vector.load %arg7[%180, %c0_52, %c0_53] : memref<8x8x128xf32, #tpu.memory_space<vmem>>, vector<1x8x128xf32>
    %182 = vector.shape_cast %181 : vector<1x8x128xf32> to vector<8x128xf32>
    %183 = vector.shape_cast %179 : vector<8x128xf32> to vector<1x8x128xf32>
    tpu.vector_store %arg7[%180, %c0_52, %c0_53], %183 {strides = array<i32>} : memref<8x8x128xf32, #tpu.memory_space<vmem>>, vector<1x8x128xf32>,
    %c4_i32 = arith.constant 4 : i32
    %184 = arith.index_cast %c4_i32 : i32 to index
    %c0_54 = arith.constant 0 : index
    %c0_55 = arith.constant 0 : index
    %185 = vector.load %arg2[%184, %c0_54, %c0_55] : memref<8x8x512xf32, #tpu.memory_space<vmem>>, vector<1x8x512xf32>
    %186 = vector.shape_cast %185 : vector<1x8x512xf32> to vector<8x512xf32>
    %cst_56 = arith.constant dense<0.000000e+00> : vector<8x512xf32>
    %187 = tpu.matmul %179, %3, %cst_56 {dimension_numbers = #tpu.dot_dimension_numbers<[1], [0], [0], [1], [0, 0, 1, 1], [], []>} : vector<8x128xf32>, vector<128x512xf32>, vector<8x512xf32> -> vector<8x512xf32>
    %188 = arith.addf %186, %187 : vector<8x512xf32>
    %189 = vector.extract_strided_slice %188 {offsets = [0, 0], sizes = [8, 128], strides = [1, 1]} : vector<8x512xf32> to vector<8x128xf32>
    %190 = arith.negf %189 : vector<8x128xf32>
    %191 = math.exp %190 : vector<8x128xf32>
    %cst_57 = arith.constant 1.000000e+00 : f32
    %192 = vector.broadcast %cst_57 : f32 to vector<8x128xf32>
    %193 = arith.addf %192, %191 : vector<8x128xf32>
    %194 = arith.divf %192, %193 : vector<8x128xf32>
    %195 = vector.extract_strided_slice %188 {offsets = [0, 128], sizes = [8, 128], strides = [1, 1]} : vector<8x512xf32> to vector<8x128xf32>
    %196 = arith.negf %195 : vector<8x128xf32>
    %197 = math.exp %196 : vector<8x128xf32>
    %cst_58 = arith.constant 1.000000e+00 : f32
    %198 = vector.broadcast %cst_58 : f32 to vector<8x128xf32>
    %199 = arith.addf %198, %197 : vector<8x128xf32>
    %200 = arith.divf %198, %199 : vector<8x128xf32>
    %201 = vector.extract_strided_slice %188 {offsets = [0, 256], sizes = [8, 128], strides = [1, 1]} : vector<8x512xf32> to vector<8x128xf32>
    %202 = math.tanh %201 : vector<8x128xf32>
    %203 = vector.extract_strided_slice %188 {offsets = [0, 384], sizes = [8, 128], strides = [1, 1]} : vector<8x512xf32> to vector<8x128xf32>
    %204 = arith.negf %203 : vector<8x128xf32>
    %205 = math.exp %204 : vector<8x128xf32>
    %cst_59 = arith.constant 1.000000e+00 : f32
    %206 = vector.broadcast %cst_59 : f32 to vector<8x128xf32>
    %207 = arith.addf %206, %205 : vector<8x128xf32>
    %208 = arith.divf %206, %207 : vector<8x128xf32>
    %cst_60 = arith.constant dense<0.000000e+00> : vector<8x128xf32>
    %209 = tpu.matmul %177, %4, %cst_60 {dimension_numbers = #tpu.dot_dimension_numbers<[1], [0], [0], [1], [0, 0, 1, 1], [], []>} : vector<8x128xf32>, vector<128x128xf32>, vector<8x128xf32> -> vector<8x128xf32>
    %210 = vector.broadcast %5 : vector<1x128xf32> to vector<8x128xf32>
    %211 = arith.addf %209, %210 : vector<8x128xf32>
    %212 = arith.subf %177, %211 : vector<8x128xf32>
    %213 = arith.index_cast %c4_i32 : i32 to index
    %c0_61 = arith.constant 0 : index
    %c0_62 = arith.constant 0 : index
    %214 = vector.load %arg3[%213, %c0_61, %c0_62] : memref<8x8x1xf32, #tpu.memory_space<vmem>>, vector<1x8x1xf32>
    %215 = vector.shape_cast %214 : vector<1x8x1xf32> to vector<8x1xf32>
    %216 = vector.broadcast %215 : vector<8x1xf32> to vector<8x128xf32>
    %217 = arith.mulf %211, %216 : vector<8x128xf32>
    %218 = arith.addf %212, %217 : vector<8x128xf32>
    %219 = arith.mulf %200, %218 : vector<8x128xf32>
    %220 = arith.mulf %194, %202 : vector<8x128xf32>
    %221 = arith.addf %219, %220 : vector<8x128xf32>
    %222 = math.tanh %221 : vector<8x128xf32>
    %223 = arith.mulf %208, %222 : vector<8x128xf32>
    %224 = arith.index_cast %c4_i32 : i32 to index
    %c0_63 = arith.constant 0 : index
    %c0_64 = arith.constant 0 : index
    %225 = vector.load %arg7[%224, %c0_63, %c0_64] : memref<8x8x128xf32, #tpu.memory_space<vmem>>, vector<1x8x128xf32>
    %226 = vector.shape_cast %225 : vector<1x8x128xf32> to vector<8x128xf32>
    %227 = vector.shape_cast %223 : vector<8x128xf32> to vector<1x8x128xf32>
    tpu.vector_store %arg7[%224, %c0_63, %c0_64], %227 {strides = array<i32>} : memref<8x8x128xf32, #tpu.memory_space<vmem>>, vector<1x8x128xf32>,
    %c5_i32 = arith.constant 5 : i32
    %228 = arith.index_cast %c5_i32 : i32 to index
    %c0_65 = arith.constant 0 : index
    %c0_66 = arith.constant 0 : index
    %229 = vector.load %arg2[%228, %c0_65, %c0_66] : memref<8x8x512xf32, #tpu.memory_space<vmem>>, vector<1x8x512xf32>
    %230 = vector.shape_cast %229 : vector<1x8x512xf32> to vector<8x512xf32>
    %cst_67 = arith.constant dense<0.000000e+00> : vector<8x512xf32>
    %231 = tpu.matmul %223, %3, %cst_67 {dimension_numbers = #tpu.dot_dimension_numbers<[1], [0], [0], [1], [0, 0, 1, 1], [], []>} : vector<8x128xf32>, vector<128x512xf32>, vector<8x512xf32> -> vector<8x512xf32>
    %232 = arith.addf %230, %231 : vector<8x512xf32>
    %233 = vector.extract_strided_slice %232 {offsets = [0, 0], sizes = [8, 128], strides = [1, 1]} : vector<8x512xf32> to vector<8x128xf32>
    %234 = arith.negf %233 : vector<8x128xf32>
    %235 = math.exp %234 : vector<8x128xf32>
    %cst_68 = arith.constant 1.000000e+00 : f32
    %236 = vector.broadcast %cst_68 : f32 to vector<8x128xf32>
    %237 = arith.addf %236, %235 : vector<8x128xf32>
    %238 = arith.divf %236, %237 : vector<8x128xf32>
    %239 = vector.extract_strided_slice %232 {offsets = [0, 128], sizes = [8, 128], strides = [1, 1]} : vector<8x512xf32> to vector<8x128xf32>
    %240 = arith.negf %239 : vector<8x128xf32>
    %241 = math.exp %240 : vector<8x128xf32>
    %cst_69 = arith.constant 1.000000e+00 : f32
    %242 = vector.broadcast %cst_69 : f32 to vector<8x128xf32>
    %243 = arith.addf %242, %241 : vector<8x128xf32>
    %244 = arith.divf %242, %243 : vector<8x128xf32>
    %245 = vector.extract_strided_slice %232 {offsets = [0, 256], sizes = [8, 128], strides = [1, 1]} : vector<8x512xf32> to vector<8x128xf32>
    %246 = math.tanh %245 : vector<8x128xf32>
    %247 = vector.extract_strided_slice %232 {offsets = [0, 384], sizes = [8, 128], strides = [1, 1]} : vector<8x512xf32> to vector<8x128xf32>
    %248 = arith.negf %247 : vector<8x128xf32>
    %249 = math.exp %248 : vector<8x128xf32>
    %cst_70 = arith.constant 1.000000e+00 : f32
    %250 = vector.broadcast %cst_70 : f32 to vector<8x128xf32>
    %251 = arith.addf %250, %249 : vector<8x128xf32>
    %252 = arith.divf %250, %251 : vector<8x128xf32>
    %cst_71 = arith.constant dense<0.000000e+00> : vector<8x128xf32>
    %253 = tpu.matmul %221, %4, %cst_71 {dimension_numbers = #tpu.dot_dimension_numbers<[1], [0], [0], [1], [0, 0, 1, 1], [], []>} : vector<8x128xf32>, vector<128x128xf32>, vector<8x128xf32> -> vector<8x128xf32>
    %254 = vector.broadcast %5 : vector<1x128xf32> to vector<8x128xf32>
    %255 = arith.addf %253, %254 : vector<8x128xf32>
    %256 = arith.subf %221, %255 : vector<8x128xf32>
    %257 = arith.index_cast %c5_i32 : i32 to index
    %c0_72 = arith.constant 0 : index
    %c0_73 = arith.constant 0 : index
    %258 = vector.load %arg3[%257, %c0_72, %c0_73] : memref<8x8x1xf32, #tpu.memory_space<vmem>>, vector<1x8x1xf32>
    %259 = vector.shape_cast %258 : vector<1x8x1xf32> to vector<8x1xf32>
    %260 = vector.broadcast %259 : vector<8x1xf32> to vector<8x128xf32>
    %261 = arith.mulf %255, %260 : vector<8x128xf32>
    %262 = arith.addf %256, %261 : vector<8x128xf32>
    %263 = arith.mulf %244, %262 : vector<8x128xf32>
    %264 = arith.mulf %238, %246 : vector<8x128xf32>
    %265 = arith.addf %263, %264 : vector<8x128xf32>
    %266 = math.tanh %265 : vector<8x128xf32>
    %267 = arith.mulf %252, %266 : vector<8x128xf32>
    %268 = arith.index_cast %c5_i32 : i32 to index
    %c0_74 = arith.constant 0 : index
    %c0_75 = arith.constant 0 : index
    %269 = vector.load %arg7[%268, %c0_74, %c0_75] : memref<8x8x128xf32, #tpu.memory_space<vmem>>, vector<1x8x128xf32>
    %270 = vector.shape_cast %269 : vector<1x8x128xf32> to vector<8x128xf32>
    %271 = vector.shape_cast %267 : vector<8x128xf32> to vector<1x8x128xf32>
    tpu.vector_store %arg7[%268, %c0_74, %c0_75], %271 {strides = array<i32>} : memref<8x8x128xf32, #tpu.memory_space<vmem>>, vector<1x8x128xf32>,
    %c6_i32 = arith.constant 6 : i32
    %272 = arith.index_cast %c6_i32 : i32 to index
    %c0_76 = arith.constant 0 : index
    %c0_77 = arith.constant 0 : index
    %273 = vector.load %arg2[%272, %c0_76, %c0_77] : memref<8x8x512xf32, #tpu.memory_space<vmem>>, vector<1x8x512xf32>
    %274 = vector.shape_cast %273 : vector<1x8x512xf32> to vector<8x512xf32>
    %cst_78 = arith.constant dense<0.000000e+00> : vector<8x512xf32>
    %275 = tpu.matmul %267, %3, %cst_78 {dimension_numbers = #tpu.dot_dimension_numbers<[1], [0], [0], [1], [0, 0, 1, 1], [], []>} : vector<8x128xf32>, vector<128x512xf32>, vector<8x512xf32> -> vector<8x512xf32>
    %276 = arith.addf %274, %275 : vector<8x512xf32>
    %277 = vector.extract_strided_slice %276 {offsets = [0, 0], sizes = [8, 128], strides = [1, 1]} : vector<8x512xf32> to vector<8x128xf32>
    %278 = arith.negf %277 : vector<8x128xf32>
    %279 = math.exp %278 : vector<8x128xf32>
    %cst_79 = arith.constant 1.000000e+00 : f32
    %280 = vector.broadcast %cst_79 : f32 to vector<8x128xf32>
    %281 = arith.addf %280, %279 : vector<8x128xf32>
    %282 = arith.divf %280, %281 : vector<8x128xf32>
    %283 = vector.extract_strided_slice %276 {offsets = [0, 128], sizes = [8, 128], strides = [1, 1]} : vector<8x512xf32> to vector<8x128xf32>
    %284 = arith.negf %283 : vector<8x128xf32>
    %285 = math.exp %284 : vector<8x128xf32>
    %cst_80 = arith.constant 1.000000e+00 : f32
    %286 = vector.broadcast %cst_80 : f32 to vector<8x128xf32>
    %287 = arith.addf %286, %285 : vector<8x128xf32>
    %288 = arith.divf %286, %287 : vector<8x128xf32>
    %289 = vector.extract_strided_slice %276 {offsets = [0, 256], sizes = [8, 128], strides = [1, 1]} : vector<8x512xf32> to vector<8x128xf32>
    %290 = math.tanh %289 : vector<8x128xf32>
    %291 = vector.extract_strided_slice %276 {offsets = [0, 384], sizes = [8, 128], strides = [1, 1]} : vector<8x512xf32> to vector<8x128xf32>
    %292 = arith.negf %291 : vector<8x128xf32>
    %293 = math.exp %292 : vector<8x128xf32>
    %cst_81 = arith.constant 1.000000e+00 : f32
    %294 = vector.broadcast %cst_81 : f32 to vector<8x128xf32>
    %295 = arith.addf %294, %293 : vector<8x128xf32>
    %296 = arith.divf %294, %295 : vector<8x128xf32>
    %cst_82 = arith.constant dense<0.000000e+00> : vector<8x128xf32>
    %297 = tpu.matmul %265, %4, %cst_82 {dimension_numbers = #tpu.dot_dimension_numbers<[1], [0], [0], [1], [0, 0, 1, 1], [], []>} : vector<8x128xf32>, vector<128x128xf32>, vector<8x128xf32> -> vector<8x128xf32>
    %298 = vector.broadcast %5 : vector<1x128xf32> to vector<8x128xf32>
    %299 = arith.addf %297, %298 : vector<8x128xf32>
    %300 = arith.subf %265, %299 : vector<8x128xf32>
    %301 = arith.index_cast %c6_i32 : i32 to index
    %c0_83 = arith.constant 0 : index
    %c0_84 = arith.constant 0 : index
    %302 = vector.load %arg3[%301, %c0_83, %c0_84] : memref<8x8x1xf32, #tpu.memory_space<vmem>>, vector<1x8x1xf32>
    %303 = vector.shape_cast %302 : vector<1x8x1xf32> to vector<8x1xf32>
    %304 = vector.broadcast %303 : vector<8x1xf32> to vector<8x128xf32>
    %305 = arith.mulf %299, %304 : vector<8x128xf32>
    %306 = arith.addf %300, %305 : vector<8x128xf32>
    %307 = arith.mulf %288, %306 : vector<8x128xf32>
    %308 = arith.mulf %282, %290 : vector<8x128xf32>
    %309 = arith.addf %307, %308 : vector<8x128xf32>
    %310 = math.tanh %309 : vector<8x128xf32>
    %311 = arith.mulf %296, %310 : vector<8x128xf32>
    %312 = arith.index_cast %c6_i32 : i32 to index
    %c0_85 = arith.constant 0 : index
    %c0_86 = arith.constant 0 : index
    %313 = vector.load %arg7[%312, %c0_85, %c0_86] : memref<8x8x128xf32, #tpu.memory_space<vmem>>, vector<1x8x128xf32>
    %314 = vector.shape_cast %313 : vector<1x8x128xf32> to vector<8x128xf32>
    %315 = vector.shape_cast %311 : vector<8x128xf32> to vector<1x8x128xf32>
    tpu.vector_store %arg7[%312, %c0_85, %c0_86], %315 {strides = array<i32>} : memref<8x8x128xf32, #tpu.memory_space<vmem>>, vector<1x8x128xf32>,
    %c7_i32 = arith.constant 7 : i32
    %316 = arith.index_cast %c7_i32 : i32 to index
    %c0_87 = arith.constant 0 : index
    %c0_88 = arith.constant 0 : index
    %317 = vector.load %arg2[%316, %c0_87, %c0_88] : memref<8x8x512xf32, #tpu.memory_space<vmem>>, vector<1x8x512xf32>
    %318 = vector.shape_cast %317 : vector<1x8x512xf32> to vector<8x512xf32>
    %cst_89 = arith.constant dense<0.000000e+00> : vector<8x512xf32>
    %319 = tpu.matmul %311, %3, %cst_89 {dimension_numbers = #tpu.dot_dimension_numbers<[1], [0], [0], [1], [0, 0, 1, 1], [], []>} : vector<8x128xf32>, vector<128x512xf32>, vector<8x512xf32> -> vector<8x512xf32>
    %320 = arith.addf %318, %319 : vector<8x512xf32>
    %321 = vector.extract_strided_slice %320 {offsets = [0, 0], sizes = [8, 128], strides = [1, 1]} : vector<8x512xf32> to vector<8x128xf32>
    %322 = arith.negf %321 : vector<8x128xf32>
    %323 = math.exp %322 : vector<8x128xf32>
    %cst_90 = arith.constant 1.000000e+00 : f32
    %324 = vector.broadcast %cst_90 : f32 to vector<8x128xf32>
    %325 = arith.addf %324, %323 : vector<8x128xf32>
    %326 = arith.divf %324, %325 : vector<8x128xf32>
    %327 = vector.extract_strided_slice %320 {offsets = [0, 128], sizes = [8, 128], strides = [1, 1]} : vector<8x512xf32> to vector<8x128xf32>
    %328 = arith.negf %327 : vector<8x128xf32>
    %329 = math.exp %328 : vector<8x128xf32>
    %cst_91 = arith.constant 1.000000e+00 : f32
    %330 = vector.broadcast %cst_91 : f32 to vector<8x128xf32>
    %331 = arith.addf %330, %329 : vector<8x128xf32>
    %332 = arith.divf %330, %331 : vector<8x128xf32>
    %333 = vector.extract_strided_slice %320 {offsets = [0, 256], sizes = [8, 128], strides = [1, 1]} : vector<8x512xf32> to vector<8x128xf32>
    %334 = math.tanh %333 : vector<8x128xf32>
    %335 = vector.extract_strided_slice %320 {offsets = [0, 384], sizes = [8, 128], strides = [1, 1]} : vector<8x512xf32> to vector<8x128xf32>
    %336 = arith.negf %335 : vector<8x128xf32>
    %337 = math.exp %336 : vector<8x128xf32>
    %cst_92 = arith.constant 1.000000e+00 : f32
    %338 = vector.broadcast %cst_92 : f32 to vector<8x128xf32>
    %339 = arith.addf %338, %337 : vector<8x128xf32>
    %340 = arith.divf %338, %339 : vector<8x128xf32>
    %cst_93 = arith.constant dense<0.000000e+00> : vector<8x128xf32>
    %341 = tpu.matmul %309, %4, %cst_93 {dimension_numbers = #tpu.dot_dimension_numbers<[1], [0], [0], [1], [0, 0, 1, 1], [], []>} : vector<8x128xf32>, vector<128x128xf32>, vector<8x128xf32> -> vector<8x128xf32>
    %342 = vector.broadcast %5 : vector<1x128xf32> to vector<8x128xf32>
    %343 = arith.addf %341, %342 : vector<8x128xf32>
    %344 = arith.subf %309, %343 : vector<8x128xf32>
    %345 = arith.index_cast %c7_i32 : i32 to index
    %c0_94 = arith.constant 0 : index
    %c0_95 = arith.constant 0 : index
    %346 = vector.load %arg3[%345, %c0_94, %c0_95] : memref<8x8x1xf32, #tpu.memory_space<vmem>>, vector<1x8x1xf32>
    %347 = vector.shape_cast %346 : vector<1x8x1xf32> to vector<8x1xf32>
    %348 = vector.broadcast %347 : vector<8x1xf32> to vector<8x128xf32>
    %349 = arith.mulf %343, %348 : vector<8x128xf32>
    %350 = arith.addf %344, %349 : vector<8x128xf32>
    %351 = arith.mulf %332, %350 : vector<8x128xf32>
    %352 = arith.mulf %326, %334 : vector<8x128xf32>
    %353 = arith.addf %351, %352 : vector<8x128xf32>
    %354 = math.tanh %353 : vector<8x128xf32>
    %355 = arith.mulf %340, %354 : vector<8x128xf32>
    %356 = arith.index_cast %c7_i32 : i32 to index
    %c0_96 = arith.constant 0 : index
    %c0_97 = arith.constant 0 : index
    %357 = vector.load %arg7[%356, %c0_96, %c0_97] : memref<8x8x128xf32, #tpu.memory_space<vmem>>, vector<1x8x128xf32>
    %358 = vector.shape_cast %357 : vector<1x8x128xf32> to vector<8x128xf32>
    %359 = vector.shape_cast %355 : vector<8x128xf32> to vector<1x8x128xf32>
    tpu.vector_store %arg7[%356, %c0_96, %c0_97], %359 {strides = array<i32>} : memref<8x8x128xf32, #tpu.memory_space<vmem>>, vector<1x8x128xf32>,
    %c8_i32 = arith.constant 8 : i32
    %c0_98 = arith.constant 0 : index
    %c0_99 = arith.constant 0 : index
    %360 = vector.load %arg11[%c0_98, %c0_99] : memref<8x128xf32, #tpu.memory_space<vmem>>, vector<8x128xf32>
    tpu.vector_store %arg11[%c0_98, %c0_99], %355 {strides = array<i32>} : memref<8x128xf32, #tpu.memory_space<vmem>>, vector<8x128xf32>,
    %c0_100 = arith.constant 0 : index
    %c0_101 = arith.constant 0 : index
    %361 = vector.load %arg12[%c0_100, %c0_101] : memref<8x128xf32, #tpu.memory_space<vmem>>, vector<8x128xf32>
    tpu.vector_store %arg12[%c0_100, %c0_101], %353 {strides = array<i32>} : memref<8x128xf32, #tpu.memory_space<vmem>>, vector<8x128xf32>,
    return
  }
  func.func @transform_0(%arg0: i32, %arg1: i32) -> (i32, i32, i32) {
    %c0_i32 = arith.constant 0 : i32
    %c0_i32_0 = arith.constant 0 : i32
    return %arg1, %arg0, %c0_i32 : i32, i32, i32
  }
  func.func @transform_1(%arg0: i32, %arg1: i32) -> (i32, i32, i32) {
    %c0_i32 = arith.constant 0 : i32
    %c0_i32_0 = arith.constant 0 : i32
    return %arg1, %arg0, %c0_i32 : i32, i32, i32
  }
  func.func @transform_5(%arg0: i32, %arg1: i32) -> (i32, i32, i32) {
    %c0_i32 = arith.constant 0 : i32
    %c0_i32_0 = arith.constant 0 : i32
    return %arg1, %arg0, %c0_i32 : i32, i32, i32
  }
}

</mosaic_0001>

<llo_original>
// kernel: tpu_custom_call.1
$region0: #{tpu_custom_call.1}
  #allocation0 [shape = 'u32[]', space=smem, size = 0x4, offset = 0x4, fixed_abs, tag = 'smem constant byte address 0x4 - core index']
  #allocation1 [shape = 'u32[144,128]{1,0:T(1,128)}', space=vmem, size = 0x12000, scoped, tag = 'internal scratch']
  #allocation2 [shape = 'f32[128,512]{1,0:T(8,128)}', space=vmem, size = 0x40000, scoped, tag = 'scratch operand']
  #allocation3 [shape = 'f32[128,128]{1,0:T(8,128)}', space=vmem, size = 0x10000, scoped, tag = 'scratch operand']
  #allocation4 [shape = 'f32[1,128]{1,0:T(1,128)}', space=vmem, size = 0x200, scoped, tag = 'scratch operand']
  #allocation5 [shape = 'f32[8,128]{1,0:T(8,128)}', space=vmem, size = 0x1000, scoped, tag = 'scratch operand']
  #allocation6 [shape = 'f32[8,128]{1,0:T(8,128)}', space=vmem, size = 0x1000, scoped, tag = 'scratch operand']
  #allocation7 [shape = 's32[3]{0}', space=sflag, size = 0xc, scoped, tag = 'scratch operand']
  #allocation12 [shape = 's32[]', space=sflag, size = 0x4, offset = 0, fixed_abs, tag = 'sflag constant byte address 0x0 - dummy sync flag']
  #allocation13 [shape = 's32[]', space=sflag, size = 0x4, offset = 0, fixed_abs, tag = 'sflag constant byte address 0x0 - dummy sync flag']
  #allocation14 [shape = 'u32[]', space=smem, size = 0x4, offset = 0x44, fixed_abs, tag = 'smem constant byte address 0x44 - assertion arg 0']
  #allocation15 [shape = 'u32[]', space=smem, size = 0x4, offset = 0x48, fixed_abs, tag = 'smem constant byte address 0x48 - assertion arg 1']
  #allocation16 [shape = 's32[]', space=sflag, size = 0x4, offset = 0, fixed_abs, tag = 'sflag constant byte address 0x0 - dummy sync flag']
  #allocation17 [shape = 's32[]', space=sflag, size = 0x4, offset = 0, fixed_abs, tag = 'sflag constant byte address 0x0 - dummy sync flag']
  #allocation18 [shape = 's32[]', space=sflag, size = 0x4, offset = 0, fixed_abs, tag = 'sflag constant byte address 0x0 - dummy sync flag']
  %s0 = inlined_call_operand.hbm [shape: f32[8,8,512], index: 0, kind: input, shape index: {}]
  %s1 = inlined_call_operand.vmem [shape: f32[8,8,1], index: 1, kind: input, shape index: {}]
  %s2 = inlined_call_operand.hbm [shape: f32[128,512], index: 2, kind: input, shape index: {}]
  %s3 = inlined_call_operand.hbm [shape: f32[128,128], index: 3, kind: input, shape index: {}]
  %s4 = inlined_call_operand.vmem [shape: f32[1,128], index: 4, kind: input, shape index: {}]
  %s5 = inlined_call_operand.hbm [shape: f32[8,8,128], index: 5, kind: output, shape index: {}]
  %s6 = sld [smem:[#allocation0]]
  $region64: #{tpu_custom_call.1} parent=0
    _
  %s8 = ssub.s32 1, %s6
  %s9 = scalar_select 0, %s8, %s6
  $region1: #{tpu_custom_call.1} parent=0
    #allocation8 [shape = 'u8[131072]{0}', space=vmem, size = 0x20000, scoped, tag = 'input window, operand 0, single buffered']
    #allocation9 [shape = 's32[1]{0}', space=sflag, size = 0x4, scoped, tag = 'scoped memory for tpu_custom_call.1']
    #allocation10 [shape = 's32[1]{0}', space=sflag, size = 0x4, scoped, tag = 'scoped memory for tpu_custom_call.1']
    #allocation11 [shape = 'u8[32768]{0}', space=vmem, size = 0x8000, scoped, tag = 'output window, operand 0, single buffered']
    %10 = vsyncpa [#allocation9], 0
    %11 = vsyncpa [#allocation10], 0
    // Predicated region
    $region2: #{tpu_custom_call.1} parent=1 // pred_check
      _
    $region3: #{tpu_custom_call.1} parent=1 // pred_check_branch
      %13 = sbr.rel (0) target = $region5
    $region4: #{tpu_custom_call.1} parent=1 // pred_region
      %s15 = ssub.s32 4096, 4096
      %16 = vsyncadd [#allocation9], %s15
      %s17 = sshll.u32 [#allocation8], 4
      %s18 = int_to_ptr.vmem [resolvable:$true] %s17
      %23 = dma.hbm_to_vmem [thread:$0]  %s0, 4096, %s18, [#allocation9], 512, 512, 32
    $region5: #{tpu_custom_call.1} parent=1 // pred_fallthru
      _
    // Predicated region
    $region6: #{tpu_custom_call.1} parent=1 // pred_check
      _
    $region7: #{tpu_custom_call.1} parent=1 // pred_check_branch
      %25 = sbr.rel (0) target = $region9
    $region8: #{tpu_custom_call.1} parent=1 // pred_region
      _
    $region9: #{tpu_custom_call.1} parent=1 // pred_fallthru
      _
    // Predicated region
    $region10: #{tpu_custom_call.1} parent=1 // pred_check
      _
    $region11: #{tpu_custom_call.1} parent=1 // pred_check_branch
      %27 = sbr.rel (0) target = $region13
    $region12: #{tpu_custom_call.1} parent=1 // pred_region
      %28 = dma.done [#allocation9], 4096
    $region13: #{tpu_custom_call.1} parent=1 // pred_fallthru
      _
    %p29 = scmp.eq.s32.totalorder 0, 0
    // Predicated region
    $region14: #{tpu_custom_call.1} parent=1 // pred_check
      %p30 = pneg %p29
    $region15: #{tpu_custom_call.1} parent=1 // pred_check_branch
      %32 = sbr.rel (%p30) target = $region17
    $region16: #{tpu_custom_call.1} parent=1 // pred_region
      // Predicated region
      $region18: #{tpu_custom_call.1} parent=16 // pred_check
        _
      $region19: #{tpu_custom_call.1} parent=16 // pred_check_branch
        %34 = sbr.rel target = $region21
      $region20: #{tpu_custom_call.1} parent=16 // pred_region
        %35 = sst [smem:[#allocation14]] [#allocation13]
        %36 = sst [smem:[#allocation15]] [#allocation12]
      $region21: #{tpu_custom_call.1} parent=16 // pred_fallthru
        _
      %38 = shalt.err (0)
      %s40 = sshll.u32 [#allocation2], 4
      %s41 = int_to_ptr.vmem [resolvable:$true] %s40
      %43 = dma.hbm_to_vmem [thread:$0]  %s2, 8192, %s41, [#allocation7]
      %s44 = scalar_lea.sflag [#allocation7], 1
      // Predicated region
      $region22: #{tpu_custom_call.1} parent=16 // pred_check
        _
      $region23: #{tpu_custom_call.1} parent=16 // pred_check_branch
        %46 = sbr.rel target = $region25
      $region24: #{tpu_custom_call.1} parent=16 // pred_region
        %47 = sst [smem:[#allocation14]] [#allocation17]
        %48 = sst [smem:[#allocation15]] [#allocation16]
      $region25: #{tpu_custom_call.1} parent=16 // pred_fallthru
        _
      %50 = shalt.err (0)
      %s52 = sshll.u32 [#allocation3], 4
      %s53 = int_to_ptr.vmem [resolvable:$true] %s52
      %55 = dma.hbm_to_vmem [thread:$0]  %s3, 2048, %s53, %s44
      %s56 = scalar_lea.sflag [#allocation7], 2
      %p58 = scmp.lt.u32.totalorder 1, 8
      %p59 = pneg %p58
      // Predicated region
      $region26: #{tpu_custom_call.1} parent=16 // pred_check
        _
      $region27: #{tpu_custom_call.1} parent=16 // pred_check_branch
        %61 = sbr.rel (%p58) target = $region29
      $region28: #{tpu_custom_call.1} parent=16 // pred_region
        %s76 = sand.u32 1, 7
        %p77 = scmp.eq.s32.totalorder %s76, 0
        %p78 = pneg %p77
        // Predicated region
        $region41: #{tpu_custom_call.1} parent=28 // pred_check
          _
        $region42: #{tpu_custom_call.1} parent=28 // pred_check_branch
          %80 = sbr.rel (%p77) target = $region44
        $region43: #{tpu_custom_call.1} parent=28 // pred_region
          %s81 = sand.u32 1, 7
          %s82 = ssub.s32 1, %s81
          %s83 = scalar_lea.vmem %s4, %s82
          %s84 = ssub.s32 1, %s81
          %s85 = scalar_lea.vmem [#allocation4], %s84
          %s86 = sshllo.u32 0, %s81
          loop: start=0, step=1, limit=1
          $region45: #{tpu_custom_call.1} parent=43 // loop_pre_header
            _
          $region46: #{tpu_custom_call.1} parent=43 // loop_header
            %s88 = sphi 0, %s92
            %p89 = scmp.ge.s32.totalorder %s88, 1
            %s93 = sphi %s83, %s83
            %s94 = sphi %s85, %s85
          $region47: #{tpu_custom_call.1} parent=43 // loop_header_branch
            %91 = sbr.rel (%p89) target = $region51
          $region48: #{tpu_custom_call.1} parent=43 // loop_body
            %v95 = vld [vmem:[%s93] sm:%s86]
            %96 = vst [vmem:[%s94] sm:%s86] %v95
          $region49: #{tpu_custom_call.1} parent=43 // loop_footer
            %s92 = sadd.s32 1, %s88
          $region50: #{tpu_custom_call.1} parent=43 // loop_footer_branch
            %87 = sbr.rel target = $region46
          $region51: #{tpu_custom_call.1} parent=43 // loop_exit
            _
        $region44: #{tpu_custom_call.1} parent=28 // pred_fallthru
          _
      $region29: #{tpu_custom_call.1} parent=16 // pred_fallthru
        _
      // Predicated region
      $region30: #{tpu_custom_call.1} parent=16 // pred_check
        %p62 = pneg %p58
      $region31: #{tpu_custom_call.1} parent=16 // pred_check_branch
        %64 = sbr.rel (%p62) target = $region33
      $region32: #{tpu_custom_call.1} parent=16 // pred_region
        %s65 = sshllo.u32 0, 1
        loop: start=0, step=1, limit=1
        $region34: #{tpu_custom_call.1} parent=32 // loop_pre_header
          _
        $region35: #{tpu_custom_call.1} parent=32 // loop_header
          %s67 = sphi 0, %s71
          %p68 = scmp.ge.s32.totalorder %s67, 1
          %s72 = sphi %s4, %s4
          %s73 = sphi [#allocation4], [#allocation4]
        $region36: #{tpu_custom_call.1} parent=32 // loop_header_branch
          %70 = sbr.rel (%p68) target = $region40
        $region37: #{tpu_custom_call.1} parent=32 // loop_body
          %v74 = vld [vmem:[%s72] sm:%s65]
          %75 = vst [vmem:[%s73] sm:%s65] %v74
        $region38: #{tpu_custom_call.1} parent=32 // loop_footer
          %s71 = sadd.s32 1, %s67
        $region39: #{tpu_custom_call.1} parent=32 // loop_footer_branch
          %66 = sbr.rel target = $region35
        $region40: #{tpu_custom_call.1} parent=32 // loop_exit
          _
      $region33: #{tpu_custom_call.1} parent=16 // pred_fallthru
        _
      // Predicated region
      $region52: #{tpu_custom_call.1} parent=16 // pred_check
        _
      $region53: #{tpu_custom_call.1} parent=16 // pred_check_branch
        %99 = sbr.rel (0) target = $region55
      $region54: #{tpu_custom_call.1} parent=16 // pred_region
        %100 = vsyncadd %s56, 16
      $region55: #{tpu_custom_call.1} parent=16 // pred_fallthru
        _
      %s101 = smul.u32 8, 16
      %s102 = smul.u32 %s101, 4
      %s103 = sshll.u32 %s102, 4
      %104 = dma.done [#allocation7], %s103
      %s105 = smul.u32 128, 1
      %s106 = sshll.u32 %s105, 4
      %107 = dma.done %s44, %s106
      %s108 = smul.u32 1, 1
      %s109 = sshll.u32 %s108, 4
      %110 = dma.done %s56, %s109
      %111 = vst [vmem:[#allocation5] sm:$0xff] 0.0
      %112 = vst [vmem:[#allocation6] sm:$0xff] 0.0
    $region17: #{tpu_custom_call.1} parent=1 // pred_fallthru
      _
    %v113 = vld [vmem:[#allocation2] sm:$0xff]
    %v114 = vld [vmem:[#allocation2 + $0x8] sm:$0xff]
    %v115 = vld [vmem:[#allocation2 + $0x10] sm:$0xff]
    %v116 = vld [vmem:[#allocation2 + $0x18] sm:$0xff]
    %v117 = vld [vmem:[#allocation2 + $0x20] sm:$0xff]
    %v118 = vld [vmem:[#allocation2 + $0x28] sm:$0xff]
    %v119 = vld [vmem:[#allocation2 + $0x30] sm:$0xff]
    %v120 = vld [vmem:[#allocation2 + $0x38] sm:$0xff]
    %v121 = vld [vmem:[#allocation2 + $0x40] sm:$0xff]
    %v122 = vld [vmem:[#allocation2 + $0x48] sm:$0xff]
    %v123 = vld [vmem:[#allocation2 + $0x50] sm:$0xff]
    %v124 = vld [vmem:[#allocation2 + $0x58] sm:$0xff]
    %v125 = vld [vmem:[#allocation2 + $0x60] sm:$0xff]
    %v126 = vld [vmem:[#allocation2 + $0x68] sm:$0xff]
    %v127 = vld [vmem:[#allocation2 + $0x70] sm:$0xff]
    %v128 = vld [vmem:[#allocation2 + $0x78] sm:$0xff]
    %v129 = vld [vmem:[#allocation2 + $0x80] sm:$0xff]
    %v130 = vld [vmem:[#allocation2 + $0x88] sm:$0xff]
    %v131 = vld [vmem:[#allocation2 + $0x90] sm:$0xff]
    %v132 = vld [vmem:[#allocation2 + $0x98] sm:$0xff]
    %v133 = vld [vmem:[#allocation2 + $0xa0] sm:$0xff]
    %v134 = vld [vmem:[#allocation2 + $0xa8] sm:$0xff]
    %v135 = vld [vmem:[#allocation2 + $0xb0] sm:$0xff]
    %v136 = vld [vmem:[#allocation2 + $0xb8] sm:$0xff]
    %v137 = vld [vmem:[#allocation2 + $0xc0] sm:$0xff]
    %v138 = vld [vmem:[#allocation2 + $0xc8] sm:$0xff]
    %v139 = vld [vmem:[#allocation2 + $0xd0] sm:$0xff]
    %v140 = vld [vmem:[#allocation2 + $0xd8] sm:$0xff]
    %v141 = vld [vmem:[#allocation2 + $0xe0] sm:$0xff]
    %v142 = vld [vmem:[#allocation2 + $0xe8] sm:$0xff]
    %v143 = vld [vmem:[#allocation2 + $0xf0] sm:$0xff]
    %v144 = vld [vmem:[#allocation2 + $0xf8] sm:$0xff]
    %v145 = vld [vmem:[#allocation2 + $0x100] sm:$0xff]
    %v146 = vld [vmem:[#allocation2 + $0x108] sm:$0xff]
    %v147 = vld [vmem:[#allocation2 + $0x110] sm:$0xff]
    %v148 = vld [vmem:[#allocation2 + $0x118] sm:$0xff]
    %v149 = vld [vmem:[#allocation2 + $0x120] sm:$0xff]
    %v150 = vld [vmem:[#allocation2 + $0x128] sm:$0xff]
    %v151 = vld [vmem:[#allocation2 + $0x130] sm:$0xff]
    %v152 = vld [vmem:[#allocation2 + $0x138] sm:$0xff]
    %v153 = vld [vmem:[#allocation2 + $0x140] sm:$0xff]
    %v154 = vld [vmem:[#allocation2 + $0x148] sm:$0xff]
    %v155 = vld [vmem:[#allocation2 + $0x150] sm:$0xff]
    %v156 = vld [vmem:[#allocation2 + $0x158] sm:$0xff]
    %v157 = vld [vmem:[#allocation2 + $0x160] sm:$0xff]
    %v158 = vld [vmem:[#allocation2 + $0x168] sm:$0xff]
    %v159 = vld [vmem:[#allocation2 + $0x170] sm:$0xff]
    %v160 = vld [vmem:[#allocation2 + $0x178] sm:$0xff]
    %v161 = vld [vmem:[#allocation2 + $0x180] sm:$0xff]
    %v162 = vld [vmem:[#allocation2 + $0x188] sm:$0xff]
    %v163 = vld [vmem:[#allocation2 + $0x190] sm:$0xff]
    %v164 = vld [vmem:[#allocation2 + $0x198] sm:$0xff]
    %v165 = vld [vmem:[#allocation2 + $0x1a0] sm:$0xff]
    %v166 = vld [vmem:[#allocation2 + $0x1a8] sm:$0xff]
    %v167 = vld [vmem:[#allocation2 + $0x1b0] sm:$0xff]
    %v168 = vld [vmem:[#allocation2 + $0x1b8] sm:$0xff]
    %v169 = vld [vmem:[#allocation2 + $0x1c0] sm:$0xff]
    %v170 = vld [vmem:[#allocation2 + $0x1c8] sm:$0xff]
    %v171 = vld [vmem:[#allocation2 + $0x1d0] sm:$0xff]
    %v172 = vld [vmem:[#allocation2 + $0x1d8] sm:$0xff]
    %v173 = vld [vmem:[#allocation2 + $0x1e0] sm:$0xff]
    %v174 = vld [vmem:[#allocation2 + $0x1e8] sm:$0xff]
    %v175 = vld [vmem:[#allocation2 + $0x1f0] sm:$0xff]
    %v176 = vld [vmem:[#allocation2 + $0x1f8] sm:$0xff]
    %v177 = vld [vmem:[#allocation3] sm:$0xff]
    %v178 = vld [vmem:[#allocation3 + $0x8] sm:$0xff]
    %v179 = vld [vmem:[#allocation3 + $0x10] sm:$0xff]
    %v180 = vld [vmem:[#allocation3 + $0x18] sm:$0xff]
    %v181 = vld [vmem:[#allocation3 + $0x20] sm:$0xff]
    %v182 = vld [vmem:[#allocation3 + $0x28] sm:$0xff]
    %v183 = vld [vmem:[#allocation3 + $0x30] sm:$0xff]
    %v184 = vld [vmem:[#allocation3 + $0x38] sm:$0xff]
    %v185 = vld [vmem:[#allocation3 + $0x40] sm:$0xff]
    %v186 = vld [vmem:[#allocation3 + $0x48] sm:$0xff]
    %v187 = vld [vmem:[#allocation3 + $0x50] sm:$0xff]
    %v188 = vld [vmem:[#allocation3 + $0x58] sm:$0xff]
    %v189 = vld [vmem:[#allocation3 + $0x60] sm:$0xff]
    %v190 = vld [vmem:[#allocation3 + $0x68] sm:$0xff]
    %v191 = vld [vmem:[#allocation3 + $0x70] sm:$0xff]
    %v192 = vld [vmem:[#allocation3 + $0x78] sm:$0xff]
    %v193 = vld [vmem:[#allocation4] sm:$0x1]
    %v194 = vld [vmem:[#allocation5] sm:$0xff]
    %v195 = vld [vmem:[#allocation6] sm:$0xff]
    %v196 = vld [vmem:[#allocation8] sm:$0xff]
    %v197 = vld [vmem:[#allocation8 + $0x8] sm:$0xff]
    %v198 = vld [vmem:[#allocation8 + $0x10] sm:$0xff]
    %v199 = vld [vmem:[#allocation8 + $0x18] sm:$0xff]
    %200 = vmatprep.subr.mxu0 %v114
    %201 = vmatpush1.msra.mxu0 %v113
    %202 = vmatprep.subr.mxu0 %v118
    %203 = vmatpush1.msra.mxu0 %v117
    %204 = vmatprep.subr.mxu0 %v122
    %205 = vmatpush1.msra.mxu0 %v121
    %206 = vmatprep.subr.mxu0 %v126
    %207 = vmatpush1.msra.mxu0 %v125
    %208 = vmatprep.subr.mxu0 %v130
    %209 = vmatpush1.msra.mxu0 %v129
    %210 = vmatprep.subr.mxu0 %v134
    %211 = vmatpush1.msra.mxu0 %v133
    %212 = vmatprep.subr.mxu0 %v138
    %213 = vmatpush1.msra.mxu0 %v137
    %214 = vmatprep.subr.mxu0 %v142
    %215 = vmatpush1.msra.mxu0 %v141
    %216 = vmatprep.subr.mxu0 %v146
    %217 = vmatpush1.msra.mxu0 %v145
    %218 = vmatprep.subr.mxu0 %v150
    %219 = vmatpush1.msra.mxu0 %v149
    %220 = vmatprep.subr.mxu0 %v154
    %221 = vmatpush1.msra.mxu0 %v153
    %222 = vmatprep.subr.mxu0 %v158
    %223 = vmatpush1.msra.mxu0 %v157
    %224 = vmatprep.subr.mxu0 %v162
    %225 = vmatpush1.msra.mxu0 %v161
    %226 = vmatprep.subr.mxu0 %v166
    %227 = vmatpush1.msra.mxu0 %v165
    %228 = vmatprep.subr.mxu0 %v170
    %229 = vmatpush1.msra.mxu0 %v169
    %230 = vmatprep.subr.mxu0 %v174
    %231 = vmatpush1.msra.mxu0 %v173
    %232 = vmatprep.subr.mxu0 0.0
    %233 = vmatpush1.msra.mxu0 0.0
    %234 = vmatprep.subr.mxu0 0.0
    %235 = vmatpush1.msra.mxu0 0.0
    %236 = vmatprep.subr.mxu0 0.0
    %237 = vmatpush1.msra.mxu0 0.0
    %238 = vmatprep.subr.mxu0 0.0
    %239 = vmatpush1.msra.mxu0 0.0
    %240 = vmatprep.subr.mxu0 0.0
    %241 = vmatpush1.msra.mxu0 0.0
    %242 = vmatprep.subr.mxu0 0.0
    %243 = vmatpush1.msra.mxu0 0.0
    %244 = vmatprep.subr.mxu0 0.0
    %245 = vmatpush1.msra.mxu0 0.0
    %246 = vmatprep.subr.mxu0 0.0
    %247 = vmatpush1.msra.mxu0 0.0
    %248 = vmatprep.subr.mxu0 0.0
    %249 = vmatpush1.msra.mxu0 0.0
    %250 = vmatprep.subr.mxu0 0.0
    %251 = vmatpush1.msra.mxu0 0.0
    %252 = vmatprep.subr.mxu0 0.0
    %253 = vmatpush1.msra.mxu0 0.0
    %254 = vmatprep.subr.mxu0 0.0
    %255 = vmatpush1.msra.mxu0 0.0
    %256 = vmatprep.subr.mxu0 0.0
    %257 = vmatpush1.msra.mxu0 0.0
    %258 = vmatprep.subr.mxu0 0.0
    %259 = vmatpush1.msra.mxu0 0.0
    %260 = vmatprep.subr.mxu0 0.0
    %261 = vmatpush1.msra.mxu0 0.0
    %262 = vmatprep.subr.mxu0 0.0
    %263 = vmatpush1.msra.mxu0 0.0
    %264 = vmatprep.mubr.f32.mxu0 0.0
    %265 = vmatmul.mubr.f32.gmra.mrb[0].mxu0 %v194
    %v266 = vpop.f32.mrb[0].mxu0
    %v267 = vadd.f32 0.0, %v266
    %v268 = vpop.f32.mrb[0].mxu0
    %v269 = vadd.f32 0.0, %v268
    %270 = vdwg.mxu0
    %271 = vmatprep.subr.mxu0 %v116
    %272 = vmatpush1.msra.mxu0 %v115
    %273 = vmatprep.subr.mxu0 %v120
    %274 = vmatpush1.msra.mxu0 %v119
    %275 = vmatprep.subr.mxu0 %v124
    %276 = vmatpush1.msra.mxu0 %v123
    %277 = vmatprep.subr.mxu0 %v128
    %278 = vmatpush1.msra.mxu0 %v127
    %279 = vmatprep.subr.mxu0 %v132
    %280 = vmatpush1.msra.mxu0 %v131
    %281 = vmatprep.subr.mxu0 %v136
    %282 = vmatpush1.msra.mxu0 %v135
    %283 = vmatprep.subr.mxu0 %v140
    %284 = vmatpush1.msra.mxu0 %v139
    %285 = vmatprep.subr.mxu0 %v144
    %286 = vmatpush1.msra.mxu0 %v143
    %287 = vmatprep.subr.mxu0 %v148
    %288 = vmatpush1.msra.mxu0 %v147
    %289 = vmatprep.subr.mxu0 %v152
    %290 = vmatpush1.msra.mxu0 %v151
    %291 = vmatprep.subr.mxu0 %v156
    %292 = vmatpush1.msra.mxu0 %v155
    %293 = vmatprep.subr.mxu0 %v160
    %294 = vmatpush1.msra.mxu0 %v159
    %295 = vmatprep.subr.mxu0 %v164
    %296 = vmatpush1.msra.mxu0 %v163
    %297 = vmatprep.subr.mxu0 %v168
    %298 = vmatpush1.msra.mxu0 %v167
    %299 = vmatprep.subr.mxu0 %v172
    %300 = vmatpush1.msra.mxu0 %v171
    %301 = vmatprep.subr.mxu0 %v176
    %302 = vmatpush1.msra.mxu0 %v175
    %303 = vmatprep.subr.mxu0 0.0
    %304 = vmatpush1.msra.mxu0 0.0
    %305 = vmatprep.subr.mxu0 0.0
    %306 = vmatpush1.msra.mxu0 0.0
    %307 = vmatprep.subr.mxu0 0.0
    %308 = vmatpush1.msra.mxu0 0.0
    %309 = vmatprep.subr.mxu0 0.0
    %310 = vmatpush1.msra.mxu0 0.0
    %311 = vmatprep.subr.mxu0 0.0
    %312 = vmatpush1.msra.mxu0 0.0
    %313 = vmatprep.subr.mxu0 0.0
    %314 = vmatpush1.msra.mxu0 0.0
    %315 = vmatprep.subr.mxu0 0.0
    %316 = vmatpush1.msra.mxu0 0.0
    %317 = vmatprep.subr.mxu0 0.0
    %318 = vmatpush1.msra.mxu0 0.0
    %319 = vmatprep.subr.mxu0 0.0
    %320 = vmatpush1.msra.mxu0 0.0
    %321 = vmatprep.subr.mxu0 0.0
    %322 = vmatpush1.msra.mxu0 0.0
    %323 = vmatprep.subr.mxu0 0.0
    %324 = vmatpush1.msra.mxu0 0.0
    %325 = vmatprep.subr.mxu0 0.0
    %326 = vmatpush1.msra.mxu0 0.0
    %327 = vmatprep.subr.mxu0 0.0
    %328 = vmatpush1.msra.mxu0 0.0
    %329 = vmatprep.subr.mxu0 0.0
    %330 = vmatpush1.msra.mxu0 0.0
    %331 = vmatprep.subr.mxu0 0.0
    %332 = vmatpush1.msra.mxu0 0.0
    %333 = vmatprep.subr.mxu0 0.0
    %334 = vmatpush1.msra.mxu0 0.0
    %335 = vmatprep.mubr.f32.mxu0 0.0
    %336 = vmatmul.mubr.f32.gmra.mrb[0].mxu0 %v194
    %v337 = vpop.f32.mrb[0].mxu0
    %v338 = vadd.f32 0.0, %v337
    %v339 = vpop.f32.mrb[0].mxu0
    %v340 = vadd.f32 0.0, %v339
    %341 = vdwg.mxu0
    %v342 = vadd.f32 %v196, %v267
    %v343 = vadd.f32 %v197, %v269
    %v344 = vadd.f32 %v198, %v338
    %v345 = vadd.f32 %v199, %v340
    %v346 = vxor.u32 %v342, 2147483648
    %v347 = vmul.f32 %v346, 1.442695
    %v348 = vpow.pop %v347
    %v349 = vadd.f32 %v348, 1.0
    %v350 = vrcp.pop %v349
    %v351 = vmul.f32 1.0, %v350
    %v352 = vxor.u32 %v343, 2147483648
    %v353 = vmul.f32 %v352, 1.442695
    %v354 = vpow.pop %v353
    %v355 = vadd.f32 %v354, 1.0
    %v356 = vrcp.pop %v355
    %v357 = vmul.f32 1.0, %v356
    %v358 = vtanh.pop %v344
    %v359 = vxor.u32 %v345, 2147483648
    %v360 = vmul.f32 %v359, 1.442695
    %v361 = vpow.pop %v360
    %v362 = vadd.f32 %v361, 1.0
    %v363 = vrcp.pop %v362
    %v364 = vmul.f32 1.0, %v363
    %v366 = vlaneseq
    %v367 = vshrl.u32 %v366, 7
    %v368 = vsub.s32 0, %v367
    %v369 = vrot.slane %v193, %v368
    %371 = vmatprep.subr.mxu0 0.0
    %372 = vmatpush1.msra.mxu0 %v177
    %373 = vmatprep.subr.mxu0 0.0
    %374 = vmatpush1.msra.mxu0 %v178
    %375 = vmatprep.subr.mxu0 0.0
    %376 = vmatpush1.msra.mxu0 %v179
    %377 = vmatprep.subr.mxu0 0.0
    %378 = vmatpush1.msra.mxu0 %v180
    %379 = vmatprep.subr.mxu0 0.0
    %380 = vmatpush1.msra.mxu0 %v181
    %381 = vmatprep.subr.mxu0 0.0
    %382 = vmatpush1.msra.mxu0 %v182
    %383 = vmatprep.subr.mxu0 0.0
    %384 = vmatpush1.msra.mxu0 %v183
    %385 = vmatprep.subr.mxu0 0.0
    %386 = vmatpush1.msra.mxu0 %v184
    %387 = vmatprep.subr.mxu0 0.0
    %388 = vmatpush1.msra.mxu0 %v185
    %389 = vmatprep.subr.mxu0 0.0
    %390 = vmatpush1.msra.mxu0 %v186
    %391 = vmatprep.subr.mxu0 0.0
    %392 = vmatpush1.msra.mxu0 %v187
    %393 = vmatprep.subr.mxu0 0.0
    %394 = vmatpush1.msra.mxu0 %v188
    %395 = vmatprep.subr.mxu0 0.0
    %396 = vmatpush1.msra.mxu0 %v189
    %397 = vmatprep.subr.mxu0 0.0
    %398 = vmatpush1.msra.mxu0 %v190
    %399 = vmatprep.subr.mxu0 0.0
    %400 = vmatpush1.msra.mxu0 %v191
    %401 = vmatprep.subr.mxu0 0.0
    %402 = vmatpush1.msra.mxu0 %v192
    %403 = vmatprep.subr.mxu0 0.0
    %404 = vmatpush1.msra.mxu0 0.0
    %405 = vmatprep.subr.mxu0 0.0
    %406 = vmatpush1.msra.mxu0 0.0
    %407 = vmatprep.subr.mxu0 0.0
    %408 = vmatpush1.msra.mxu0 0.0
    %409 = vmatprep.subr.mxu0 0.0
    %410 = vmatpush1.msra.mxu0 0.0
    %411 = vmatprep.subr.mxu0 0.0
    %412 = vmatpush1.msra.mxu0 0.0
    %413 = vmatprep.subr.mxu0 0.0
    %414 = vmatpush1.msra.mxu0 0.0
    %415 = vmatprep.subr.mxu0 0.0
    %416 = vmatpush1.msra.mxu0 0.0
    %417 = vmatprep.subr.mxu0 0.0
    %418 = vmatpush1.msra.mxu0 0.0
    %419 = vmatprep.subr.mxu0 0.0
    %420 = vmatpush1.msra.mxu0 0.0
    %421 = vmatprep.subr.mxu0 0.0
    %422 = vmatpush1.msra.mxu0 0.0
    %423 = vmatprep.subr.mxu0 0.0
    %424 = vmatpush1.msra.mxu0 0.0
    %425 = vmatprep.subr.mxu0 0.0
    %426 = vmatpush1.msra.mxu0 0.0
    %427 = vmatprep.subr.mxu0 0.0
    %428 = vmatpush1.msra.mxu0 0.0
    %429 = vmatprep.subr.mxu0 0.0
    %430 = vmatpush1.msra.mxu0 0.0
    %431 = vmatprep.subr.mxu0 0.0
    %432 = vmatpush1.msra.mxu0 0.0
    %433 = vmatprep.subr.mxu0 0.0
    %434 = vmatpush1.msra.mxu0 0.0
    %435 = vmatprep.mubr.f32.mxu0 0.0
    %436 = vmatmul.mubr.f32.gmra.mrb[0].mxu0 %v195
    %v437 = vpop.f32.mrb[0].mxu0
    %v438 = vadd.f32 %v369, %v437
    %v439 = vpop.f32.mrb[0].mxu0
    %440 = vdwg.mxu0
    %v441 = vsub.f32 %v195, %v438
    %v442 = vld [vmem:[%s1] sm:$0xff]
    %444 = vset.pattern.permute.xlu0 0
    %445 = vperm.xlu0 %444, %v442
    %v446 = vpop.permute.xlu0 %445
    %v448 = vmul.f32 %v438, %v446
    %v449 = vadd.f32 %v441, %v448
    %v450 = vmul.f32 %v357, %v449
    %v451 = vmul.f32 %v351, %v358
    %v452 = vadd.f32 %v450, %v451
    %v453 = vtanh.pop %v452
    %v454 = vmul.f32 %v364, %v453
    %455 = vst [vmem:[#allocation11] sm:$0xff] %v454
    %s456 = scalar_lea.vmem [#allocation8], 32
    %v457 = vld [vmem:[%s456] sm:$0xff]
    %v458 = vld [vmem:[%s456 + $0x8] sm:$0xff]
    %v459 = vld [vmem:[%s456 + $0x10] sm:$0xff]
    %v460 = vld [vmem:[%s456 + $0x18] sm:$0xff]
    %461 = vmatprep.subr.mxu0 %v114
    %462 = vmatpush1.msra.mxu0 %v113
    %463 = vmatprep.subr.mxu0 %v118
    %464 = vmatpush1.msra.mxu0 %v117
    %465 = vmatprep.subr.mxu0 %v122
    %466 = vmatpush1.msra.mxu0 %v121
    %467 = vmatprep.subr.mxu0 %v126
    %468 = vmatpush1.msra.mxu0 %v125
    %469 = vmatprep.subr.mxu0 %v130
    %470 = vmatpush1.msra.mxu0 %v129
    %471 = vmatprep.subr.mxu0 %v134
    %472 = vmatpush1.msra.mxu0 %v133
    %473 = vmatprep.subr.mxu0 %v138
    %474 = vmatpush1.msra.mxu0 %v137
    %475 = vmatprep.subr.mxu0 %v142
    %476 = vmatpush1.msra.mxu0 %v141
    %477 = vmatprep.subr.mxu0 %v146
    %478 = vmatpush1.msra.mxu0 %v145
    %479 = vmatprep.subr.mxu0 %v150
    %480 = vmatpush1.msra.mxu0 %v149
    %481 = vmatprep.subr.mxu0 %v154
    %482 = vmatpush1.msra.mxu0 %v153
    %483 = vmatprep.subr.mxu0 %v158
    %484 = vmatpush1.msra.mxu0 %v157
    %485 = vmatprep.subr.mxu0 %v162
    %486 = vmatpush1.msra.mxu0 %v161
    %487 = vmatprep.subr.mxu0 %v166
    %488 = vmatpush1.msra.mxu0 %v165
    %489 = vmatprep.subr.mxu0 %v170
    %490 = vmatpush1.msra.mxu0 %v169
    %491 = vmatprep.subr.mxu0 %v174
    %492 = vmatpush1.msra.mxu0 %v173
    %493 = vmatprep.subr.mxu0 0.0
    %494 = vmatpush1.msra.mxu0 0.0
    %495 = vmatprep.subr.mxu0 0.0
    %496 = vmatpush1.msra.mxu0 0.0
    %497 = vmatprep.subr.mxu0 0.0
    %498 = vmatpush1.msra.mxu0 0.0
    %499 = vmatprep.subr.mxu0 0.0
    %500 = vmatpush1.msra.mxu0 0.0
    %501 = vmatprep.subr.mxu0 0.0
    %502 = vmatpush1.msra.mxu0 0.0
    %503 = vmatprep.subr.mxu0 0.0
    %504 = vmatpush1.msra.mxu0 0.0
    %505 = vmatprep.subr.mxu0 0.0
    %506 = vmatpush1.msra.mxu0 0.0
    %507 = vmatprep.subr.mxu0 0.0
    %508 = vmatpush1.msra.mxu0 0.0
    %509 = vmatprep.subr.mxu0 0.0
    %510 = vmatpush1.msra.mxu0 0.0
    %511 = vmatprep.subr.mxu0 0.0
    %512 = vmatpush1.msra.mxu0 0.0
    %513 = vmatprep.subr.mxu0 0.0
    %514 = vmatpush1.msra.mxu0 0.0
    %515 = vmatprep.subr.mxu0 0.0
    %516 = vmatpush1.msra.mxu0 0.0
    %517 = vmatprep.subr.mxu0 0.0
    %518 = vmatpush1.msra.mxu0 0.0
    %519 = vmatprep.subr.mxu0 0.0
    %520 = vmatpush1.msra.mxu0 0.0
    %521 = vmatprep.subr.mxu0 0.0
    %522 = vmatpush1.msra.mxu0 0.0
    %523 = vmatprep.subr.mxu0 0.0
    %524 = vmatpush1.msra.mxu0 0.0
    %525 = vmatprep.mubr.f32.mxu0 0.0
    %526 = vmatmul.mubr.f32.gmra.mrb[0].mxu0 %v454
    %v527 = vpop.f32.mrb[0].mxu0
    %v528 = vadd.f32 0.0, %v527
    %v529 = vpop.f32.mrb[0].mxu0
    %v530 = vadd.f32 0.0, %v529
    %531 = vdwg.mxu0
    %532 = vmatprep.subr.mxu0 %v116
    %533 = vmatpush1.msra.mxu0 %v115
    %534 = vmatprep.subr.mxu0 %v120
    %535 = vmatpush1.msra.mxu0 %v119
    %536 = vmatprep.subr.mxu0 %v124
    %537 = vmatpush1.msra.mxu0 %v123
    %538 = vmatprep.subr.mxu0 %v128
    %539 = vmatpush1.msra.mxu0 %v127
    %540 = vmatprep.subr.mxu0 %v132
    %541 = vmatpush1.msra.mxu0 %v131
    %542 = vmatprep.subr.mxu0 %v136
    %543 = vmatpush1.msra.mxu0 %v135
    %544 = vmatprep.subr.mxu0 %v140
    %545 = vmatpush1.msra.mxu0 %v139
    %546 = vmatprep.subr.mxu0 %v144
    %547 = vmatpush1.msra.mxu0 %v143
    %548 = vmatprep.subr.mxu0 %v148
    %549 = vmatpush1.msra.mxu0 %v147
    %550 = vmatprep.subr.mxu0 %v152
    %551 = vmatpush1.msra.mxu0 %v151
    %552 = vmatprep.subr.mxu0 %v156
    %553 = vmatpush1.msra.mxu0 %v155
    %554 = vmatprep.subr.mxu0 %v160
    %555 = vmatpush1.msra.mxu0 %v159
    %556 = vmatprep.subr.mxu0 %v164
    %557 = vmatpush1.msra.mxu0 %v163
    %558 = vmatprep.subr.mxu0 %v168
    %559 = vmatpush1.msra.mxu0 %v167
    %560 = vmatprep.subr.mxu0 %v172
    %561 = vmatpush1.msra.mxu0 %v171
    %562 = vmatprep.subr.mxu0 %v176
    %563 = vmatpush1.msra.mxu0 %v175
    %564 = vmatprep.subr.mxu0 0.0
    %565 = vmatpush1.msra.mxu0 0.0
    %566 = vmatprep.subr.mxu0 0.0
    %567 = vmatpush1.msra.mxu0 0.0
    %568 = vmatprep.subr.mxu0 0.0
    %569 = vmatpush1.msra.mxu0 0.0
    %570 = vmatprep.subr.mxu0 0.0
    %571 = vmatpush1.msra.mxu0 0.0
    %572 = vmatprep.subr.mxu0 0.0
    %573 = vmatpush1.msra.mxu0 0.0
    %574 = vmatprep.subr.mxu0 0.0
    %575 = vmatpush1.msra.mxu0 0.0
    %576 = vmatprep.subr.mxu0 0.0
    %577 = vmatpush1.msra.mxu0 0.0
    %578 = vmatprep.subr.mxu0 0.0
    %579 = vmatpush1.msra.mxu0 0.0
    %580 = vmatprep.subr.mxu0 0.0
    %581 = vmatpush1.msra.mxu0 0.0
    %582 = vmatprep.subr.mxu0 0.0
    %583 = vmatpush1.msra.mxu0 0.0
    %584 = vmatprep.subr.mxu0 0.0
    %585 = vmatpush1.msra.mxu0 0.0
    %586 = vmatprep.subr.mxu0 0.0
    %587 = vmatpush1.msra.mxu0 0.0
    %588 = vmatprep.subr.mxu0 0.0
    %589 = vmatpush1.msra.mxu0 0.0
    %590 = vmatprep.subr.mxu0 0.0
    %591 = vmatpush1.msra.mxu0 0.0
    %592 = vmatprep.subr.mxu0 0.0
    %593 = vmatpush1.msra.mxu0 0.0
    %594 = vmatprep.subr.mxu0 0.0
    %595 = vmatpush1.msra.mxu0 0.0
    %596 = vmatprep.mubr.f32.mxu0 0.0
    %597 = vmatmul.mubr.f32.gmra.mrb[0].mxu0 %v454
    %v598 = vpop.f32.mrb[0].mxu0
    %v599 = vadd.f32 0.0, %v598
    %v600 = vpop.f32.mrb[0].mxu0
    %v601 = vadd.f32 0.0, %v600
    %602 = vdwg.mxu0
    %v603 = vadd.f32 %v457, %v528
    %v604 = vadd.f32 %v458, %v530
    %v605 = vadd.f32 %v459, %v599
    %v606 = vadd.f32 %v460, %v601
    %v607 = vxor.u32 %v603, 2147483648
    %v608 = vmul.f32 %v607, 1.442695
    %v609 = vpow.pop %v608
    %v610 = vadd.f32 %v609, 1.0
    %v611 = vrcp.pop %v610
    %v612 = vmul.f32 1.0, %v611
    %v613 = vxor.u32 %v604, 2147483648
    %v614 = vmul.f32 %v613, 1.442695
    %v615 = vpow.pop %v614
    %v616 = vadd.f32 %v615, 1.0
    %v617 = vrcp.pop %v616
    %v618 = vmul.f32 1.0, %v617
    %v619 = vtanh.pop %v605
    %v620 = vxor.u32 %v606, 2147483648
    %v621 = vmul.f32 %v620, 1.442695
    %v622 = vpow.pop %v621
    %v623 = vadd.f32 %v622, 1.0
    %v624 = vrcp.pop %v623
    %v625 = vmul.f32 1.0, %v624
    %626 = vmatprep.subr.mxu0 0.0
    %627 = vmatpush1.msra.mxu0 %v177
    %628 = vmatprep.subr.mxu0 0.0
    %629 = vmatpush1.msra.mxu0 %v178
    %630 = vmatprep.subr.mxu0 0.0
    %631 = vmatpush1.msra.mxu0 %v179
    %632 = vmatprep.subr.mxu0 0.0
    %633 = vmatpush1.msra.mxu0 %v180
    %634 = vmatprep.subr.mxu0 0.0
    %635 = vmatpush1.msra.mxu0 %v181
    %636 = vmatprep.subr.mxu0 0.0
    %637 = vmatpush1.msra.mxu0 %v182
    %638 = vmatprep.subr.mxu0 0.0
    %639 = vmatpush1.msra.mxu0 %v183
    %640 = vmatprep.subr.mxu0 0.0
    %641 = vmatpush1.msra.mxu0 %v184
    %642 = vmatprep.subr.mxu0 0.0
    %643 = vmatpush1.msra.mxu0 %v185
    %644 = vmatprep.subr.mxu0 0.0
    %645 = vmatpush1.msra.mxu0 %v186
    %646 = vmatprep.subr.mxu0 0.0
    %647 = vmatpush1.msra.mxu0 %v187
    %648 = vmatprep.subr.mxu0 0.0
    %649 = vmatpush1.msra.mxu0 %v188
    %650 = vmatprep.subr.mxu0 0.0
    %651 = vmatpush1.msra.mxu0 %v189
    %652 = vmatprep.subr.mxu0 0.0
    %653 = vmatpush1.msra.mxu0 %v190
    %654 = vmatprep.subr.mxu0 0.0
    %655 = vmatpush1.msra.mxu0 %v191
    %656 = vmatprep.subr.mxu0 0.0
    %657 = vmatpush1.msra.mxu0 %v192
    %658 = vmatprep.subr.mxu0 0.0
    %659 = vmatpush1.msra.mxu0 0.0
    %660 = vmatprep.subr.mxu0 0.0
    %661 = vmatpush1.msra.mxu0 0.0
    %662 = vmatprep.subr.mxu0 0.0
    %663 = vmatpush1.msra.mxu0 0.0
    %664 = vmatprep.subr.mxu0 0.0
    %665 = vmatpush1.msra.mxu0 0.0
    %666 = vmatprep.subr.mxu0 0.0
    %667 = vmatpush1.msra.mxu0 0.0
    %668 = vmatprep.subr.mxu0 0.0
    %669 = vmatpush1.msra.mxu0 0.0
    %670 = vmatprep.subr.mxu0 0.0
    %671 = vmatpush1.msra.mxu0 0.0
    %672 = vmatprep.subr.mxu0 0.0
    %673 = vmatpush1.msra.mxu0 0.0
    %674 = vmatprep.subr.mxu0 0.0
    %675 = vmatpush1.msra.mxu0 0.0
    %676 = vmatprep.subr.mxu0 0.0
    %677 = vmatpush1.msra.mxu0 0.0
    %678 = vmatprep.subr.mxu0 0.0
    %679 = vmatpush1.msra.mxu0 0.0
    %680 = vmatprep.subr.mxu0 0.0
    %681 = vmatpush1.msra.mxu0 0.0
    %682 = vmatprep.subr.mxu0 0.0
    %683 = vmatpush1.msra.mxu0 0.0
    %684 = vmatprep.subr.mxu0 0.0
    %685 = vmatpush1.msra.mxu0 0.0
    %686 = vmatprep.subr.mxu0 0.0
    %687 = vmatpush1.msra.mxu0 0.0
    %688 = vmatprep.subr.mxu0 0.0
    %689 = vmatpush1.msra.mxu0 0.0
    %690 = vmatprep.mubr.f32.mxu0 0.0
    %691 = vmatmul.mubr.f32.gmra.mrb[0].mxu0 %v452
    %v692 = vpop.f32.mrb[0].mxu0
    %v693 = vadd.f32 %v369, %v692
    %v694 = vpop.f32.mrb[0].mxu0
    %695 = vdwg.mxu0
    %v696 = vsub.f32 %v452, %v693
    %s697 = scalar_lea.vmem %s1, 8
    %v698 = vld [vmem:[%s697] sm:$0xff]
    %700 = vset.pattern.permute.xlu0 0
    %701 = vperm.xlu0 %700, %v698
    %v702 = vpop.permute.xlu0 %701
    %v704 = vmul.f32 %v693, %v702
    %v705 = vadd.f32 %v696, %v704
    %v706 = vmul.f32 %v618, %v705
    %v707 = vmul.f32 %v612, %v619
    %v708 = vadd.f32 %v706, %v707
    %v709 = vtanh.pop %v708
    %v710 = vmul.f32 %v625, %v709
    %s711 = scalar_lea.vmem [#allocation11], 8
    %712 = vst [vmem:[%s711] sm:$0xff] %v710
    %s713 = scalar_lea.vmem [#allocation8], 64
    %v714 = vld [vmem:[%s713] sm:$0xff]
    %v715 = vld [vmem:[%s713 + $0x8] sm:$0xff]
    %v716 = vld [vmem:[%s713 + $0x10] sm:$0xff]
    %v717 = vld [vmem:[%s713 + $0x18] sm:$0xff]
    %718 = vmatprep.subr.mxu0 %v114
    %719 = vmatpush1.msra.mxu0 %v113
    %720 = vmatprep.subr.mxu0 %v118
    %721 = vmatpush1.msra.mxu0 %v117
    %722 = vmatprep.subr.mxu0 %v122
    %723 = vmatpush1.msra.mxu0 %v121
    %724 = vmatprep.subr.mxu0 %v126
    %725 = vmatpush1.msra.mxu0 %v125
    %726 = vmatprep.subr.mxu0 %v130
    %727 = vmatpush1.msra.mxu0 %v129
    %728 = vmatprep.subr.mxu0 %v134
    %729 = vmatpush1.msra.mxu0 %v133
    %730 = vmatprep.subr.mxu0 %v138
    %731 = vmatpush1.msra.mxu0 %v137
    %732 = vmatprep.subr.mxu0 %v142
    %733 = vmatpush1.msra.mxu0 %v141
    %734 = vmatprep.subr.mxu0 %v146
    %735 = vmatpush1.msra.mxu0 %v145
    %736 = vmatprep.subr.mxu0 %v150
    %737 = vmatpush1.msra.mxu0 %v149
    %738 = vmatprep.subr.mxu0 %v154
    %739 = vmatpush1.msra.mxu0 %v153
    %740 = vmatprep.subr.mxu0 %v158
    %741 = vmatpush1.msra.mxu0 %v157
    %742 = vmatprep.subr.mxu0 %v162
    %743 = vmatpush1.msra.mxu0 %v161
    %744 = vmatprep.subr.mxu0 %v166
    %745 = vmatpush1.msra.mxu0 %v165
    %746 = vmatprep.subr.mxu0 %v170
    %747 = vmatpush1.msra.mxu0 %v169
    %748 = vmatprep.subr.mxu0 %v174
    %749 = vmatpush1.msra.mxu0 %v173
    %750 = vmatprep.subr.mxu0 0.0
    %751 = vmatpush1.msra.mxu0 0.0
    %752 = vmatprep.subr.mxu0 0.0
    %753 = vmatpush1.msra.mxu0 0.0
    %754 = vmatprep.subr.mxu0 0.0
    %755 = vmatpush1.msra.mxu0 0.0
    %756 = vmatprep.subr.mxu0 0.0
    %757 = vmatpush1.msra.mxu0 0.0
    %758 = vmatprep.subr.mxu0 0.0
    %759 = vmatpush1.msra.mxu0 0.0
    %760 = vmatprep.subr.mxu0 0.0
    %761 = vmatpush1.msra.mxu0 0.0
    %762 = vmatprep.subr.mxu0 0.0
    %763 = vmatpush1.msra.mxu0 0.0
    %764 = vmatprep.subr.mxu0 0.0
    %765 = vmatpush1.msra.mxu0 0.0
    %766 = vmatprep.subr.mxu0 0.0
    %767 = vmatpush1.msra.mxu0 0.0
    %768 = vmatprep.subr.mxu0 0.0
    %769 = vmatpush1.msra.mxu0 0.0
    %770 = vmatprep.subr.mxu0 0.0
    %771 = vmatpush1.msra.mxu0 0.0
    %772 = vmatprep.subr.mxu0 0.0
    %773 = vmatpush1.msra.mxu0 0.0
    %774 = vmatprep.subr.mxu0 0.0
    %775 = vmatpush1.msra.mxu0 0.0
    %776 = vmatprep.subr.mxu0 0.0
    %777 = vmatpush1.msra.mxu0 0.0
    %778 = vmatprep.subr.mxu0 0.0
    %779 = vmatpush1.msra.mxu0 0.0
    %780 = vmatprep.subr.mxu0 0.0
    %781 = vmatpush1.msra.mxu0 0.0
    %782 = vmatprep.mubr.f32.mxu0 0.0
    %783 = vmatmul.mubr.f32.gmra.mrb[0].mxu0 %v710
    %v784 = vpop.f32.mrb[0].mxu0
    %v785 = vadd.f32 0.0, %v784
    %v786 = vpop.f32.mrb[0].mxu0
    %v787 = vadd.f32 0.0, %v786
    %788 = vdwg.mxu0
    %789 = vmatprep.subr.mxu0 %v116
    %790 = vmatpush1.msra.mxu0 %v115
    %791 = vmatprep.subr.mxu0 %v120
    %792 = vmatpush1.msra.mxu0 %v119
    %793 = vmatprep.subr.mxu0 %v124
    %794 = vmatpush1.msra.mxu0 %v123
    %795 = vmatprep.subr.mxu0 %v128
    %796 = vmatpush1.msra.mxu0 %v127
    %797 = vmatprep.subr.mxu0 %v132
    %798 = vmatpush1.msra.mxu0 %v131
    %799 = vmatprep.subr.mxu0 %v136
    %800 = vmatpush1.msra.mxu0 %v135
    %801 = vmatprep.subr.mxu0 %v140
    %802 = vmatpush1.msra.mxu0 %v139
    %803 = vmatprep.subr.mxu0 %v144
    %804 = vmatpush1.msra.mxu0 %v143
    %805 = vmatprep.subr.mxu0 %v148
    %806 = vmatpush1.msra.mxu0 %v147
    %807 = vmatprep.subr.mxu0 %v152
    %808 = vmatpush1.msra.mxu0 %v151
    %809 = vmatprep.subr.mxu0 %v156
    %810 = vmatpush1.msra.mxu0 %v155
    %811 = vmatprep.subr.mxu0 %v160
    %812 = vmatpush1.msra.mxu0 %v159
    %813 = vmatprep.subr.mxu0 %v164
    %814 = vmatpush1.msra.mxu0 %v163
    %815 = vmatprep.subr.mxu0 %v168
    %816 = vmatpush1.msra.mxu0 %v167
    %817 = vmatprep.subr.mxu0 %v172
    %818 = vmatpush1.msra.mxu0 %v171
    %819 = vmatprep.subr.mxu0 %v176
    %820 = vmatpush1.msra.mxu0 %v175
    %821 = vmatprep.subr.mxu0 0.0
    %822 = vmatpush1.msra.mxu0 0.0
    %823 = vmatprep.subr.mxu0 0.0
    %824 = vmatpush1.msra.mxu0 0.0
    %825 = vmatprep.subr.mxu0 0.0
    %826 = vmatpush1.msra.mxu0 0.0
    %827 = vmatprep.subr.mxu0 0.0
    %828 = vmatpush1.msra.mxu0 0.0
    %829 = vmatprep.subr.mxu0 0.0
    %830 = vmatpush1.msra.mxu0 0.0
    %831 = vmatprep.subr.mxu0 0.0
    %832 = vmatpush1.msra.mxu0 0.0
    %833 = vmatprep.subr.mxu0 0.0
    %834 = vmatpush1.msra.mxu0 0.0
    %835 = vmatprep.subr.mxu0 0.0
    %836 = vmatpush1.msra.mxu0 0.0
    %837 = vmatprep.subr.mxu0 0.0
    %838 = vmatpush1.msra.mxu0 0.0
    %839 = vmatprep.subr.mxu0 0.0
    %840 = vmatpush1.msra.mxu0 0.0
    %841 = vmatprep.subr.mxu0 0.0
    %842 = vmatpush1.msra.mxu0 0.0
    %843 = vmatprep.subr.mxu0 0.0
    %844 = vmatpush1.msra.mxu0 0.0
    %845 = vmatprep.subr.mxu0 0.0
    %846 = vmatpush1.msra.mxu0 0.0
    %847 = vmatprep.subr.mxu0 0.0
    %848 = vmatpush1.msra.mxu0 0.0
    %849 = vmatprep.subr.mxu0 0.0
    %850 = vmatpush1.msra.mxu0 0.0
    %851 = vmatprep.subr.mxu0 0.0
    %852 = vmatpush1.msra.mxu0 0.0
    %853 = vmatprep.mubr.f32.mxu0 0.0
    %854 = vmatmul.mubr.f32.gmra.mrb[0].mxu0 %v710
    %v855 = vpop.f32.mrb[0].mxu0
    %v856 = vadd.f32 0.0, %v855
    %v857 = vpop.f32.mrb[0].mxu0
    %v858 = vadd.f32 0.0, %v857
    %859 = vdwg.mxu0
    %v860 = vadd.f32 %v714, %v785
    %v861 = vadd.f32 %v715, %v787
    %v862 = vadd.f32 %v716, %v856
    %v863 = vadd.f32 %v717, %v858
    %v864 = vxor.u32 %v860, 2147483648
    %v865 = vmul.f32 %v864, 1.442695
    %v866 = vpow.pop %v865
    %v867 = vadd.f32 %v866, 1.0
    %v868 = vrcp.pop %v867
    %v869 = vmul.f32 1.0, %v868
    %v870 = vxor.u32 %v861, 2147483648
    %v871 = vmul.f32 %v870, 1.442695
    %v872 = vpow.pop %v871
    %v873 = vadd.f32 %v872, 1.0
    %v874 = vrcp.pop %v873
    %v875 = vmul.f32 1.0, %v874
    %v876 = vtanh.pop %v862
    %v877 = vxor.u32 %v863, 2147483648
    %v878 = vmul.f32 %v877, 1.442695
    %v879 = vpow.pop %v878
    %v880 = vadd.f32 %v879, 1.0
    %v881 = vrcp.pop %v880
    %v882 = vmul.f32 1.0, %v881
    %883 = vmatprep.subr.mxu0 0.0
    %884 = vmatpush1.msra.mxu0 %v177
    %885 = vmatprep.subr.mxu0 0.0
    %886 = vmatpush1.msra.mxu0 %v178
    %887 = vmatprep.subr.mxu0 0.0
    %888 = vmatpush1.msra.mxu0 %v179
    %889 = vmatprep.subr.mxu0 0.0
    %890 = vmatpush1.msra.mxu0 %v180
    %891 = vmatprep.subr.mxu0 0.0
    %892 = vmatpush1.msra.mxu0 %v181
    %893 = vmatprep.subr.mxu0 0.0
    %894 = vmatpush1.msra.mxu0 %v182
    %895 = vmatprep.subr.mxu0 0.0
    %896 = vmatpush1.msra.mxu0 %v183
    %897 = vmatprep.subr.mxu0 0.0
    %898 = vmatpush1.msra.mxu0 %v184
    %899 = vmatprep.subr.mxu0 0.0
    %900 = vmatpush1.msra.mxu0 %v185
    %901 = vmatprep.subr.mxu0 0.0
    %902 = vmatpush1.msra.mxu0 %v186
    %903 = vmatprep.subr.mxu0 0.0
    %904 = vmatpush1.msra.mxu0 %v187
    %905 = vmatprep.subr.mxu0 0.0
    %906 = vmatpush1.msra.mxu0 %v188
    %907 = vmatprep.subr.mxu0 0.0
    %908 = vmatpush1.msra.mxu0 %v189
    %909 = vmatprep.subr.mxu0 0.0
    %910 = vmatpush1.msra.mxu0 %v190
    %911 = vmatprep.subr.mxu0 0.0
    %912 = vmatpush1.msra.mxu0 %v191
    %913 = vmatprep.subr.mxu0 0.0
    %914 = vmatpush1.msra.mxu0 %v192
    %915 = vmatprep.subr.mxu0 0.0
    %916 = vmatpush1.msra.mxu0 0.0
    %917 = vmatprep.subr.mxu0 0.0
    %918 = vmatpush1.msra.mxu0 0.0
    %919 = vmatprep.subr.mxu0 0.0
    %920 = vmatpush1.msra.mxu0 0.0
    %921 = vmatprep.subr.mxu0 0.0
    %922 = vmatpush1.msra.mxu0 0.0
    %923 = vmatprep.subr.mxu0 0.0
    %924 = vmatpush1.msra.mxu0 0.0
    %925 = vmatprep.subr.mxu0 0.0
    %926 = vmatpush1.msra.mxu0 0.0
    %927 = vmatprep.subr.mxu0 0.0
    %928 = vmatpush1.msra.mxu0 0.0
    %929 = vmatprep.subr.mxu0 0.0
    %930 = vmatpush1.msra.mxu0 0.0
    %931 = vmatprep.subr.mxu0 0.0
    %932 = vmatpush1.msra.mxu0 0.0
    %933 = vmatprep.subr.mxu0 0.0
    %934 = vmatpush1.msra.mxu0 0.0
    %935 = vmatprep.subr.mxu0 0.0
    %936 = vmatpush1.msra.mxu0 0.0
    %937 = vmatprep.subr.mxu0 0.0
    %938 = vmatpush1.msra.mxu0 0.0
    %939 = vmatprep.subr.mxu0 0.0
    %940 = vmatpush1.msra.mxu0 0.0
    %941 = vmatprep.subr.mxu0 0.0
    %942 = vmatpush1.msra.mxu0 0.0
    %943 = vmatprep.subr.mxu0 0.0
    %944 = vmatpush1.msra.mxu0 0.0
    %945 = vmatprep.subr.mxu0 0.0
    %946 = vmatpush1.msra.mxu0 0.0
    %947 = vmatprep.mubr.f32.mxu0 0.0
    %948 = vmatmul.mubr.f32.gmra.mrb[0].mxu0 %v708
    %v949 = vpop.f32.mrb[0].mxu0
    %v950 = vadd.f32 %v369, %v949
    %v951 = vpop.f32.mrb[0].mxu0
    %952 = vdwg.mxu0
    %v953 = vsub.f32 %v708, %v950
    %s954 = scalar_lea.vmem %s1, 16
    %v955 = vld [vmem:[%s954] sm:$0xff]
    %957 = vset.pattern.permute.xlu0 0
    %958 = vperm.xlu0 %957, %v955
    %v959 = vpop.permute.xlu0 %958
    %v961 = vmul.f32 %v950, %v959
    %v962 = vadd.f32 %v953, %v961
    %v963 = vmul.f32 %v875, %v962
    %v964 = vmul.f32 %v869, %v876
    %v965 = vadd.f32 %v963, %v964
    %v966 = vtanh.pop %v965
    %v967 = vmul.f32 %v882, %v966
    %s968 = scalar_lea.vmem [#allocation11], 16
    %969 = vst [vmem:[%s968] sm:$0xff] %v967
    %s970 = scalar_lea.vmem [#allocation8], 96
    %v971 = vld [vmem:[%s970] sm:$0xff]
    %v972 = vld [vmem:[%s970 + $0x8] sm:$0xff]
    %v973 = vld [vmem:[%s970 + $0x10] sm:$0xff]
    %v974 = vld [vmem:[%s970 + $0x18] sm:$0xff]
    %975 = vmatprep.subr.mxu0 %v114
    %976 = vmatpush1.msra.mxu0 %v113
    %977 = vmatprep.subr.mxu0 %v118
    %978 = vmatpush1.msra.mxu0 %v117
    %979 = vmatprep.subr.mxu0 %v122
    %980 = vmatpush1.msra.mxu0 %v121
    %981 = vmatprep.subr.mxu0 %v126
    %982 = vmatpush1.msra.mxu0 %v125
    %983 = vmatprep.subr.mxu0 %v130
    %984 = vmatpush1.msra.mxu0 %v129
    %985 = vmatprep.subr.mxu0 %v134
    %986 = vmatpush1.msra.mxu0 %v133
    %987 = vmatprep.subr.mxu0 %v138
    %988 = vmatpush1.msra.mxu0 %v137
    %989 = vmatprep.subr.mxu0 %v142
    %990 = vmatpush1.msra.mxu0 %v141
    %991 = vmatprep.subr.mxu0 %v146
    %992 = vmatpush1.msra.mxu0 %v145
    %993 = vmatprep.subr.mxu0 %v150
    %994 = vmatpush1.msra.mxu0 %v149
    %995 = vmatprep.subr.mxu0 %v154
    %996 = vmatpush1.msra.mxu0 %v153
    %997 = vmatprep.subr.mxu0 %v158
    %998 = vmatpush1.msra.mxu0 %v157
    %999 = vmatprep.subr.mxu0 %v162
    %1000 = vmatpush1.msra.mxu0 %v161
    %1001 = vmatprep.subr.mxu0 %v166
    %1002 = vmatpush1.msra.mxu0 %v165
    %1003 = vmatprep.subr.mxu0 %v170
    %1004 = vmatpush1.msra.mxu0 %v169
    %1005 = vmatprep.subr.mxu0 %v174
    %1006 = vmatpush1.msra.mxu0 %v173
    %1007 = vmatprep.subr.mxu0 0.0
    %1008 = vmatpush1.msra.mxu0 0.0
    %1009 = vmatprep.subr.mxu0 0.0
    %1010 = vmatpush1.msra.mxu0 0.0
    %1011 = vmatprep.subr.mxu0 0.0
    %1012 = vmatpush1.msra.mxu0 0.0
    %1013 = vmatprep.subr.mxu0 0.0
    %1014 = vmatpush1.msra.mxu0 0.0
    %1015 = vmatprep.subr.mxu0 0.0
    %1016 = vmatpush1.msra.mxu0 0.0
    %1017 = vmatprep.subr.mxu0 0.0
    %1018 = vmatpush1.msra.mxu0 0.0
    %1019 = vmatprep.subr.mxu0 0.0
    %1020 = vmatpush1.msra.mxu0 0.0
    %1021 = vmatprep.subr.mxu0 0.0
    %1022 = vmatpush1.msra.mxu0 0.0
    %1023 = vmatprep.subr.mxu0 0.0
    %1024 = vmatpush1.msra.mxu0 0.0
    %1025 = vmatprep.subr.mxu0 0.0
    %1026 = vmatpush1.msra.mxu0 0.0
    %1027 = vmatprep.subr.mxu0 0.0
    %1028 = vmatpush1.msra.mxu0 0.0
    %1029 = vmatprep.subr.mxu0 0.0
    %1030 = vmatpush1.msra.mxu0 0.0
    %1031 = vmatprep.subr.mxu0 0.0
    %1032 = vmatpush1.msra.mxu0 0.0
    %1033 = vmatprep.subr.mxu0 0.0
    %1034 = vmatpush1.msra.mxu0 0.0
    %1035 = vmatprep.subr.mxu0 0.0
    %1036 = vmatpush1.msra.mxu0 0.0
    %1037 = vmatprep.subr.mxu0 0.0
    %1038 = vmatpush1.msra.mxu0 0.0
    %1039 = vmatprep.mubr.f32.mxu0 0.0
    %1040 = vmatmul.mubr.f32.gmra.mrb[0].mxu0 %v967
    %v1041 = vpop.f32.mrb[0].mxu0
    %v1042 = vadd.f32 0.0, %v1041
    %v1043 = vpop.f32.mrb[0].mxu0
    %v1044 = vadd.f32 0.0, %v1043
    %1045 = vdwg.mxu0
    %1046 = vmatprep.subr.mxu0 %v116
    %1047 = vmatpush1.msra.mxu0 %v115
    %1048 = vmatprep.subr.mxu0 %v120
    %1049 = vmatpush1.msra.mxu0 %v119
    %1050 = vmatprep.subr.mxu0 %v124
    %1051 = vmatpush1.msra.mxu0 %v123
    %1052 = vmatprep.subr.mxu0 %v128
    %1053 = vmatpush1.msra.mxu0 %v127
    %1054 = vmatprep.subr.mxu0 %v132
    %1055 = vmatpush1.msra.mxu0 %v131
    %1056 = vmatprep.subr.mxu0 %v136
    %1057 = vmatpush1.msra.mxu0 %v135
    %1058 = vmatprep.subr.mxu0 %v140
    %1059 = vmatpush1.msra.mxu0 %v139
    %1060 = vmatprep.subr.mxu0 %v144
    %1061 = vmatpush1.msra.mxu0 %v143
    %1062 = vmatprep.subr.mxu0 %v148
    %1063 = vmatpush1.msra.mxu0 %v147
    %1064 = vmatprep.subr.mxu0 %v152
    %1065 = vmatpush1.msra.mxu0 %v151
    %1066 = vmatprep.subr.mxu0 %v156
    %1067 = vmatpush1.msra.mxu0 %v155
    %1068 = vmatprep.subr.mxu0 %v160
    %1069 = vmatpush1.msra.mxu0 %v159
    %1070 = vmatprep.subr.mxu0 %v164
    %1071 = vmatpush1.msra.mxu0 %v163
    %1072 = vmatprep.subr.mxu0 %v168
    %1073 = vmatpush1.msra.mxu0 %v167
    %1074 = vmatprep.subr.mxu0 %v172
    %1075 = vmatpush1.msra.mxu0 %v171
    %1076 = vmatprep.subr.mxu0 %v176
    %1077 = vmatpush1.msra.mxu0 %v175
    %1078 = vmatprep.subr.mxu0 0.0
    %1079 = vmatpush1.msra.mxu0 0.0
    %1080 = vmatprep.subr.mxu0 0.0
    %1081 = vmatpush1.msra.mxu0 0.0
    %1082 = vmatprep.subr.mxu0 0.0
    %1083 = vmatpush1.msra.mxu0 0.0
    %1084 = vmatprep.subr.mxu0 0.0
    %1085 = vmatpush1.msra.mxu0 0.0
    %1086 = vmatprep.subr.mxu0 0.0
    %1087 = vmatpush1.msra.mxu0 0.0
    %1088 = vmatprep.subr.mxu0 0.0
    %1089 = vmatpush1.msra.mxu0 0.0
    %1090 = vmatprep.subr.mxu0 0.0
    %1091 = vmatpush1.msra.mxu0 0.0
    %1092 = vmatprep.subr.mxu0 0.0
    %1093 = vmatpush1.msra.mxu0 0.0
    %1094 = vmatprep.subr.mxu0 0.0
    %1095 = vmatpush1.msra.mxu0 0.0
    %1096 = vmatprep.subr.mxu0 0.0
    %1097 = vmatpush1.msra.mxu0 0.0
    %1098 = vmatprep.subr.mxu0 0.0
    %1099 = vmatpush1.msra.mxu0 0.0
    %1100 = vmatprep.subr.mxu0 0.0
    %1101 = vmatpush1.msra.mxu0 0.0
    %1102 = vmatprep.subr.mxu0 0.0
    %1103 = vmatpush1.msra.mxu0 0.0
    %1104 = vmatprep.subr.mxu0 0.0
    %1105 = vmatpush1.msra.mxu0 0.0
    %1106 = vmatprep.subr.mxu0 0.0
    %1107 = vmatpush1.msra.mxu0 0.0
    %1108 = vmatprep.subr.mxu0 0.0
    %1109 = vmatpush1.msra.mxu0 0.0
    %1110 = vmatprep.mubr.f32.mxu0 0.0
    %1111 = vmatmul.mubr.f32.gmra.mrb[0].mxu0 %v967
    %v1112 = vpop.f32.mrb[0].mxu0
    %v1113 = vadd.f32 0.0, %v1112
    %v1114 = vpop.f32.mrb[0].mxu0
    %v1115 = vadd.f32 0.0, %v1114
    %1116 = vdwg.mxu0
    %v1117 = vadd.f32 %v971, %v1042
    %v1118 = vadd.f32 %v972, %v1044
    %v1119 = vadd.f32 %v973, %v1113
    %v1120 = vadd.f32 %v974, %v1115
    %v1121 = vxor.u32 %v1117, 2147483648
    %v1122 = vmul.f32 %v1121, 1.442695
    %v1123 = vpow.pop %v1122
    %v1124 = vadd.f32 %v1123, 1.0
    %v1125 = vrcp.pop %v1124
    %v1126 = vmul.f32 1.0, %v1125
    %v1127 = vxor.u32 %v1118, 2147483648
    %v1128 = vmul.f32 %v1127, 1.442695
    %v1129 = vpow.pop %v1128
    %v1130 = vadd.f32 %v1129, 1.0
    %v1131 = vrcp.pop %v1130
    %v1132 = vmul.f32 1.0, %v1131
    %v1133 = vtanh.pop %v1119
    %v1134 = vxor.u32 %v1120, 2147483648
    %v1135 = vmul.f32 %v1134, 1.442695
    %v1136 = vpow.pop %v1135
    %v1137 = vadd.f32 %v1136, 1.0
    %v1138 = vrcp.pop %v1137
    %v1139 = vmul.f32 1.0, %v1138
    %1140 = vmatprep.subr.mxu0 0.0
    %1141 = vmatpush1.msra.mxu0 %v177
    %1142 = vmatprep.subr.mxu0 0.0
    %1143 = vmatpush1.msra.mxu0 %v178
    %1144 = vmatprep.subr.mxu0 0.0
    %1145 = vmatpush1.msra.mxu0 %v179
    %1146 = vmatprep.subr.mxu0 0.0
    %1147 = vmatpush1.msra.mxu0 %v180
    %1148 = vmatprep.subr.mxu0 0.0
    %1149 = vmatpush1.msra.mxu0 %v181
    %1150 = vmatprep.subr.mxu0 0.0
    %1151 = vmatpush1.msra.mxu0 %v182
    %1152 = vmatprep.subr.mxu0 0.0
    %1153 = vmatpush1.msra.mxu0 %v183
    %1154 = vmatprep.subr.mxu0 0.0
    %1155 = vmatpush1.msra.mxu0 %v184
    %1156 = vmatprep.subr.mxu0 0.0
    %1157 = vmatpush1.msra.mxu0 %v185
    %1158 = vmatprep.subr.mxu0 0.0
    %1159 = vmatpush1.msra.mxu0 %v186
    %1160 = vmatprep.subr.mxu0 0.0
    %1161 = vmatpush1.msra.mxu0 %v187
    %1162 = vmatprep.subr.mxu0 0.0
    %1163 = vmatpush1.msra.mxu0 %v188
    %1164 = vmatprep.subr.mxu0 0.0
    %1165 = vmatpush1.msra.mxu0 %v189
    %1166 = vmatprep.subr.mxu0 0.0
    %1167 = vmatpush1.msra.mxu0 %v190
    %1168 = vmatprep.subr.mxu0 0.0
    %1169 = vmatpush1.msra.mxu0 %v191
    %1170 = vmatprep.subr.mxu0 0.0
    %1171 = vmatpush1.msra.mxu0 %v192
    %1172 = vmatprep.subr.mxu0 0.0
    %1173 = vmatpush1.msra.mxu0 0.0
    %1174 = vmatprep.subr.mxu0 0.0
    %1175 = vmatpush1.msra.mxu0 0.0
    %1176 = vmatprep.subr.mxu0 0.0
    %1177 = vmatpush1.msra.mxu0 0.0
    %1178 = vmatprep.subr.mxu0 0.0
    %1179 = vmatpush1.msra.mxu0 0.0
    %1180 = vmatprep.subr.mxu0 0.0
    %1181 = vmatpush1.msra.mxu0 0.0
    %1182 = vmatprep.subr.mxu0 0.0
    %1183 = vmatpush1.msra.mxu0 0.0
    %1184 = vmatprep.subr.mxu0 0.0
    %1185 = vmatpush1.msra.mxu0 0.0
    %1186 = vmatprep.subr.mxu0 0.0
    %1187 = vmatpush1.msra.mxu0 0.0
    %1188 = vmatprep.subr.mxu0 0.0
    %1189 = vmatpush1.msra.mxu0 0.0
    %1190 = vmatprep.subr.mxu0 0.0
    %1191 = vmatpush1.msra.mxu0 0.0
    %1192 = vmatprep.subr.mxu0 0.0
    %1193 = vmatpush1.msra.mxu0 0.0
    %1194 = vmatprep.subr.mxu0 0.0
    %1195 = vmatpush1.msra.mxu0 0.0
    %1196 = vmatprep.subr.mxu0 0.0
    %1197 = vmatpush1.msra.mxu0 0.0
    %1198 = vmatprep.subr.mxu0 0.0
    %1199 = vmatpush1.msra.mxu0 0.0
    %1200 = vmatprep.subr.mxu0 0.0
    %1201 = vmatpush1.msra.mxu0 0.0
    %1202 = vmatprep.subr.mxu0 0.0
    %1203 = vmatpush1.msra.mxu0 0.0
    %1204 = vmatprep.mubr.f32.mxu0 0.0
    %1205 = vmatmul.mubr.f32.gmra.mrb[0].mxu0 %v965
    %v1206 = vpop.f32.mrb[0].mxu0
    %v1207 = vadd.f32 %v369, %v1206
    %v1208 = vpop.f32.mrb[0].mxu0
    %1209 = vdwg.mxu0
    %v1210 = vsub.f32 %v965, %v1207
    %s1211 = scalar_lea.vmem %s1, 24
    %v1212 = vld [vmem:[%s1211] sm:$0xff]
    %1214 = vset.pattern.permute.xlu0 0
    %1215 = vperm.xlu0 %1214, %v1212
    %v1216 = vpop.permute.xlu0 %1215
    %v1218 = vmul.f32 %v1207, %v1216
    %v1219 = vadd.f32 %v1210, %v1218
    %v1220 = vmul.f32 %v1132, %v1219
    %v1221 = vmul.f32 %v1126, %v1133
    %v1222 = vadd.f32 %v1220, %v1221
    %v1223 = vtanh.pop %v1222
    %v1224 = vmul.f32 %v1139, %v1223
    %s1225 = scalar_lea.vmem [#allocation11], 24
    %1226 = vst [vmem:[%s1225] sm:$0xff] %v1224
    %s1227 = scalar_lea.vmem [#allocation8], 128
    %v1228 = vld [vmem:[%s1227] sm:$0xff]
    %v1229 = vld [vmem:[%s1227 + $0x8] sm:$0xff]
    %v1230 = vld [vmem:[%s1227 + $0x10] sm:$0xff]
    %v1231 = vld [vmem:[%s1227 + $0x18] sm:$0xff]
    %1232 = vmatprep.subr.mxu0 %v114
    %1233 = vmatpush1.msra.mxu0 %v113
    %1234 = vmatprep.subr.mxu0 %v118
    %1235 = vmatpush1.msra.mxu0 %v117
    %1236 = vmatprep.subr.mxu0 %v122
    %1237 = vmatpush1.msra.mxu0 %v121
    %1238 = vmatprep.subr.mxu0 %v126
    %1239 = vmatpush1.msra.mxu0 %v125
    %1240 = vmatprep.subr.mxu0 %v130
    %1241 = vmatpush1.msra.mxu0 %v129
    %1242 = vmatprep.subr.mxu0 %v134
    %1243 = vmatpush1.msra.mxu0 %v133
    %1244 = vmatprep.subr.mxu0 %v138
    %1245 = vmatpush1.msra.mxu0 %v137
    %1246 = vmatprep.subr.mxu0 %v142
    %1247 = vmatpush1.msra.mxu0 %v141
    %1248 = vmatprep.subr.mxu0 %v146
    %1249 = vmatpush1.msra.mxu0 %v145
    %1250 = vmatprep.subr.mxu0 %v150
    %1251 = vmatpush1.msra.mxu0 %v149
    %1252 = vmatprep.subr.mxu0 %v154
    %1253 = vmatpush1.msra.mxu0 %v153
    %1254 = vmatprep.subr.mxu0 %v158
    %1255 = vmatpush1.msra.mxu0 %v157
    %1256 = vmatprep.subr.mxu0 %v162
    %1257 = vmatpush1.msra.mxu0 %v161
    %1258 = vmatprep.subr.mxu0 %v166
    %1259 = vmatpush1.msra.mxu0 %v165
    %1260 = vmatprep.subr.mxu0 %v170
    %1261 = vmatpush1.msra.mxu0 %v169
    %1262 = vmatprep.subr.mxu0 %v174
    %1263 = vmatpush1.msra.mxu0 %v173
    %1264 = vmatprep.subr.mxu0 0.0
    %1265 = vmatpush1.msra.mxu0 0.0
    %1266 = vmatprep.subr.mxu0 0.0
    %1267 = vmatpush1.msra.mxu0 0.0
    %1268 = vmatprep.subr.mxu0 0.0
    %1269 = vmatpush1.msra.mxu0 0.0
    %1270 = vmatprep.subr.mxu0 0.0
    %1271 = vmatpush1.msra.mxu0 0.0
    %1272 = vmatprep.subr.mxu0 0.0
    %1273 = vmatpush1.msra.mxu0 0.0
    %1274 = vmatprep.subr.mxu0 0.0
    %1275 = vmatpush1.msra.mxu0 0.0
    %1276 = vmatprep.subr.mxu0 0.0
    %1277 = vmatpush1.msra.mxu0 0.0
    %1278 = vmatprep.subr.mxu0 0.0
    %1279 = vmatpush1.msra.mxu0 0.0
    %1280 = vmatprep.subr.mxu0 0.0
    %1281 = vmatpush1.msra.mxu0 0.0
    %1282 = vmatprep.subr.mxu0 0.0
    %1283 = vmatpush1.msra.mxu0 0.0
    %1284 = vmatprep.subr.mxu0 0.0
    %1285 = vmatpush1.msra.mxu0 0.0
    %1286 = vmatprep.subr.mxu0 0.0
    %1287 = vmatpush1.msra.mxu0 0.0
    %1288 = vmatprep.subr.mxu0 0.0
    %1289 = vmatpush1.msra.mxu0 0.0
    %1290 = vmatprep.subr.mxu0 0.0
    %1291 = vmatpush1.msra.mxu0 0.0
    %1292 = vmatprep.subr.mxu0 0.0
    %1293 = vmatpush1.msra.mxu0 0.0
    %1294 = vmatprep.subr.mxu0 0.0
    %1295 = vmatpush1.msra.mxu0 0.0
    %1296 = vmatprep.mubr.f32.mxu0 0.0
    %1297 = vmatmul.mubr.f32.gmra.mrb[0].mxu0 %v1224
    %v1298 = vpop.f32.mrb[0].mxu0
    %v1299 = vadd.f32 0.0, %v1298
    %v1300 = vpop.f32.mrb[0].mxu0
    %v1301 = vadd.f32 0.0, %v1300
    %1302 = vdwg.mxu0
    %1303 = vmatprep.subr.mxu0 %v116
    %1304 = vmatpush1.msra.mxu0 %v115
    %1305 = vmatprep.subr.mxu0 %v120
    %1306 = vmatpush1.msra.mxu0 %v119
    %1307 = vmatprep.subr.mxu0 %v124
    %1308 = vmatpush1.msra.mxu0 %v123
    %1309 = vmatprep.subr.mxu0 %v128
    %1310 = vmatpush1.msra.mxu0 %v127
    %1311 = vmatprep.subr.mxu0 %v132
    %1312 = vmatpush1.msra.mxu0 %v131
    %1313 = vmatprep.subr.mxu0 %v136
    %1314 = vmatpush1.msra.mxu0 %v135
    %1315 = vmatprep.subr.mxu0 %v140
    %1316 = vmatpush1.msra.mxu0 %v139
    %1317 = vmatprep.subr.mxu0 %v144
    %1318 = vmatpush1.msra.mxu0 %v143
    %1319 = vmatprep.subr.mxu0 %v148
    %1320 = vmatpush1.msra.mxu0 %v147
    %1321 = vmatprep.subr.mxu0 %v152
    %1322 = vmatpush1.msra.mxu0 %v151
    %1323 = vmatprep.subr.mxu0 %v156
    %1324 = vmatpush1.msra.mxu0 %v155
    %1325 = vmatprep.subr.mxu0 %v160
    %1326 = vmatpush1.msra.mxu0 %v159
    %1327 = vmatprep.subr.mxu0 %v164
    %1328 = vmatpush1.msra.mxu0 %v163
    %1329 = vmatprep.subr.mxu0 %v168
    %1330 = vmatpush1.msra.mxu0 %v167
    %1331 = vmatprep.subr.mxu0 %v172
    %1332 = vmatpush1.msra.mxu0 %v171
    %1333 = vmatprep.subr.mxu0 %v176
    %1334 = vmatpush1.msra.mxu0 %v175
    %1335 = vmatprep.subr.mxu0 0.0
    %1336 = vmatpush1.msra.mxu0 0.0
    %1337 = vmatprep.subr.mxu0 0.0
    %1338 = vmatpush1.msra.mxu0 0.0
    %1339 = vmatprep.subr.mxu0 0.0
    %1340 = vmatpush1.msra.mxu0 0.0
    %1341 = vmatprep.subr.mxu0 0.0
    %1342 = vmatpush1.msra.mxu0 0.0
    %1343 = vmatprep.subr.mxu0 0.0
    %1344 = vmatpush1.msra.mxu0 0.0
    %1345 = vmatprep.subr.mxu0 0.0
    %1346 = vmatpush1.msra.mxu0 0.0
    %1347 = vmatprep.subr.mxu0 0.0
    %1348 = vmatpush1.msra.mxu0 0.0
    %1349 = vmatprep.subr.mxu0 0.0
    %1350 = vmatpush1.msra.mxu0 0.0
    %1351 = vmatprep.subr.mxu0 0.0
    %1352 = vmatpush1.msra.mxu0 0.0
    %1353 = vmatprep.subr.mxu0 0.0
    %1354 = vmatpush1.msra.mxu0 0.0
    %1355 = vmatprep.subr.mxu0 0.0
    %1356 = vmatpush1.msra.mxu0 0.0
    %1357 = vmatprep.subr.mxu0 0.0
    %1358 = vmatpush1.msra.mxu0 0.0
    %1359 = vmatprep.subr.mxu0 0.0
    %1360 = vmatpush1.msra.mxu0 0.0
    %1361 = vmatprep.subr.mxu0 0.0
    %1362 = vmatpush1.msra.mxu0 0.0
    %1363 = vmatprep.subr.mxu0 0.0
    %1364 = vmatpush1.msra.mxu0 0.0
    %1365 = vmatprep.subr.mxu0 0.0
    %1366 = vmatpush1.msra.mxu0 0.0
    %1367 = vmatprep.mubr.f32.mxu0 0.0
    %1368 = vmatmul.mubr.f32.gmra.mrb[0].mxu0 %v1224
    %v1369 = vpop.f32.mrb[0].mxu0
    %v1370 = vadd.f32 0.0, %v1369
    %v1371 = vpop.f32.mrb[0].mxu0
    %v1372 = vadd.f32 0.0, %v1371
    %1373 = vdwg.mxu0
    %v1374 = vadd.f32 %v1228, %v1299
    %v1375 = vadd.f32 %v1229, %v1301
    %v1376 = vadd.f32 %v1230, %v1370
    %v1377 = vadd.f32 %v1231, %v1372
    %v1378 = vxor.u32 %v1374, 2147483648
    %v1379 = vmul.f32 %v1378, 1.442695
    %v1380 = vpow.pop %v1379
    %v1381 = vadd.f32 %v1380, 1.0
    %v1382 = vrcp.pop %v1381
    %v1383 = vmul.f32 1.0, %v1382
    %v1384 = vxor.u32 %v1375, 2147483648
    %v1385 = vmul.f32 %v1384, 1.442695
    %v1386 = vpow.pop %v1385
    %v1387 = vadd.f32 %v1386, 1.0
    %v1388 = vrcp.pop %v1387
    %v1389 = vmul.f32 1.0, %v1388
    %v1390 = vtanh.pop %v1376
    %v1391 = vxor.u32 %v1377, 2147483648
    %v1392 = vmul.f32 %v1391, 1.442695
    %v1393 = vpow.pop %v1392
    %v1394 = vadd.f32 %v1393, 1.0
    %v1395 = vrcp.pop %v1394
    %v1396 = vmul.f32 1.0, %v1395
    %1397 = vmatprep.subr.mxu0 0.0
    %1398 = vmatpush1.msra.mxu0 %v177
    %1399 = vmatprep.subr.mxu0 0.0
    %1400 = vmatpush1.msra.mxu0 %v178
    %1401 = vmatprep.subr.mxu0 0.0
    %1402 = vmatpush1.msra.mxu0 %v179
    %1403 = vmatprep.subr.mxu0 0.0
    %1404 = vmatpush1.msra.mxu0 %v180
    %1405 = vmatprep.subr.mxu0 0.0
    %1406 = vmatpush1.msra.mxu0 %v181
    %1407 = vmatprep.subr.mxu0 0.0
    %1408 = vmatpush1.msra.mxu0 %v182
    %1409 = vmatprep.subr.mxu0 0.0
    %1410 = vmatpush1.msra.mxu0 %v183
    %1411 = vmatprep.subr.mxu0 0.0
    %1412 = vmatpush1.msra.mxu0 %v184
    %1413 = vmatprep.subr.mxu0 0.0
    %1414 = vmatpush1.msra.mxu0 %v185
    %1415 = vmatprep.subr.mxu0 0.0
    %1416 = vmatpush1.msra.mxu0 %v186
    %1417 = vmatprep.subr.mxu0 0.0
    %1418 = vmatpush1.msra.mxu0 %v187
    %1419 = vmatprep.subr.mxu0 0.0
    %1420 = vmatpush1.msra.mxu0 %v188
    %1421 = vmatprep.subr.mxu0 0.0
    %1422 = vmatpush1.msra.mxu0 %v189
    %1423 = vmatprep.subr.mxu0 0.0
    %1424 = vmatpush1.msra.mxu0 %v190
    %1425 = vmatprep.subr.mxu0 0.0
    %1426 = vmatpush1.msra.mxu0 %v191
    %1427 = vmatprep.subr.mxu0 0.0
    %1428 = vmatpush1.msra.mxu0 %v192
    %1429 = vmatprep.subr.mxu0 0.0
    %1430 = vmatpush1.msra.mxu0 0.0
    %1431 = vmatprep.subr.mxu0 0.0
    %1432 = vmatpush1.msra.mxu0 0.0
    %1433 = vmatprep.subr.mxu0 0.0
    %1434 = vmatpush1.msra.mxu0 0.0
    %1435 = vmatprep.subr.mxu0 0.0
    %1436 = vmatpush1.msra.mxu0 0.0
    %1437 = vmatprep.subr.mxu0 0.0
    %1438 = vmatpush1.msra.mxu0 0.0
    %1439 = vmatprep.subr.mxu0 0.0
    %1440 = vmatpush1.msra.mxu0 0.0
    %1441 = vmatprep.subr.mxu0 0.0
    %1442 = vmatpush1.msra.mxu0 0.0
    %1443 = vmatprep.subr.mxu0 0.0
    %1444 = vmatpush1.msra.mxu0 0.0
    %1445 = vmatprep.subr.mxu0 0.0
    %1446 = vmatpush1.msra.mxu0 0.0
    %1447 = vmatprep.subr.mxu0 0.0
    %1448 = vmatpush1.msra.mxu0 0.0
    %1449 = vmatprep.subr.mxu0 0.0
    %1450 = vmatpush1.msra.mxu0 0.0
    %1451 = vmatprep.subr.mxu0 0.0
    %1452 = vmatpush1.msra.mxu0 0.0
    %1453 = vmatprep.subr.mxu0 0.0
    %1454 = vmatpush1.msra.mxu0 0.0
    %1455 = vmatprep.subr.mxu0 0.0
    %1456 = vmatpush1.msra.mxu0 0.0
    %1457 = vmatprep.subr.mxu0 0.0
    %1458 = vmatpush1.msra.mxu0 0.0
    %1459 = vmatprep.subr.mxu0 0.0
    %1460 = vmatpush1.msra.mxu0 0.0
    %1461 = vmatprep.mubr.f32.mxu0 0.0
    %1462 = vmatmul.mubr.f32.gmra.mrb[0].mxu0 %v1222
    %v1463 = vpop.f32.mrb[0].mxu0
    %v1464 = vadd.f32 %v369, %v1463
    %v1465 = vpop.f32.mrb[0].mxu0
    %1466 = vdwg.mxu0
    %v1467 = vsub.f32 %v1222, %v1464
    %s1468 = scalar_lea.vmem %s1, 32
    %v1469 = vld [vmem:[%s1468] sm:$0xff]
    %1471 = vset.pattern.permute.xlu0 0
    %1472 = vperm.xlu0 %1471, %v1469
    %v1473 = vpop.permute.xlu0 %1472
    %v1475 = vmul.f32 %v1464, %v1473
    %v1476 = vadd.f32 %v1467, %v1475
    %v1477 = vmul.f32 %v1389, %v1476
    %v1478 = vmul.f32 %v1383, %v1390
    %v1479 = vadd.f32 %v1477, %v1478
    %v1480 = vtanh.pop %v1479
    %v1481 = vmul.f32 %v1396, %v1480
    %s1482 = scalar_lea.vmem [#allocation11], 32
    %1483 = vst [vmem:[%s1482] sm:$0xff] %v1481
    %s1484 = scalar_lea.vmem [#allocation8], 160
    %v1485 = vld [vmem:[%s1484] sm:$0xff]
    %v1486 = vld [vmem:[%s1484 + $0x8] sm:$0xff]
    %v1487 = vld [vmem:[%s1484 + $0x10] sm:$0xff]
    %v1488 = vld [vmem:[%s1484 + $0x18] sm:$0xff]
    %1489 = vmatprep.subr.mxu0 %v114
    %1490 = vmatpush1.msra.mxu0 %v113
    %1491 = vmatprep.subr.mxu0 %v118
    %1492 = vmatpush1.msra.mxu0 %v117
    %1493 = vmatprep.subr.mxu0 %v122
    %1494 = vmatpush1.msra.mxu0 %v121
    %1495 = vmatprep.subr.mxu0 %v126
    %1496 = vmatpush1.msra.mxu0 %v125
    %1497 = vmatprep.subr.mxu0 %v130
    %1498 = vmatpush1.msra.mxu0 %v129
    %1499 = vmatprep.subr.mxu0 %v134
    %1500 = vmatpush1.msra.mxu0 %v133
    %1501 = vmatprep.subr.mxu0 %v138
    %1502 = vmatpush1.msra.mxu0 %v137
    %1503 = vmatprep.subr.mxu0 %v142
    %1504 = vmatpush1.msra.mxu0 %v141
    %1505 = vmatprep.subr.mxu0 %v146
    %1506 = vmatpush1.msra.mxu0 %v145
    %1507 = vmatprep.subr.mxu0 %v150
    %1508 = vmatpush1.msra.mxu0 %v149
    %1509 = vmatprep.subr.mxu0 %v154
    %1510 = vmatpush1.msra.mxu0 %v153
    %1511 = vmatprep.subr.mxu0 %v158
    %1512 = vmatpush1.msra.mxu0 %v157
    %1513 = vmatprep.subr.mxu0 %v162
    %1514 = vmatpush1.msra.mxu0 %v161
    %1515 = vmatprep.subr.mxu0 %v166
    %1516 = vmatpush1.msra.mxu0 %v165
    %1517 = vmatprep.subr.mxu0 %v170
    %1518 = vmatpush1.msra.mxu0 %v169
    %1519 = vmatprep.subr.mxu0 %v174
    %1520 = vmatpush1.msra.mxu0 %v173
    %1521 = vmatprep.subr.mxu0 0.0
    %1522 = vmatpush1.msra.mxu0 0.0
    %1523 = vmatprep.subr.mxu0 0.0
    %1524 = vmatpush1.msra.mxu0 0.0
    %1525 = vmatprep.subr.mxu0 0.0
    %1526 = vmatpush1.msra.mxu0 0.0
    %1527 = vmatprep.subr.mxu0 0.0
    %1528 = vmatpush1.msra.mxu0 0.0
    %1529 = vmatprep.subr.mxu0 0.0
    %1530 = vmatpush1.msra.mxu0 0.0
    %1531 = vmatprep.subr.mxu0 0.0
    %1532 = vmatpush1.msra.mxu0 0.0
    %1533 = vmatprep.subr.mxu0 0.0
    %1534 = vmatpush1.msra.mxu0 0.0
    %1535 = vmatprep.subr.mxu0 0.0
    %1536 = vmatpush1.msra.mxu0 0.0
    %1537 = vmatprep.subr.mxu0 0.0
    %1538 = vmatpush1.msra.mxu0 0.0
    %1539 = vmatprep.subr.mxu0 0.0
    %1540 = vmatpush1.msra.mxu0 0.0
    %1541 = vmatprep.subr.mxu0 0.0
    %1542 = vmatpush1.msra.mxu0 0.0
    %1543 = vmatprep.subr.mxu0 0.0
    %1544 = vmatpush1.msra.mxu0 0.0
    %1545 = vmatprep.subr.mxu0 0.0
    %1546 = vmatpush1.msra.mxu0 0.0
    %1547 = vmatprep.subr.mxu0 0.0
    %1548 = vmatpush1.msra.mxu0 0.0
    %1549 = vmatprep.subr.mxu0 0.0
    %1550 = vmatpush1.msra.mxu0 0.0
    %1551 = vmatprep.subr.mxu0 0.0
    %1552 = vmatpush1.msra.mxu0 0.0
    %1553 = vmatprep.mubr.f32.mxu0 0.0
    %1554 = vmatmul.mubr.f32.gmra.mrb[0].mxu0 %v1481
    %v1555 = vpop.f32.mrb[0].mxu0
    %v1556 = vadd.f32 0.0, %v1555
    %v1557 = vpop.f32.mrb[0].mxu0
    %v1558 = vadd.f32 0.0, %v1557
    %1559 = vdwg.mxu0
    %1560 = vmatprep.subr.mxu0 %v116
    %1561 = vmatpush1.msra.mxu0 %v115
    %1562 = vmatprep.subr.mxu0 %v120
    %1563 = vmatpush1.msra.mxu0 %v119
    %1564 = vmatprep.subr.mxu0 %v124
    %1565 = vmatpush1.msra.mxu0 %v123
    %1566 = vmatprep.subr.mxu0 %v128
    %1567 = vmatpush1.msra.mxu0 %v127
    %1568 = vmatprep.subr.mxu0 %v132
    %1569 = vmatpush1.msra.mxu0 %v131
    %1570 = vmatprep.subr.mxu0 %v136
    %1571 = vmatpush1.msra.mxu0 %v135
    %1572 = vmatprep.subr.mxu0 %v140
    %1573 = vmatpush1.msra.mxu0 %v139
    %1574 = vmatprep.subr.mxu0 %v144
    %1575 = vmatpush1.msra.mxu0 %v143
    %1576 = vmatprep.subr.mxu0 %v148
    %1577 = vmatpush1.msra.mxu0 %v147
    %1578 = vmatprep.subr.mxu0 %v152
    %1579 = vmatpush1.msra.mxu0 %v151
    %1580 = vmatprep.subr.mxu0 %v156
    %1581 = vmatpush1.msra.mxu0 %v155
    %1582 = vmatprep.subr.mxu0 %v160
    %1583 = vmatpush1.msra.mxu0 %v159
    %1584 = vmatprep.subr.mxu0 %v164
    %1585 = vmatpush1.msra.mxu0 %v163
    %1586 = vmatprep.subr.mxu0 %v168
    %1587 = vmatpush1.msra.mxu0 %v167
    %1588 = vmatprep.subr.mxu0 %v172
    %1589 = vmatpush1.msra.mxu0 %v171
    %1590 = vmatprep.subr.mxu0 %v176
    %1591 = vmatpush1.msra.mxu0 %v175
    %1592 = vmatprep.subr.mxu0 0.0
    %1593 = vmatpush1.msra.mxu0 0.0
    %1594 = vmatprep.subr.mxu0 0.0
    %1595 = vmatpush1.msra.mxu0 0.0
    %1596 = vmatprep.subr.mxu0 0.0
    %1597 = vmatpush1.msra.mxu0 0.0
    %1598 = vmatprep.subr.mxu0 0.0
    %1599 = vmatpush1.msra.mxu0 0.0
    %1600 = vmatprep.subr.mxu0 0.0
    %1601 = vmatpush1.msra.mxu0 0.0
    %1602 = vmatprep.subr.mxu0 0.0
    %1603 = vmatpush1.msra.mxu0 0.0
    %1604 = vmatprep.subr.mxu0 0.0
    %1605 = vmatpush1.msra.mxu0 0.0
    %1606 = vmatprep.subr.mxu0 0.0
    %1607 = vmatpush1.msra.mxu0 0.0
    %1608 = vmatprep.subr.mxu0 0.0
    %1609 = vmatpush1.msra.mxu0 0.0
    %1610 = vmatprep.subr.mxu0 0.0
    %1611 = vmatpush1.msra.mxu0 0.0
    %1612 = vmatprep.subr.mxu0 0.0
    %1613 = vmatpush1.msra.mxu0 0.0
    %1614 = vmatprep.subr.mxu0 0.0
    %1615 = vmatpush1.msra.mxu0 0.0
    %1616 = vmatprep.subr.mxu0 0.0
    %1617 = vmatpush1.msra.mxu0 0.0
    %1618 = vmatprep.subr.mxu0 0.0
    %1619 = vmatpush1.msra.mxu0 0.0
    %1620 = vmatprep.subr.mxu0 0.0
    %1621 = vmatpush1.msra.mxu0 0.0
    %1622 = vmatprep.subr.mxu0 0.0
    %1623 = vmatpush1.msra.mxu0 0.0
    %1624 = vmatprep.mubr.f32.mxu0 0.0
    %1625 = vmatmul.mubr.f32.gmra.mrb[0].mxu0 %v1481
    %v1626 = vpop.f32.mrb[0].mxu0
    %v1627 = vadd.f32 0.0, %v1626
    %v1628 = vpop.f32.mrb[0].mxu0
    %v1629 = vadd.f32 0.0, %v1628
    %1630 = vdwg.mxu0
    %v1631 = vadd.f32 %v1485, %v1556
    %v1632 = vadd.f32 %v1486, %v1558
    %v1633 = vadd.f32 %v1487, %v1627
    %v1634 = vadd.f32 %v1488, %v1629
    %v1635 = vxor.u32 %v1631, 2147483648
    %v1636 = vmul.f32 %v1635, 1.442695
    %v1637 = vpow.pop %v1636
    %v1638 = vadd.f32 %v1637, 1.0
    %v1639 = vrcp.pop %v1638
    %v1640 = vmul.f32 1.0, %v1639
    %v1641 = vxor.u32 %v1632, 2147483648
    %v1642 = vmul.f32 %v1641, 1.442695
    %v1643 = vpow.pop %v1642
    %v1644 = vadd.f32 %v1643, 1.0
    %v1645 = vrcp.pop %v1644
    %v1646 = vmul.f32 1.0, %v1645
    %v1647 = vtanh.pop %v1633
    %v1648 = vxor.u32 %v1634, 2147483648
    %v1649 = vmul.f32 %v1648, 1.442695
    %v1650 = vpow.pop %v1649
    %v1651 = vadd.f32 %v1650, 1.0
    %v1652 = vrcp.pop %v1651
    %v1653 = vmul.f32 1.0, %v1652
    %1654 = vmatprep.subr.mxu0 0.0
    %1655 = vmatpush1.msra.mxu0 %v177
    %1656 = vmatprep.subr.mxu0 0.0
    %1657 = vmatpush1.msra.mxu0 %v178
    %1658 = vmatprep.subr.mxu0 0.0
    %1659 = vmatpush1.msra.mxu0 %v179
    %1660 = vmatprep.subr.mxu0 0.0
    %1661 = vmatpush1.msra.mxu0 %v180
    %1662 = vmatprep.subr.mxu0 0.0
    %1663 = vmatpush1.msra.mxu0 %v181
    %1664 = vmatprep.subr.mxu0 0.0
    %1665 = vmatpush1.msra.mxu0 %v182
    %1666 = vmatprep.subr.mxu0 0.0
    %1667 = vmatpush1.msra.mxu0 %v183
    %1668 = vmatprep.subr.mxu0 0.0
    %1669 = vmatpush1.msra.mxu0 %v184
    %1670 = vmatprep.subr.mxu0 0.0
    %1671 = vmatpush1.msra.mxu0 %v185
    %1672 = vmatprep.subr.mxu0 0.0
    %1673 = vmatpush1.msra.mxu0 %v186
    %1674 = vmatprep.subr.mxu0 0.0
    %1675 = vmatpush1.msra.mxu0 %v187
    %1676 = vmatprep.subr.mxu0 0.0
    %1677 = vmatpush1.msra.mxu0 %v188
    %1678 = vmatprep.subr.mxu0 0.0
    %1679 = vmatpush1.msra.mxu0 %v189
    %1680 = vmatprep.subr.mxu0 0.0
    %1681 = vmatpush1.msra.mxu0 %v190
    %1682 = vmatprep.subr.mxu0 0.0
    %1683 = vmatpush1.msra.mxu0 %v191
    %1684 = vmatprep.subr.mxu0 0.0
    %1685 = vmatpush1.msra.mxu0 %v192
    %1686 = vmatprep.subr.mxu0 0.0
    %1687 = vmatpush1.msra.mxu0 0.0
    %1688 = vmatprep.subr.mxu0 0.0
    %1689 = vmatpush1.msra.mxu0 0.0
    %1690 = vmatprep.subr.mxu0 0.0
    %1691 = vmatpush1.msra.mxu0 0.0
    %1692 = vmatprep.subr.mxu0 0.0
    %1693 = vmatpush1.msra.mxu0 0.0
    %1694 = vmatprep.subr.mxu0 0.0
    %1695 = vmatpush1.msra.mxu0 0.0
    %1696 = vmatprep.subr.mxu0 0.0
    %1697 = vmatpush1.msra.mxu0 0.0
    %1698 = vmatprep.subr.mxu0 0.0
    %1699 = vmatpush1.msra.mxu0 0.0
    %1700 = vmatprep.subr.mxu0 0.0
    %1701 = vmatpush1.msra.mxu0 0.0
    %1702 = vmatprep.subr.mxu0 0.0
    %1703 = vmatpush1.msra.mxu0 0.0
    %1704 = vmatprep.subr.mxu0 0.0
    %1705 = vmatpush1.msra.mxu0 0.0
    %1706 = vmatprep.subr.mxu0 0.0
    %1707 = vmatpush1.msra.mxu0 0.0
    %1708 = vmatprep.subr.mxu0 0.0
    %1709 = vmatpush1.msra.mxu0 0.0
    %1710 = vmatprep.subr.mxu0 0.0
    %1711 = vmatpush1.msra.mxu0 0.0
    %1712 = vmatprep.subr.mxu0 0.0
    %1713 = vmatpush1.msra.mxu0 0.0
    %1714 = vmatprep.subr.mxu0 0.0
    %1715 = vmatpush1.msra.mxu0 0.0
    %1716 = vmatprep.subr.mxu0 0.0
    %1717 = vmatpush1.msra.mxu0 0.0
    %1718 = vmatprep.mubr.f32.mxu0 0.0
    %1719 = vmatmul.mubr.f32.gmra.mrb[0].mxu0 %v1479
    %v1720 = vpop.f32.mrb[0].mxu0
    %v1721 = vadd.f32 %v369, %v1720
    %v1722 = vpop.f32.mrb[0].mxu0
    %1723 = vdwg.mxu0
    %v1724 = vsub.f32 %v1479, %v1721
    %s1725 = scalar_lea.vmem %s1, 40
    %v1726 = vld [vmem:[%s1725] sm:$0xff]
    %1728 = vset.pattern.permute.xlu0 0
    %1729 = vperm.xlu0 %1728, %v1726
    %v1730 = vpop.permute.xlu0 %1729
    %v1732 = vmul.f32 %v1721, %v1730
    %v1733 = vadd.f32 %v1724, %v1732
    %v1734 = vmul.f32 %v1646, %v1733
    %v1735 = vmul.f32 %v1640, %v1647
    %v1736 = vadd.f32 %v1734, %v1735
    %v1737 = vtanh.pop %v1736
    %v1738 = vmul.f32 %v1653, %v1737
    %s1739 = scalar_lea.vmem [#allocation11], 40
    %1740 = vst [vmem:[%s1739] sm:$0xff] %v1738
    %s1741 = scalar_lea.vmem [#allocation8], 192
    %v1742 = vld [vmem:[%s1741] sm:$0xff]
    %v1743 = vld [vmem:[%s1741 + $0x8] sm:$0xff]
    %v1744 = vld [vmem:[%s1741 + $0x10] sm:$0xff]
    %v1745 = vld [vmem:[%s1741 + $0x18] sm:$0xff]
    %1746 = vmatprep.subr.mxu0 %v114
    %1747 = vmatpush1.msra.mxu0 %v113
    %1748 = vmatprep.subr.mxu0 %v118
    %1749 = vmatpush1.msra.mxu0 %v117
    %1750 = vmatprep.subr.mxu0 %v122
    %1751 = vmatpush1.msra.mxu0 %v121
    %1752 = vmatprep.subr.mxu0 %v126
    %1753 = vmatpush1.msra.mxu0 %v125
    %1754 = vmatprep.subr.mxu0 %v130
    %1755 = vmatpush1.msra.mxu0 %v129
    %1756 = vmatprep.subr.mxu0 %v134
    %1757 = vmatpush1.msra.mxu0 %v133
    %1758 = vmatprep.subr.mxu0 %v138
    %1759 = vmatpush1.msra.mxu0 %v137
    %1760 = vmatprep.subr.mxu0 %v142
    %1761 = vmatpush1.msra.mxu0 %v141
    %1762 = vmatprep.subr.mxu0 %v146
    %1763 = vmatpush1.msra.mxu0 %v145
    %1764 = vmatprep.subr.mxu0 %v150
    %1765 = vmatpush1.msra.mxu0 %v149
    %1766 = vmatprep.subr.mxu0 %v154
    %1767 = vmatpush1.msra.mxu0 %v153
    %1768 = vmatprep.subr.mxu0 %v158
    %1769 = vmatpush1.msra.mxu0 %v157
    %1770 = vmatprep.subr.mxu0 %v162
    %1771 = vmatpush1.msra.mxu0 %v161
    %1772 = vmatprep.subr.mxu0 %v166
    %1773 = vmatpush1.msra.mxu0 %v165
    %1774 = vmatprep.subr.mxu0 %v170
    %1775 = vmatpush1.msra.mxu0 %v169
    %1776 = vmatprep.subr.mxu0 %v174
    %1777 = vmatpush1.msra.mxu0 %v173
    %1778 = vmatprep.subr.mxu0 0.0
    %1779 = vmatpush1.msra.mxu0 0.0
    %1780 = vmatprep.subr.mxu0 0.0
    %1781 = vmatpush1.msra.mxu0 0.0
    %1782 = vmatprep.subr.mxu0 0.0
    %1783 = vmatpush1.msra.mxu0 0.0
    %1784 = vmatprep.subr.mxu0 0.0
    %1785 = vmatpush1.msra.mxu0 0.0
    %1786 = vmatprep.subr.mxu0 0.0
    %1787 = vmatpush1.msra.mxu0 0.0
    %1788 = vmatprep.subr.mxu0 0.0
    %1789 = vmatpush1.msra.mxu0 0.0
    %1790 = vmatprep.subr.mxu0 0.0
    %1791 = vmatpush1.msra.mxu0 0.0
    %1792 = vmatprep.subr.mxu0 0.0
    %1793 = vmatpush1.msra.mxu0 0.0
    %1794 = vmatprep.subr.mxu0 0.0
    %1795 = vmatpush1.msra.mxu0 0.0
    %1796 = vmatprep.subr.mxu0 0.0
    %1797 = vmatpush1.msra.mxu0 0.0
    %1798 = vmatprep.subr.mxu0 0.0
    %1799 = vmatpush1.msra.mxu0 0.0
    %1800 = vmatprep.subr.mxu0 0.0
    %1801 = vmatpush1.msra.mxu0 0.0
    %1802 = vmatprep.subr.mxu0 0.0
    %1803 = vmatpush1.msra.mxu0 0.0
    %1804 = vmatprep.subr.mxu0 0.0
    %1805 = vmatpush1.msra.mxu0 0.0
    %1806 = vmatprep.subr.mxu0 0.0
    %1807 = vmatpush1.msra.mxu0 0.0
    %1808 = vmatprep.subr.mxu0 0.0
    %1809 = vmatpush1.msra.mxu0 0.0
    %1810 = vmatprep.mubr.f32.mxu0 0.0
    %1811 = vmatmul.mubr.f32.gmra.mrb[0].mxu0 %v1738
    %v1812 = vpop.f32.mrb[0].mxu0
    %v1813 = vadd.f32 0.0, %v1812
    %v1814 = vpop.f32.mrb[0].mxu0
    %v1815 = vadd.f32 0.0, %v1814
    %1816 = vdwg.mxu0
    %1817 = vmatprep.subr.mxu0 %v116
    %1818 = vmatpush1.msra.mxu0 %v115
    %1819 = vmatprep.subr.mxu0 %v120
    %1820 = vmatpush1.msra.mxu0 %v119
    %1821 = vmatprep.subr.mxu0 %v124
    %1822 = vmatpush1.msra.mxu0 %v123
    %1823 = vmatprep.subr.mxu0 %v128
    %1824 = vmatpush1.msra.mxu0 %v127
    %1825 = vmatprep.subr.mxu0 %v132
    %1826 = vmatpush1.msra.mxu0 %v131
    %1827 = vmatprep.subr.mxu0 %v136
    %1828 = vmatpush1.msra.mxu0 %v135
    %1829 = vmatprep.subr.mxu0 %v140
    %1830 = vmatpush1.msra.mxu0 %v139
    %1831 = vmatprep.subr.mxu0 %v144
    %1832 = vmatpush1.msra.mxu0 %v143
    %1833 = vmatprep.subr.mxu0 %v148
    %1834 = vmatpush1.msra.mxu0 %v147
    %1835 = vmatprep.subr.mxu0 %v152
    %1836 = vmatpush1.msra.mxu0 %v151
    %1837 = vmatprep.subr.mxu0 %v156
    %1838 = vmatpush1.msra.mxu0 %v155
    %1839 = vmatprep.subr.mxu0 %v160
    %1840 = vmatpush1.msra.mxu0 %v159
    %1841 = vmatprep.subr.mxu0 %v164
    %1842 = vmatpush1.msra.mxu0 %v163
    %1843 = vmatprep.subr.mxu0 %v168
    %1844 = vmatpush1.msra.mxu0 %v167
    %1845 = vmatprep.subr.mxu0 %v172
    %1846 = vmatpush1.msra.mxu0 %v171
    %1847 = vmatprep.subr.mxu0 %v176
    %1848 = vmatpush1.msra.mxu0 %v175
    %1849 = vmatprep.subr.mxu0 0.0
    %1850 = vmatpush1.msra.mxu0 0.0
    %1851 = vmatprep.subr.mxu0 0.0
    %1852 = vmatpush1.msra.mxu0 0.0
    %1853 = vmatprep.subr.mxu0 0.0
    %1854 = vmatpush1.msra.mxu0 0.0
    %1855 = vmatprep.subr.mxu0 0.0
    %1856 = vmatpush1.msra.mxu0 0.0
    %1857 = vmatprep.subr.mxu0 0.0
    %1858 = vmatpush1.msra.mxu0 0.0
    %1859 = vmatprep.subr.mxu0 0.0
    %1860 = vmatpush1.msra.mxu0 0.0
    %1861 = vmatprep.subr.mxu0 0.0
    %1862 = vmatpush1.msra.mxu0 0.0
    %1863 = vmatprep.subr.mxu0 0.0
    %1864 = vmatpush1.msra.mxu0 0.0
    %1865 = vmatprep.subr.mxu0 0.0
    %1866 = vmatpush1.msra.mxu0 0.0
    %1867 = vmatprep.subr.mxu0 0.0
    %1868 = vmatpush1.msra.mxu0 0.0
    %1869 = vmatprep.subr.mxu0 0.0
    %1870 = vmatpush1.msra.mxu0 0.0
    %1871 = vmatprep.subr.mxu0 0.0
    %1872 = vmatpush1.msra.mxu0 0.0
    %1873 = vmatprep.subr.mxu0 0.0
    %1874 = vmatpush1.msra.mxu0 0.0
    %1875 = vmatprep.subr.mxu0 0.0
    %1876 = vmatpush1.msra.mxu0 0.0
    %1877 = vmatprep.subr.mxu0 0.0
    %1878 = vmatpush1.msra.mxu0 0.0
    %1879 = vmatprep.subr.mxu0 0.0
    %1880 = vmatpush1.msra.mxu0 0.0
    %1881 = vmatprep.mubr.f32.mxu0 0.0
    %1882 = vmatmul.mubr.f32.gmra.mrb[0].mxu0 %v1738
    %v1883 = vpop.f32.mrb[0].mxu0
    %v1884 = vadd.f32 0.0, %v1883
    %v1885 = vpop.f32.mrb[0].mxu0
    %v1886 = vadd.f32 0.0, %v1885
    %1887 = vdwg.mxu0
    %v1888 = vadd.f32 %v1742, %v1813
    %v1889 = vadd.f32 %v1743, %v1815
    %v1890 = vadd.f32 %v1744, %v1884
    %v1891 = vadd.f32 %v1745, %v1886
    %v1892 = vxor.u32 %v1888, 2147483648
    %v1893 = vmul.f32 %v1892, 1.442695
    %v1894 = vpow.pop %v1893
    %v1895 = vadd.f32 %v1894, 1.0
    %v1896 = vrcp.pop %v1895
    %v1897 = vmul.f32 1.0, %v1896
    %v1898 = vxor.u32 %v1889, 2147483648
    %v1899 = vmul.f32 %v1898, 1.442695
    %v1900 = vpow.pop %v1899
    %v1901 = vadd.f32 %v1900, 1.0
    %v1902 = vrcp.pop %v1901
    %v1903 = vmul.f32 1.0, %v1902
    %v1904 = vtanh.pop %v1890
    %v1905 = vxor.u32 %v1891, 2147483648
    %v1906 = vmul.f32 %v1905, 1.442695
    %v1907 = vpow.pop %v1906
    %v1908 = vadd.f32 %v1907, 1.0
    %v1909 = vrcp.pop %v1908
    %v1910 = vmul.f32 1.0, %v1909
    %1911 = vmatprep.subr.mxu0 0.0
    %1912 = vmatpush1.msra.mxu0 %v177
    %1913 = vmatprep.subr.mxu0 0.0
    %1914 = vmatpush1.msra.mxu0 %v178
    %1915 = vmatprep.subr.mxu0 0.0
    %1916 = vmatpush1.msra.mxu0 %v179
    %1917 = vmatprep.subr.mxu0 0.0
    %1918 = vmatpush1.msra.mxu0 %v180
    %1919 = vmatprep.subr.mxu0 0.0
    %1920 = vmatpush1.msra.mxu0 %v181
    %1921 = vmatprep.subr.mxu0 0.0
    %1922 = vmatpush1.msra.mxu0 %v182
    %1923 = vmatprep.subr.mxu0 0.0
    %1924 = vmatpush1.msra.mxu0 %v183
    %1925 = vmatprep.subr.mxu0 0.0
    %1926 = vmatpush1.msra.mxu0 %v184
    %1927 = vmatprep.subr.mxu0 0.0
    %1928 = vmatpush1.msra.mxu0 %v185
    %1929 = vmatprep.subr.mxu0 0.0
    %1930 = vmatpush1.msra.mxu0 %v186
    %1931 = vmatprep.subr.mxu0 0.0
    %1932 = vmatpush1.msra.mxu0 %v187
    %1933 = vmatprep.subr.mxu0 0.0
    %1934 = vmatpush1.msra.mxu0 %v188
    %1935 = vmatprep.subr.mxu0 0.0
    %1936 = vmatpush1.msra.mxu0 %v189
    %1937 = vmatprep.subr.mxu0 0.0
    %1938 = vmatpush1.msra.mxu0 %v190
    %1939 = vmatprep.subr.mxu0 0.0
    %1940 = vmatpush1.msra.mxu0 %v191
    %1941 = vmatprep.subr.mxu0 0.0
    %1942 = vmatpush1.msra.mxu0 %v192
    %1943 = vmatprep.subr.mxu0 0.0
    %1944 = vmatpush1.msra.mxu0 0.0
    %1945 = vmatprep.subr.mxu0 0.0
    %1946 = vmatpush1.msra.mxu0 0.0
    %1947 = vmatprep.subr.mxu0 0.0
    %1948 = vmatpush1.msra.mxu0 0.0
    %1949 = vmatprep.subr.mxu0 0.0
    %1950 = vmatpush1.msra.mxu0 0.0
    %1951 = vmatprep.subr.mxu0 0.0
    %1952 = vmatpush1.msra.mxu0 0.0
    %1953 = vmatprep.subr.mxu0 0.0
    %1954 = vmatpush1.msra.mxu0 0.0
    %1955 = vmatprep.subr.mxu0 0.0
    %1956 = vmatpush1.msra.mxu0 0.0
    %1957 = vmatprep.subr.mxu0 0.0
    %1958 = vmatpush1.msra.mxu0 0.0
    %1959 = vmatprep.subr.mxu0 0.0
    %1960 = vmatpush1.msra.mxu0 0.0
    %1961 = vmatprep.subr.mxu0 0.0
    %1962 = vmatpush1.msra.mxu0 0.0
    %1963 = vmatprep.subr.mxu0 0.0
    %1964 = vmatpush1.msra.mxu0 0.0
    %1965 = vmatprep.subr.mxu0 0.0
    %1966 = vmatpush1.msra.mxu0 0.0
    %1967 = vmatprep.subr.mxu0 0.0
    %1968 = vmatpush1.msra.mxu0 0.0
    %1969 = vmatprep.subr.mxu0 0.0
    %1970 = vmatpush1.msra.mxu0 0.0
    %1971 = vmatprep.subr.mxu0 0.0
    %1972 = vmatpush1.msra.mxu0 0.0
    %1973 = vmatprep.subr.mxu0 0.0
    %1974 = vmatpush1.msra.mxu0 0.0
    %1975 = vmatprep.mubr.f32.mxu0 0.0
    %1976 = vmatmul.mubr.f32.gmra.mrb[0].mxu0 %v1736
    %v1977 = vpop.f32.mrb[0].mxu0
    %v1978 = vadd.f32 %v369, %v1977
    %v1979 = vpop.f32.mrb[0].mxu0
    %1980 = vdwg.mxu0
    %v1981 = vsub.f32 %v1736, %v1978
    %s1982 = scalar_lea.vmem %s1, 48
    %v1983 = vld [vmem:[%s1982] sm:$0xff]
    %1985 = vset.pattern.permute.xlu0 0
    %1986 = vperm.xlu0 %1985, %v1983
    %v1987 = vpop.permute.xlu0 %1986
    %v1989 = vmul.f32 %v1978, %v1987
    %v1990 = vadd.f32 %v1981, %v1989
    %v1991 = vmul.f32 %v1903, %v1990
    %v1992 = vmul.f32 %v1897, %v1904
    %v1993 = vadd.f32 %v1991, %v1992
    %v1994 = vtanh.pop %v1993
    %v1995 = vmul.f32 %v1910, %v1994
    %s1996 = scalar_lea.vmem [#allocation11], 48
    %1997 = vst [vmem:[%s1996] sm:$0xff] %v1995
    %s1998 = scalar_lea.vmem [#allocation8], 224
    %v1999 = vld [vmem:[%s1998] sm:$0xff]
    %v2000 = vld [vmem:[%s1998 + $0x8] sm:$0xff]
    %v2001 = vld [vmem:[%s1998 + $0x10] sm:$0xff]
    %v2002 = vld [vmem:[%s1998 + $0x18] sm:$0xff]
    %2003 = vmatprep.subr.mxu0 %v114
    %2004 = vmatpush1.msra.mxu0 %v113
    %2005 = vmatprep.subr.mxu0 %v118
    %2006 = vmatpush1.msra.mxu0 %v117
    %2007 = vmatprep.subr.mxu0 %v122
    %2008 = vmatpush1.msra.mxu0 %v121
    %2009 = vmatprep.subr.mxu0 %v126
    %2010 = vmatpush1.msra.mxu0 %v125
    %2011 = vmatprep.subr.mxu0 %v130
    %2012 = vmatpush1.msra.mxu0 %v129
    %2013 = vmatprep.subr.mxu0 %v134
    %2014 = vmatpush1.msra.mxu0 %v133
    %2015 = vmatprep.subr.mxu0 %v138
    %2016 = vmatpush1.msra.mxu0 %v137
    %2017 = vmatprep.subr.mxu0 %v142
    %2018 = vmatpush1.msra.mxu0 %v141
    %2019 = vmatprep.subr.mxu0 %v146
    %2020 = vmatpush1.msra.mxu0 %v145
    %2021 = vmatprep.subr.mxu0 %v150
    %2022 = vmatpush1.msra.mxu0 %v149
    %2023 = vmatprep.subr.mxu0 %v154
    %2024 = vmatpush1.msra.mxu0 %v153
    %2025 = vmatprep.subr.mxu0 %v158
    %2026 = vmatpush1.msra.mxu0 %v157
    %2027 = vmatprep.subr.mxu0 %v162
    %2028 = vmatpush1.msra.mxu0 %v161
    %2029 = vmatprep.subr.mxu0 %v166
    %2030 = vmatpush1.msra.mxu0 %v165
    %2031 = vmatprep.subr.mxu0 %v170
    %2032 = vmatpush1.msra.mxu0 %v169
    %2033 = vmatprep.subr.mxu0 %v174
    %2034 = vmatpush1.msra.mxu0 %v173
    %2035 = vmatprep.subr.mxu0 0.0
    %2036 = vmatpush1.msra.mxu0 0.0
    %2037 = vmatprep.subr.mxu0 0.0
    %2038 = vmatpush1.msra.mxu0 0.0
    %2039 = vmatprep.subr.mxu0 0.0
    %2040 = vmatpush1.msra.mxu0 0.0
    %2041 = vmatprep.subr.mxu0 0.0
    %2042 = vmatpush1.msra.mxu0 0.0
    %2043 = vmatprep.subr.mxu0 0.0
    %2044 = vmatpush1.msra.mxu0 0.0
    %2045 = vmatprep.subr.mxu0 0.0
    %2046 = vmatpush1.msra.mxu0 0.0
    %2047 = vmatprep.subr.mxu0 0.0
    %2048 = vmatpush1.msra.mxu0 0.0
    %2049 = vmatprep.subr.mxu0 0.0
    %2050 = vmatpush1.msra.mxu0 0.0
    %2051 = vmatprep.subr.mxu0 0.0
    %2052 = vmatpush1.msra.mxu0 0.0
    %2053 = vmatprep.subr.mxu0 0.0
    %2054 = vmatpush1.msra.mxu0 0.0
    %2055 = vmatprep.subr.mxu0 0.0
    %2056 = vmatpush1.msra.mxu0 0.0
    %2057 = vmatprep.subr.mxu0 0.0
    %2058 = vmatpush1.msra.mxu0 0.0
    %2059 = vmatprep.subr.mxu0 0.0
    %2060 = vmatpush1.msra.mxu0 0.0
    %2061 = vmatprep.subr.mxu0 0.0
    %2062 = vmatpush1.msra.mxu0 0.0
    %2063 = vmatprep.subr.mxu0 0.0
    %2064 = vmatpush1.msra.mxu0 0.0
    %2065 = vmatprep.subr.mxu0 0.0
    %2066 = vmatpush1.msra.mxu0 0.0
    %2067 = vmatprep.mubr.f32.mxu0 0.0
    %2068 = vmatmul.mubr.f32.gmra.mrb[0].mxu0 %v1995
    %v2069 = vpop.f32.mrb[0].mxu0
    %v2070 = vadd.f32 0.0, %v2069
    %v2071 = vpop.f32.mrb[0].mxu0
    %v2072 = vadd.f32 0.0, %v2071
    %2073 = vdwg.mxu0
    %2074 = vmatprep.subr.mxu0 %v116
    %2075 = vmatpush1.msra.mxu0 %v115
    %2076 = vmatprep.subr.mxu0 %v120
    %2077 = vmatpush1.msra.mxu0 %v119
    %2078 = vmatprep.subr.mxu0 %v124
    %2079 = vmatpush1.msra.mxu0 %v123
    %2080 = vmatprep.subr.mxu0 %v128
    %2081 = vmatpush1.msra.mxu0 %v127
    %2082 = vmatprep.subr.mxu0 %v132
    %2083 = vmatpush1.msra.mxu0 %v131
    %2084 = vmatprep.subr.mxu0 %v136
    %2085 = vmatpush1.msra.mxu0 %v135
    %2086 = vmatprep.subr.mxu0 %v140
    %2087 = vmatpush1.msra.mxu0 %v139
    %2088 = vmatprep.subr.mxu0 %v144
    %2089 = vmatpush1.msra.mxu0 %v143
    %2090 = vmatprep.subr.mxu0 %v148
    %2091 = vmatpush1.msra.mxu0 %v147
    %2092 = vmatprep.subr.mxu0 %v152
    %2093 = vmatpush1.msra.mxu0 %v151
    %2094 = vmatprep.subr.mxu0 %v156
    %2095 = vmatpush1.msra.mxu0 %v155
    %2096 = vmatprep.subr.mxu0 %v160
    %2097 = vmatpush1.msra.mxu0 %v159
    %2098 = vmatprep.subr.mxu0 %v164
    %2099 = vmatpush1.msra.mxu0 %v163
    %2100 = vmatprep.subr.mxu0 %v168
    %2101 = vmatpush1.msra.mxu0 %v167
    %2102 = vmatprep.subr.mxu0 %v172
    %2103 = vmatpush1.msra.mxu0 %v171
    %2104 = vmatprep.subr.mxu0 %v176
    %2105 = vmatpush1.msra.mxu0 %v175
    %2106 = vmatprep.subr.mxu0 0.0
    %2107 = vmatpush1.msra.mxu0 0.0
    %2108 = vmatprep.subr.mxu0 0.0
    %2109 = vmatpush1.msra.mxu0 0.0
    %2110 = vmatprep.subr.mxu0 0.0
    %2111 = vmatpush1.msra.mxu0 0.0
    %2112 = vmatprep.subr.mxu0 0.0
    %2113 = vmatpush1.msra.mxu0 0.0
    %2114 = vmatprep.subr.mxu0 0.0
    %2115 = vmatpush1.msra.mxu0 0.0
    %2116 = vmatprep.subr.mxu0 0.0
    %2117 = vmatpush1.msra.mxu0 0.0
    %2118 = vmatprep.subr.mxu0 0.0
    %2119 = vmatpush1.msra.mxu0 0.0
    %2120 = vmatprep.subr.mxu0 0.0
    %2121 = vmatpush1.msra.mxu0 0.0
    %2122 = vmatprep.subr.mxu0 0.0
    %2123 = vmatpush1.msra.mxu0 0.0
    %2124 = vmatprep.subr.mxu0 0.0
    %2125 = vmatpush1.msra.mxu0 0.0
    %2126 = vmatprep.subr.mxu0 0.0
    %2127 = vmatpush1.msra.mxu0 0.0
    %2128 = vmatprep.subr.mxu0 0.0
    %2129 = vmatpush1.msra.mxu0 0.0
    %2130 = vmatprep.subr.mxu0 0.0
    %2131 = vmatpush1.msra.mxu0 0.0
    %2132 = vmatprep.subr.mxu0 0.0
    %2133 = vmatpush1.msra.mxu0 0.0
    %2134 = vmatprep.subr.mxu0 0.0
    %2135 = vmatpush1.msra.mxu0 0.0
    %2136 = vmatprep.subr.mxu0 0.0
    %2137 = vmatpush1.msra.mxu0 0.0
    %2138 = vmatprep.mubr.f32.mxu0 0.0
    %2139 = vmatmul.mubr.f32.gmra.mrb[0].mxu0 %v1995
    %v2140 = vpop.f32.mrb[0].mxu0
    %v2141 = vadd.f32 0.0, %v2140
    %v2142 = vpop.f32.mrb[0].mxu0
    %v2143 = vadd.f32 0.0, %v2142
    %2144 = vdwg.mxu0
    %v2145 = vadd.f32 %v1999, %v2070
    %v2146 = vadd.f32 %v2000, %v2072
    %v2147 = vadd.f32 %v2001, %v2141
    %v2148 = vadd.f32 %v2002, %v2143
    %v2149 = vxor.u32 %v2145, 2147483648
    %v2150 = vmul.f32 %v2149, 1.442695
    %v2151 = vpow.pop %v2150
    %v2152 = vadd.f32 %v2151, 1.0
    %v2153 = vrcp.pop %v2152
    %v2154 = vmul.f32 1.0, %v2153
    %v2155 = vxor.u32 %v2146, 2147483648
    %v2156 = vmul.f32 %v2155, 1.442695
    %v2157 = vpow.pop %v2156
    %v2158 = vadd.f32 %v2157, 1.0
    %v2159 = vrcp.pop %v2158
    %v2160 = vmul.f32 1.0, %v2159
    %v2161 = vtanh.pop %v2147
    %v2162 = vxor.u32 %v2148, 2147483648
    %v2163 = vmul.f32 %v2162, 1.442695
    %v2164 = vpow.pop %v2163
    %v2165 = vadd.f32 %v2164, 1.0
    %v2166 = vrcp.pop %v2165
    %v2167 = vmul.f32 1.0, %v2166
    %2168 = vmatprep.subr.mxu0 0.0
    %2169 = vmatpush1.msra.mxu0 %v177
    %2170 = vmatprep.subr.mxu0 0.0
    %2171 = vmatpush1.msra.mxu0 %v178
    %2172 = vmatprep.subr.mxu0 0.0
    %2173 = vmatpush1.msra.mxu0 %v179
    %2174 = vmatprep.subr.mxu0 0.0
    %2175 = vmatpush1.msra.mxu0 %v180
    %2176 = vmatprep.subr.mxu0 0.0
    %2177 = vmatpush1.msra.mxu0 %v181
    %2178 = vmatprep.subr.mxu0 0.0
    %2179 = vmatpush1.msra.mxu0 %v182
    %2180 = vmatprep.subr.mxu0 0.0
    %2181 = vmatpush1.msra.mxu0 %v183
    %2182 = vmatprep.subr.mxu0 0.0
    %2183 = vmatpush1.msra.mxu0 %v184
    %2184 = vmatprep.subr.mxu0 0.0
    %2185 = vmatpush1.msra.mxu0 %v185
    %2186 = vmatprep.subr.mxu0 0.0
    %2187 = vmatpush1.msra.mxu0 %v186
    %2188 = vmatprep.subr.mxu0 0.0
    %2189 = vmatpush1.msra.mxu0 %v187
    %2190 = vmatprep.subr.mxu0 0.0
    %2191 = vmatpush1.msra.mxu0 %v188
    %2192 = vmatprep.subr.mxu0 0.0
    %2193 = vmatpush1.msra.mxu0 %v189
    %2194 = vmatprep.subr.mxu0 0.0
    %2195 = vmatpush1.msra.mxu0 %v190
    %2196 = vmatprep.subr.mxu0 0.0
    %2197 = vmatpush1.msra.mxu0 %v191
    %2198 = vmatprep.subr.mxu0 0.0
    %2199 = vmatpush1.msra.mxu0 %v192
    %2200 = vmatprep.subr.mxu0 0.0
    %2201 = vmatpush1.msra.mxu0 0.0
    %2202 = vmatprep.subr.mxu0 0.0
    %2203 = vmatpush1.msra.mxu0 0.0
    %2204 = vmatprep.subr.mxu0 0.0
    %2205 = vmatpush1.msra.mxu0 0.0
    %2206 = vmatprep.subr.mxu0 0.0
    %2207 = vmatpush1.msra.mxu0 0.0
    %2208 = vmatprep.subr.mxu0 0.0
    %2209 = vmatpush1.msra.mxu0 0.0
    %2210 = vmatprep.subr.mxu0 0.0
    %2211 = vmatpush1.msra.mxu0 0.0
    %2212 = vmatprep.subr.mxu0 0.0
    %2213 = vmatpush1.msra.mxu0 0.0
    %2214 = vmatprep.subr.mxu0 0.0
    %2215 = vmatpush1.msra.mxu0 0.0
    %2216 = vmatprep.subr.mxu0 0.0
    %2217 = vmatpush1.msra.mxu0 0.0
    %2218 = vmatprep.subr.mxu0 0.0
    %2219 = vmatpush1.msra.mxu0 0.0
    %2220 = vmatprep.subr.mxu0 0.0
    %2221 = vmatpush1.msra.mxu0 0.0
    %2222 = vmatprep.subr.mxu0 0.0
    %2223 = vmatpush1.msra.mxu0 0.0
    %2224 = vmatprep.subr.mxu0 0.0
    %2225 = vmatpush1.msra.mxu0 0.0
    %2226 = vmatprep.subr.mxu0 0.0
    %2227 = vmatpush1.msra.mxu0 0.0
    %2228 = vmatprep.subr.mxu0 0.0
    %2229 = vmatpush1.msra.mxu0 0.0
    %2230 = vmatprep.subr.mxu0 0.0
    %2231 = vmatpush1.msra.mxu0 0.0
    %2232 = vmatprep.mubr.f32.mxu0 0.0
    %2233 = vmatmul.mubr.f32.gmra.mrb[0].mxu0 %v1993
    %v2234 = vpop.f32.mrb[0].mxu0
    %v2235 = vadd.f32 %v369, %v2234
    %v2236 = vpop.f32.mrb[0].mxu0
    %2237 = vdwg.mxu0
    %v2238 = vsub.f32 %v1993, %v2235
    %s2239 = scalar_lea.vmem %s1, 56
    %v2240 = vld [vmem:[%s2239] sm:$0xff]
    %2242 = vset.pattern.permute.xlu0 0
    %2243 = vperm.xlu0 %2242, %v2240
    %v2244 = vpop.permute.xlu0 %2243
    %v2246 = vmul.f32 %v2235, %v2244
    %v2247 = vadd.f32 %v2238, %v2246
    %v2248 = vmul.f32 %v2160, %v2247
    %v2249 = vmul.f32 %v2154, %v2161
    %v2250 = vadd.f32 %v2248, %v2249
    %v2251 = vtanh.pop %v2250
    %v2252 = vmul.f32 %v2167, %v2251
    %s2253 = scalar_lea.vmem [#allocation11], 56
    %2254 = vst [vmem:[%s2253] sm:$0xff] %v2252
    %2255 = vst [vmem:[#allocation5] sm:$0xff] %v2252
    %2256 = vst [vmem:[#allocation6] sm:$0xff] %v2250
    // Predicated region
    $region56: #{tpu_custom_call.1} parent=1 // pred_check
      _
    $region57: #{tpu_custom_call.1} parent=1 // pred_check_branch
      %2258 = sbr.rel (0) target = $region59
    $region58: #{tpu_custom_call.1} parent=1 // pred_region
      %s2260 = ssub.s32 1024, 1024
      %2261 = vsyncadd [#allocation10], %s2260
      %s2262 = sshll.u32 [#allocation11], 4
      %s2263 = int_to_ptr.vmem [resolvable:$true] %s2262
      %2268 = dma.vmem_to_hbm [thread:$0]  %s2263, 1024, %s5, [#allocation10], 128, 128, 8
    $region59: #{tpu_custom_call.1} parent=1 // pred_fallthru
      _
    // Predicated region
    $region60: #{tpu_custom_call.1} parent=1 // pred_check
      _
    $region61: #{tpu_custom_call.1} parent=1 // pred_check_branch
      %2270 = sbr.rel (0) target = $region63
    $region62: #{tpu_custom_call.1} parent=1 // pred_region
      %2271 = dma.done [#allocation10], 1024
    $region63: #{tpu_custom_call.1} parent=1 // pred_fallthru
      _
    %2272 = vsyncpa [#allocation9], 1
    %2273 = vsyncpa [#allocation10], 1
  %2274 = vsyncmov [#allocation7]
  %s2275 = vpop.sfrf %2274
  %p2276 = scmp.eq.s32.totalorder %s2275, 0
  %p2277 = pneg %p2276
  %2279 = shalt.err (%p2277)
  %s2280 = scalar_lea.sflag [#allocation7], 1
  %2281 = vsyncmov %s2280
  %s2282 = vpop.sfrf %2281
  %p2283 = scmp.eq.s32.totalorder %s2282, 0
  %p2284 = pneg %p2283
  %2286 = shalt.err (%p2284)
  %s2287 = scalar_lea.sflag [#allocation7], 2
  %2288 = vsyncmov %s2287
  %s2289 = vpop.sfrf %2288
  %p2290 = scmp.eq.s32.totalorder %s2289, 0
  %p2291 = pneg %p2290
  %2293 = shalt.err (%p2291)

</llo_original>
